<compile_context>
chip_gen: v6e
topology: v6e:2x2x1
jax: 0.10.0
libtpu: 0.0.40
codegen_flags: <defaults>
</compile_context>

<pallas_src>
import math

import jax
import jax.numpy as jnp
import numpy as np
from jax.experimental import pallas as pl
from jax.experimental.pallas import tpu as pltpu


# ----------------------------------------------------------------------------- kernel


def _make_kernel(n_head: int, seq_len: int):
    """Fused kernel over grid (batch_block, kv_chunk)."""
    H = n_head

    def _layernorm(v, w, b):
        mean = jnp.mean(v, axis=-1, keepdims=True)
        var = jnp.mean((v - mean) ** 2, axis=-1, keepdims=True)
        return (v - mean) * jax.lax.rsqrt(var + 1e-5) * w + b

    def _gelu_exact(v):
        # PyTorch nn.GELU() default = exact erf formulation.
        return 0.5 * v * (1.0 + jax.lax.erf(v * (1.0 / math.sqrt(2.0))))

    def kernel(dx_ref, x_ref,
               wq_ref, bq_ref, wk_ref, bk_ref, wv_ref, bv_ref, wp_ref, bp_ref,
               ln1w_ref, ln1b_ref, ln2w_ref, ln2b_ref,
               w1_ref, b1_ref, w2_ref, b2_ref,
               o_ref,
               q_sc, m_sc, l_sc, acc_sc):
        kv = pl.program_id(1)
        n_kv = pl.num_programs(1)

        Bb, Tq, C = dx_ref.shape
        _, Tkv, _ = x_ref.shape
        D = C // H
        scale = 1.0 / math.sqrt(D)
        bf16, f32 = jnp.bfloat16, jnp.float32

        # ---- once per batch block: LayerNorm1, full-width Q projection, state reset
        @pl.when(kv == 0)
        def _():
            dx = dx_ref[...].reshape(Bb * Tq, C)
            nq = _layernorm(dx, ln1w_ref[...], ln1b_ref[...])
            q_full = (jnp.dot(nq.astype(bf16), wq_ref[...],
                              preferred_element_type=f32)
                      + bq_ref[...]) * scale          # 1/sqrt(D) folded once
            for h in range(H):                        # static lane slices per head
                q_sc[h] = q_full[:, h * D:(h + 1) * D].astype(bf16).reshape(Bb, Tq, D)
            m_sc[...] = jnp.full(m_sc.shape, -jnp.inf, f32)
            l_sc[...] = jnp.zeros(l_sc.shape, f32)
            acc_sc[...] = jnp.zeros(acc_sc.shape, f32)

        # ---- every step: full-width K / V projections of the current KV chunk
        xk = x_ref[...].reshape(Bb * Tkv, C).astype(bf16)
        k_full = jnp.dot(xk, wk_ref[...], preferred_element_type=f32) + bk_ref[...]
        v_full = jnp.dot(xk, wv_ref[...], preferred_element_type=f32) + bv_ref[...]

        # causal cross-mask: query i may attend global key j iff j <= i + (T - Tq)
        rows = jax.lax.broadcasted_iota(jnp.int32, (Tq, Tkv), 0)
        cols = jax.lax.broadcasted_iota(jnp.int32, (Tq, Tkv), 1)
        allowed = ((kv * Tkv + cols) <= (rows + (seq_len - Tq)))[None, :, :]

        # ---- per-head online softmax (flash) update
        for h in range(H):
            k_h = k_full[:, h * D:(h + 1) * D].astype(bf16).reshape(Bb, Tkv, D)
            v_h = v_full[:, h * D:(h + 1) * D].astype(bf16).reshape(Bb, Tkv, D)
            s = jnp.einsum("bqd,bkd->bqk", q_sc[h], k_h,
                           preferred_element_type=f32)        # (Bb, Tq, Tkv)
            s = jnp.where(allowed, s, -1e10)
            m_prev = m_sc[h]
            m_new = jnp.maximum(m_prev, jnp.max(s, axis=-1, keepdims=True))
            alpha = jnp.exp(m_prev - m_new)
            p = jnp.where(allowed, jnp.exp(s - m_new), 0.0)
            l_sc[h] = alpha * l_sc[h] + jnp.sum(p, axis=-1, keepdims=True)
            acc_sc[h] = alpha * acc_sc[h] + jnp.einsum(
                "bqk,bkd->bqd", p.astype(bf16), v_h,
                preferred_element_type=f32)
            m_sc[h] = m_new

        # ---- last KV chunk: normalize heads, output proj, residual 1, MLP, residual 2
        @pl.when(kv == n_kv - 1)
        def _():
            dx = dx_ref[...].reshape(Bb * Tq, C)
            y = jnp.zeros((Bb * Tq, C), f32)
            for h in range(H):
                yh = acc_sc[h] * pl.reciprocal(l_sc[h], approx=True)  # EUP, not VALU
                yh = yh.reshape(Bb * Tq, D)
                y = y + jnp.dot(yh.astype(bf16),
                                wp_ref[h * D:(h + 1) * D, :],         # sublane slice
                                preferred_element_type=f32)
            x1 = dx + y + bp_ref[...]
            n2 = _layernorm(x1, ln2w_ref[...], ln2b_ref[...])
            h1 = jnp.dot(n2.astype(bf16), w1_ref[...],
                         preferred_element_type=f32) + b1_ref[...]
            h1 = _gelu_exact(h1)
            h2 = jnp.dot(h1.astype(bf16), w2_ref[...],
                         preferred_element_type=f32) + b2_ref[...]
            o_ref[...] = (x1 + h2).reshape(Bb, Tq, C)

    return kernel


# ----------------------------------------------------------------------------- wrapper


def _pick_batch_block(B, Tq, target_rows=256):
    bb = max(1, min(B, target_rows // max(Tq, 1)))
    while B % bb:
        bb -= 1
    return max(bb, 1)


def _pick_kv_block(T, target=512):
    for cand in range(min(T, target), 7, -1):
        if T % cand == 0 and cand % 8 == 0:
            return cand
    return T  # block == full dim is always legal


def _padded_bytes(shape, itemsize):
    dims = list(shape)
    dims[-1] = -(-dims[-1] // 128) * 128
    if len(dims) >= 2:
        dims[-2] = -(-dims[-2] // 8) * 8
    n = 1
    for d in dims:
        n *= d
    return n * itemsize


def down_project_block(x, params, *, n_head, latent_size,
                       kv_block=None, batch_block=None):
    """x: (B, T, C) float32 -> (B, latent_size, C) float32."""
    B, T, C = x.shape
    Tq = latent_size
    H = n_head
    assert C % H == 0 and Tq <= T
    D = C // H

    Bb = batch_block if batch_block is not None else _pick_batch_block(B, Tq)
    Tkv = kv_block if kv_block is not None else _pick_kv_block(T)
    assert B % Bb == 0 and T % Tkv == 0

    bf16, f32 = jnp.bfloat16, jnp.float32

    # Full-width weights, bf16 for the MXU; biases / LN params stay f32.
    wq = params["wq"].astype(bf16)
    wk = params["wk"].astype(bf16)
    wv = params["wv"].astype(bf16)
    wp = params["wp"].astype(bf16)
    w1 = params["w1"].astype(bf16)
    w2 = params["w2"].astype(bf16)
    bq = params["bq"].astype(f32)
    bk = params["bk"].astype(f32)
    bv = params["bv"].astype(f32)
    bp = params["bp"].astype(f32)
    b1 = params["b1"].astype(f32)
    b2 = params["b2"].astype(f32)
    ln1w, ln1b = params["ln1w"].astype(f32), params["ln1b"].astype(f32)
    ln2w, ln2b = params["ln2w"].astype(f32), params["ln2b"].astype(f32)

    # Query window delivered as its own input (no in-kernel sublane-unaligned slice).
    dx = x[:, T - Tq:, :]

    param_args = [wq, bq, wk, bk, wv, bv, wp, bp,
                  ln1w, ln1b, ln2w, ln2b, w1, b1, w2, b2]

    def const_spec(a):
        nd = a.ndim
        return pl.BlockSpec(a.shape, lambda b, kv, _nd=nd: (0,) * _nd)

    in_specs = (
        [pl.BlockSpec((Bb, Tq, C), lambda b, kv: (b, 0, 0)),     # query window
         pl.BlockSpec((Bb, Tkv, C), lambda b, kv: (b, kv, 0))]   # K/V source chunk
        + [const_spec(a) for a in param_args]
    )
    out_specs = pl.BlockSpec((Bb, Tq, C), lambda b, kv: (b, 0, 0))

    grid = (B // Bb, T // Tkv)   # batch (parallel), kv chunks (arbitrary)

    scratch_shapes = [
        pltpu.VMEM((H, Bb, Tq, D), bf16),   # pre-scaled q, per head
        pltpu.VMEM((H, Bb, Tq, 1), f32),    # online-softmax running max
        pltpu.VMEM((H, Bb, Tq, 1), f32),    # online-softmax running sum
        pltpu.VMEM((H, Bb, Tq, D), f32),    # online-softmax accumulator
    ]

    # VMEM budget: resident weights + double-buffered blocks + scratch, with headroom.
    weight_bytes = sum(_padded_bytes(a.shape, a.dtype.itemsize) for a in param_args)
    block_bytes = (2 * _padded_bytes((Bb, Tq, C), 4)      # dx block + out block
                   + _padded_bytes((Bb, Tkv, C), 4))
    scratch_bytes = (_padded_bytes((H, Bb, Tq, D), 2)
                     + _padded_bytes((H, Bb, Tq, D), 4)
                     + 2 * _padded_bytes((H, Bb, Tq, 1), 4))
    vmem_limit = int(min(64 * 2**20,
                         max(32 * 2**20,
                             2 * (weight_bytes + 2 * block_bytes)
                             + scratch_bytes + 8 * 2**20)))

    return pl.pallas_call(
        _make_kernel(n_head=H, seq_len=T),
        out_shape=jax.ShapeDtypeStruct((B, Tq, C), jnp.float32),
        grid=grid,
        in_specs=in_specs,
        out_specs=out_specs,
        scratch_shapes=scratch_shapes,
        compiler_params=pltpu.CompilerParams(
            dimension_semantics=("parallel", "arbitrary"),
            vmem_limit_bytes=vmem_limit),
    )(dx, x, *param_args)


# ----------------------------------------------------------------------------- reference


def _reference(x, params, *, n_head, latent_size):
    """Pure-JAX f32 reference mirroring the PyTorch forward (eval mode)."""
    B, T, C = x.shape
    Tq = latent_size
    H, D = n_head, C // n_head

    def ln(v, w, b):
        m = jnp.mean(v, -1, keepdims=True)
        va = jnp.mean((v - m) ** 2, -1, keepdims=True)
        return (v - m) / jnp.sqrt(va + 1e-5) * w + b

    dx = x[:, -Tq:, :]
    nq = ln(dx, params["ln1w"], params["ln1b"])
    q = nq @ params["wq"] + params["bq"]
    k = x @ params["wk"] + params["bk"]
    v = x @ params["wv"] + params["bv"]
    q = q.reshape(B, Tq, H, D).transpose(0, 2, 1, 3)
    k = k.reshape(B, T, H, D).transpose(0, 2, 1, 3)
    v = v.reshape(B, T, H, D).transpose(0, 2, 1, 3)
    attn = jnp.einsum("bhqd,bhkd->bhqk", q, k) / math.sqrt(D)
    rows = jnp.arange(Tq)[:, None]
    cols = jnp.arange(T)[None, :]
    attn = jnp.where(cols <= rows + (T - Tq), attn, -1e10)
    attn = jax.nn.softmax(attn, axis=-1)
    y = jnp.einsum("bhqk,bhkd->bhqd", attn, v)
    y = y.transpose(0, 2, 1, 3).reshape(B, Tq, C)
    y = y @ params["wp"] + params["bp"]
    x1 = dx + y
    n2 = ln(x1, params["ln2w"], params["ln2b"])
    h1 = n2 @ params["w1"] + params["b1"]
    h1 = 0.5 * h1 * (1.0 + jax.lax.erf(h1 / math.sqrt(2.0)))
    h2 = h1 @ params["w2"] + params["b2"]
    return x1 + h2


# ----------------------------------------------------------------------------- demo


if __name__ == "__main__":
    # Small but lane-dense config (C = 128) consistent with the module.
    B, T, C = 2, 32, 128
    n_head = 4
    latent_size = 16

    key = jax.random.PRNGKey(0)
    ks = jax.random.split(key, 16)

    def w(k, shape):
        return (0.02 * jax.random.normal(k, shape)).astype(jnp.float32)

    params = {
        # attention projections, stored as (in, out)
        "wq": w(ks[0], (C, C)), "bq": w(ks[1], (1, C)),
        "wk": w(ks[2], (C, C)), "bk": w(ks[3], (1, C)),
        "wv": w(ks[4], (C, C)), "bv": w(ks[5], (1, C)),
        "wp": w(ks[6], (C, C)), "bp": w(ks[7], (1, C)),
        # layernorms (PyTorch default init)
        "ln1w": jnp.ones((1, C), jnp.float32), "ln1b": jnp.zeros((1, C), jnp.float32),
        "ln2w": jnp.ones((1, C), jnp.float32), "ln2b": jnp.zeros((1, C), jnp.float32),
        # MLP
        "w1": w(ks[8], (C, 4 * C)), "b1": w(ks[9], (1, 4 * C)),
        "w2": w(ks[10], (4 * C, C)), "b2": w(ks[11], (1, C)),
    }

    x = jax.random.normal(ks[12], (B, T, C), dtype=jnp.float32)

    out = down_project_block(x, params, n_head=n_head, latent_size=latent_size,
                             kv_block=16, batch_block=2)
    out = jax.block_until_ready(out)

    ref = _reference(x, params, n_head=n_head, latent_size=latent_size)
    # bf16 MXU feeds (f32 accumulation) vs. the f32 reference -> widened tolerance.
    np.testing.assert_allclose(np.asarray(out), np.asarray(ref), rtol=2e-2, atol=2e-2)

    print("KERNEL_OK")
</pallas_src>

<mosaic_0001>
module attributes {stable_mosaic.version = 11 : i64} {
  func.func @kernel(%arg0: i32, %arg1: i32, %arg2: memref<2x16x128xf32, #tpu.memory_space<vmem>>, %arg3: memref<2x16x128xf32, #tpu.memory_space<vmem>>, %arg4: memref<128x128xbf16, #tpu.memory_space<vmem>>, %arg5: memref<1x128xf32, #tpu.memory_space<vmem>>, %arg6: memref<128x128xbf16, #tpu.memory_space<vmem>>, %arg7: memref<1x128xf32, #tpu.memory_space<vmem>>, %arg8: memref<128x128xbf16, #tpu.memory_space<vmem>>, %arg9: memref<1x128xf32, #tpu.memory_space<vmem>>, %arg10: memref<128x128xbf16, #tpu.memory_space<vmem>>, %arg11: memref<1x128xf32, #tpu.memory_space<vmem>>, %arg12: memref<1x128xf32, #tpu.memory_space<vmem>>, %arg13: memref<1x128xf32, #tpu.memory_space<vmem>>, %arg14: memref<1x128xf32, #tpu.memory_space<vmem>>, %arg15: memref<1x128xf32, #tpu.memory_space<vmem>>, %arg16: memref<128x512xbf16, #tpu.memory_space<vmem>>, %arg17: memref<1x512xf32, #tpu.memory_space<vmem>>, %arg18: memref<512x128xbf16, #tpu.memory_space<vmem>>, %arg19: memref<1x128xf32, #tpu.memory_space<vmem>>, %arg20: memref<2x16x128xf32, #tpu.memory_space<vmem>>, %arg21: memref<4x2x16x32xbf16, #tpu.memory_space<vmem>>, %arg22: memref<4x2x16x1xf32, #tpu.memory_space<vmem>>, %arg23: memref<4x2x16x1xf32, #tpu.memory_space<vmem>>, %arg24: memref<4x2x16x32xf32, #tpu.memory_space<vmem>>) attributes {dimension_semantics = [#tpu.dimension_semantics<parallel>, #tpu.dimension_semantics<arbitrary>], iteration_bounds = array<i64: 1, 2>, scalar_prefetch = 0 : i64, scratch_operands = 4 : i64, tpu.core_type = #tpu.core_type<tc>, window_params = [{transform_indices = @transform_0, window_bounds = array<i64: 2, 16, 128>}, {transform_indices = @transform_1, window_bounds = array<i64: 2, 16, 128>}, {pipeline_mode = #tpu.pipeline_mode<synchronous>, transform_indices = @transform_2, window_bounds = array<i64: 128, 128>}, {pipeline_mode = #tpu.pipeline_mode<synchronous>, transform_indices = @transform_3, window_bounds = array<i64: 1, 128>}, {pipeline_mode = #tpu.pipeline_mode<synchronous>, transform_indices = @transform_4, window_bounds = array<i64: 128, 128>}, {pipeline_mode = #tpu.pipeline_mode<synchronous>, transform_indices = @transform_5, window_bounds = array<i64: 1, 128>}, {pipeline_mode = #tpu.pipeline_mode<synchronous>, transform_indices = @transform_6, window_bounds = array<i64: 128, 128>}, {pipeline_mode = #tpu.pipeline_mode<synchronous>, transform_indices = @transform_7, window_bounds = array<i64: 1, 128>}, {pipeline_mode = #tpu.pipeline_mode<synchronous>, transform_indices = @transform_8, window_bounds = array<i64: 128, 128>}, {pipeline_mode = #tpu.pipeline_mode<synchronous>, transform_indices = @transform_9, window_bounds = array<i64: 1, 128>}, {pipeline_mode = #tpu.pipeline_mode<synchronous>, transform_indices = @transform_10, window_bounds = array<i64: 1, 128>}, {pipeline_mode = #tpu.pipeline_mode<synchronous>, transform_indices = @transform_11, window_bounds = array<i64: 1, 128>}, {pipeline_mode = #tpu.pipeline_mode<synchronous>, transform_indices = @transform_12, window_bounds = array<i64: 1, 128>}, {pipeline_mode = #tpu.pipeline_mode<synchronous>, transform_indices = @transform_13, window_bounds = array<i64: 1, 128>}, {pipeline_mode = #tpu.pipeline_mode<synchronous>, transform_indices = @transform_14, window_bounds = array<i64: 128, 512>}, {pipeline_mode = #tpu.pipeline_mode<synchronous>, transform_indices = @transform_15, window_bounds = array<i64: 1, 512>}, {pipeline_mode = #tpu.pipeline_mode<synchronous>, transform_indices = @transform_16, window_bounds = array<i64: 512, 128>}, {pipeline_mode = #tpu.pipeline_mode<synchronous>, transform_indices = @transform_17, window_bounds = array<i64: 1, 128>}, {transform_indices = @transform_18, window_bounds = array<i64: 2, 16, 128>}]} {
    %c0_i32 = arith.constant 0 : i32
    %0 = arith.cmpi eq, %arg1, %c0_i32 : i32
    %1 = arith.extui %0 : i1 to i32
    %c0_i32_0 = arith.constant 0 : i32
    %2 = arith.cmpi ne, %1, %c0_i32_0 : i32
    scf.if %2 {
      %c0_147 = arith.constant 0 : index
      %c0_148 = arith.constant 0 : index
      %c0_149 = arith.constant 0 : index
      %224 = vector.load %arg2[%c0_147, %c0_148, %c0_149] : memref<2x16x128xf32, #tpu.memory_space<vmem>>, vector<2x16x128xf32>
      %225 = vector.shape_cast %224 : vector<2x16x128xf32> to vector<32x128xf32>
      %c0_150 = arith.constant 0 : index
      %c0_151 = arith.constant 0 : index
      %226 = vector.load %arg12[%c0_150, %c0_151] : memref<1x128xf32, #tpu.memory_space<vmem>>, vector<1x128xf32>
      %c0_152 = arith.constant 0 : index
      %c0_153 = arith.constant 0 : index
      %227 = vector.load %arg13[%c0_152, %c0_153] : memref<1x128xf32, #tpu.memory_space<vmem>>, vector<1x128xf32>
      %cst_154 = arith.constant dense<0.000000e+00> : vector<32xf32>
      %228 = vector.multi_reduction <add>, %225, %cst_154 [1] : vector<32x128xf32> to vector<32xf32>
      %229 = vector.shape_cast %228 : vector<32xf32> to vector<32x1xf32>
      %cst_155 = arith.constant 1.280000e+02 : f32
      %230 = vector.broadcast %cst_155 : f32 to vector<32x1xf32>
      %231 = arith.divf %229, %230 : vector<32x1xf32>
      %232 = vector.broadcast %231 : vector<32x1xf32> to vector<32x128xf32>
      %233 = arith.subf %225, %232 : vector<32x128xf32>
      %234 = arith.mulf %233, %233 : vector<32x128xf32>
      %cst_156 = arith.constant dense<0.000000e+00> : vector<32xf32>
      %235 = vector.multi_reduction <add>, %234, %cst_156 [1] : vector<32x128xf32> to vector<32xf32>
      %236 = vector.shape_cast %235 : vector<32xf32> to vector<32x1xf32>
      %cst_157 = arith.constant 1.280000e+02 : f32
      %237 = vector.broadcast %cst_157 : f32 to vector<32x1xf32>
      %238 = arith.divf %236, %237 : vector<32x1xf32>
      %239 = vector.broadcast %231 : vector<32x1xf32> to vector<32x128xf32>
      %240 = arith.subf %225, %239 : vector<32x128xf32>
      %cst_158 = arith.constant 9.99999974E-6 : f32
      %241 = vector.broadcast %cst_158 : f32 to vector<32x1xf32>
      %242 = arith.addf %238, %241 : vector<32x1xf32>
      %243 = math.rsqrt %242 : vector<32x1xf32>
      %244 = vector.broadcast %243 : vector<32x1xf32> to vector<32x128xf32>
      %245 = arith.mulf %240, %244 : vector<32x128xf32>
      %246 = vector.broadcast %226 : vector<1x128xf32> to vector<32x128xf32>
      %247 = arith.mulf %245, %246 : vector<32x128xf32>
      %248 = vector.broadcast %227 : vector<1x128xf32> to vector<32x128xf32>
      %249 = arith.addf %247, %248 : vector<32x128xf32>
      %250 = arith.truncf %249 : vector<32x128xf32> to vector<32x128xbf16>
      %c0_159 = arith.constant 0 : index
      %c0_160 = arith.constant 0 : index
      %251 = vector.load %arg4[%c0_159, %c0_160] : memref<128x128xbf16, #tpu.memory_space<vmem>>, vector<128x128xbf16>
      %cst_161 = arith.constant dense<0.000000e+00> : vector<32x128xf32>
      %252 = tpu.matmul %250, %251, %cst_161 {dimension_numbers = #tpu.dot_dimension_numbers<[1], [0], [0], [1], [0, 0, 1, 1], [], []>} : vector<32x128xbf16>, vector<128x128xbf16>, vector<32x128xf32> -> vector<32x128xf32>
      %c0_162 = arith.constant 0 : index
      %c0_163 = arith.constant 0 : index
      %253 = vector.load %arg5[%c0_162, %c0_163] : memref<1x128xf32, #tpu.memory_space<vmem>>, vector<1x128xf32>
      %254 = vector.broadcast %253 : vector<1x128xf32> to vector<32x128xf32>
      %255 = arith.addf %252, %254 : vector<32x128xf32>
      %cst_164 = arith.constant 0.176776692 : f32
      %256 = vector.broadcast %cst_164 : f32 to vector<32x128xf32>
      %257 = arith.mulf %255, %256 : vector<32x128xf32>
      %258 = vector.extract_strided_slice %257 {offsets = [0, 0], sizes = [32, 32], strides = [1, 1]} : vector<32x128xf32> to vector<32x32xf32>
      %259 = arith.truncf %258 : vector<32x32xf32> to vector<32x32xbf16>
      %260 = vector.shape_cast %259 : vector<32x32xbf16> to vector<2x16x32xbf16>
      %c0_165 = arith.constant 0 : index
      %c0_166 = arith.constant 0 : index
      %c0_167 = arith.constant 0 : index
      %c0_168 = arith.constant 0 : index
      %261 = vector.load %arg21[%c0_165, %c0_166, %c0_167, %c0_168] : memref<4x2x16x32xbf16, #tpu.memory_space<vmem>>, vector<1x2x16x32xbf16>
      %262 = vector.shape_cast %261 : vector<1x2x16x32xbf16> to vector<2x16x32xbf16>
      %263 = vector.shape_cast %260 : vector<2x16x32xbf16> to vector<1x2x16x32xbf16>
      tpu.vector_store %arg21[%c0_165, %c0_166, %c0_167, %c0_168], %263 {strides = array<i32>} : memref<4x2x16x32xbf16, #tpu.memory_space<vmem>>, vector<1x2x16x32xbf16>,
      %264 = vector.extract_strided_slice %257 {offsets = [0, 32], sizes = [32, 32], strides = [1, 1]} : vector<32x128xf32> to vector<32x32xf32>
      %265 = arith.truncf %264 : vector<32x32xf32> to vector<32x32xbf16>
      %266 = vector.shape_cast %265 : vector<32x32xbf16> to vector<2x16x32xbf16>
      %c1_169 = arith.constant 1 : index
      %c0_170 = arith.constant 0 : index
      %c0_171 = arith.constant 0 : index
      %c0_172 = arith.constant 0 : index
      %267 = vector.load %arg21[%c1_169, %c0_170, %c0_171, %c0_172] : memref<4x2x16x32xbf16, #tpu.memory_space<vmem>>, vector<1x2x16x32xbf16>
      %268 = vector.shape_cast %267 : vector<1x2x16x32xbf16> to vector<2x16x32xbf16>
      %269 = vector.shape_cast %266 : vector<2x16x32xbf16> to vector<1x2x16x32xbf16>
      tpu.vector_store %arg21[%c1_169, %c0_170, %c0_171, %c0_172], %269 {strides = array<i32>} : memref<4x2x16x32xbf16, #tpu.memory_space<vmem>>, vector<1x2x16x32xbf16>,
      %270 = vector.extract_strided_slice %257 {offsets = [0, 64], sizes = [32, 32], strides = [1, 1]} : vector<32x128xf32> to vector<32x32xf32>
      %271 = arith.truncf %270 : vector<32x32xf32> to vector<32x32xbf16>
      %272 = vector.shape_cast %271 : vector<32x32xbf16> to vector<2x16x32xbf16>
      %c2_173 = arith.constant 2 : index
      %c0_174 = arith.constant 0 : index
      %c0_175 = arith.constant 0 : index
      %c0_176 = arith.constant 0 : index
      %273 = vector.load %arg21[%c2_173, %c0_174, %c0_175, %c0_176] : memref<4x2x16x32xbf16, #tpu.memory_space<vmem>>, vector<1x2x16x32xbf16>
      %274 = vector.shape_cast %273 : vector<1x2x16x32xbf16> to vector<2x16x32xbf16>
      %275 = vector.shape_cast %272 : vector<2x16x32xbf16> to vector<1x2x16x32xbf16>
      tpu.vector_store %arg21[%c2_173, %c0_174, %c0_175, %c0_176], %275 {strides = array<i32>} : memref<4x2x16x32xbf16, #tpu.memory_space<vmem>>, vector<1x2x16x32xbf16>,
      %276 = vector.extract_strided_slice %257 {offsets = [0, 96], sizes = [32, 32], strides = [1, 1]} : vector<32x128xf32> to vector<32x32xf32>
      %277 = arith.truncf %276 : vector<32x32xf32> to vector<32x32xbf16>
      %278 = vector.shape_cast %277 : vector<32x32xbf16> to vector<2x16x32xbf16>
      %c3_177 = arith.constant 3 : index
      %c0_178 = arith.constant 0 : index
      %c0_179 = arith.constant 0 : index
      %c0_180 = arith.constant 0 : index
      %279 = vector.load %arg21[%c3_177, %c0_178, %c0_179, %c0_180] : memref<4x2x16x32xbf16, #tpu.memory_space<vmem>>, vector<1x2x16x32xbf16>
      %280 = vector.shape_cast %279 : vector<1x2x16x32xbf16> to vector<2x16x32xbf16>
      %281 = vector.shape_cast %278 : vector<2x16x32xbf16> to vector<1x2x16x32xbf16>
      tpu.vector_store %arg21[%c3_177, %c0_178, %c0_179, %c0_180], %281 {strides = array<i32>} : memref<4x2x16x32xbf16, #tpu.memory_space<vmem>>, vector<1x2x16x32xbf16>,
      %cst_181 = arith.constant 0xFF800000 : f32
      %282 = vector.broadcast %cst_181 : f32 to vector<4x2x16x1xf32>
      %c0_182 = arith.constant 0 : index
      %c0_183 = arith.constant 0 : index
      %c0_184 = arith.constant 0 : index
      %c0_185 = arith.constant 0 : index
      %283 = vector.load %arg22[%c0_182, %c0_183, %c0_184, %c0_185] : memref<4x2x16x1xf32, #tpu.memory_space<vmem>>, vector<4x2x16x1xf32>
      tpu.vector_store %arg22[%c0_182, %c0_183, %c0_184, %c0_185], %282 {strides = array<i32>} : memref<4x2x16x1xf32, #tpu.memory_space<vmem>>, vector<4x2x16x1xf32>,
      %cst_186 = arith.constant 0.000000e+00 : f32
      %284 = vector.broadcast %cst_186 : f32 to vector<4x2x16x1xf32>
      %c0_187 = arith.constant 0 : index
      %c0_188 = arith.constant 0 : index
      %c0_189 = arith.constant 0 : index
      %c0_190 = arith.constant 0 : index
      %285 = vector.load %arg23[%c0_187, %c0_188, %c0_189, %c0_190] : memref<4x2x16x1xf32, #tpu.memory_space<vmem>>, vector<4x2x16x1xf32>
      tpu.vector_store %arg23[%c0_187, %c0_188, %c0_189, %c0_190], %284 {strides = array<i32>} : memref<4x2x16x1xf32, #tpu.memory_space<vmem>>, vector<4x2x16x1xf32>,
      %cst_191 = arith.constant 0.000000e+00 : f32
      %286 = vector.broadcast %cst_191 : f32 to vector<4x2x16x32xf32>
      %c0_192 = arith.constant 0 : index
      %c0_193 = arith.constant 0 : index
      %c0_194 = arith.constant 0 : index
      %c0_195 = arith.constant 0 : index
      %287 = vector.load %arg24[%c0_192, %c0_193, %c0_194, %c0_195] : memref<4x2x16x32xf32, #tpu.memory_space<vmem>>, vector<4x2x16x32xf32>
      tpu.vector_store %arg24[%c0_192, %c0_193, %c0_194, %c0_195], %286 {strides = array<i32>} : memref<4x2x16x32xf32, #tpu.memory_space<vmem>>, vector<4x2x16x32xf32>,
    } else {
    }
    %c0 = arith.constant 0 : index
    %c0_1 = arith.constant 0 : index
    %c0_2 = arith.constant 0 : index
    %3 = vector.load %arg3[%c0, %c0_1, %c0_2] : memref<2x16x128xf32, #tpu.memory_space<vmem>>, vector<2x16x128xf32>
    %4 = vector.shape_cast %3 : vector<2x16x128xf32> to vector<32x128xf32>
    %5 = arith.truncf %4 : vector<32x128xf32> to vector<32x128xbf16>
    %c0_3 = arith.constant 0 : index
    %c0_4 = arith.constant 0 : index
    %6 = vector.load %arg6[%c0_3, %c0_4] : memref<128x128xbf16, #tpu.memory_space<vmem>>, vector<128x128xbf16>
    %cst = arith.constant dense<0.000000e+00> : vector<32x128xf32>
    %7 = tpu.matmul %5, %6, %cst {dimension_numbers = #tpu.dot_dimension_numbers<[1], [0], [0], [1], [0, 0, 1, 1], [], []>} : vector<32x128xbf16>, vector<128x128xbf16>, vector<32x128xf32> -> vector<32x128xf32>
    %c0_5 = arith.constant 0 : index
    %c0_6 = arith.constant 0 : index
    %8 = vector.load %arg7[%c0_5, %c0_6] : memref<1x128xf32, #tpu.memory_space<vmem>>, vector<1x128xf32>
    %9 = vector.broadcast %8 : vector<1x128xf32> to vector<32x128xf32>
    %10 = arith.addf %7, %9 : vector<32x128xf32>
    %c0_7 = arith.constant 0 : index
    %c0_8 = arith.constant 0 : index
    %11 = vector.load %arg8[%c0_7, %c0_8] : memref<128x128xbf16, #tpu.memory_space<vmem>>, vector<128x128xbf16>
    %cst_9 = arith.constant dense<0.000000e+00> : vector<32x128xf32>
    %12 = tpu.matmul %5, %11, %cst_9 {dimension_numbers = #tpu.dot_dimension_numbers<[1], [0], [0], [1], [0, 0, 1, 1], [], []>} : vector<32x128xbf16>, vector<128x128xbf16>, vector<32x128xf32> -> vector<32x128xf32>
    %c0_10 = arith.constant 0 : index
    %c0_11 = arith.constant 0 : index
    %13 = vector.load %arg9[%c0_10, %c0_11] : memref<1x128xf32, #tpu.memory_space<vmem>>, vector<1x128xf32>
    %14 = vector.broadcast %13 : vector<1x128xf32> to vector<32x128xf32>
    %15 = arith.addf %12, %14 : vector<32x128xf32>
    %16 = tpu.iota {dimensions = array<i32: 0>} : vector<16x16xi32>
    %17 = tpu.iota {dimensions = array<i32: 1>} : vector<16x16xi32>
    %c16_i32 = arith.constant 16 : i32
    %18 = arith.muli %arg1, %c16_i32 : i32
    %19 = vector.broadcast %18 : i32 to vector<16x16xi32>
    %20 = arith.addi %19, %17 : vector<16x16xi32>
    %c16_i32_12 = arith.constant 16 : i32
    %21 = vector.broadcast %c16_i32_12 : i32 to vector<16x16xi32>
    %22 = arith.addi %16, %21 : vector<16x16xi32>
    %23 = arith.cmpi sle, %20, %22 : vector<16x16xi32>
    %24 = vector.shape_cast %23 : vector<16x16xi1> to vector<1x16x16xi1>
    %25 = vector.extract_strided_slice %10 {offsets = [0, 0], sizes = [32, 32], strides = [1, 1]} : vector<32x128xf32> to vector<32x32xf32>
    %26 = arith.truncf %25 : vector<32x32xf32> to vector<32x32xbf16>
    %27 = vector.shape_cast %26 : vector<32x32xbf16> to vector<2x16x32xbf16>
    %28 = vector.extract_strided_slice %15 {offsets = [0, 0], sizes = [32, 32], strides = [1, 1]} : vector<32x128xf32> to vector<32x32xf32>
    %29 = arith.truncf %28 : vector<32x32xf32> to vector<32x32xbf16>
    %30 = vector.shape_cast %29 : vector<32x32xbf16> to vector<2x16x32xbf16>
    %c0_13 = arith.constant 0 : index
    %c0_14 = arith.constant 0 : index
    %c0_15 = arith.constant 0 : index
    %c0_16 = arith.constant 0 : index
    %31 = vector.load %arg21[%c0_13, %c0_14, %c0_15, %c0_16] : memref<4x2x16x32xbf16, #tpu.memory_space<vmem>>, vector<1x2x16x32xbf16>
    %32 = vector.shape_cast %31 : vector<1x2x16x32xbf16> to vector<2x16x32xbf16>
    "tpu.trace_start"() <{level = 10 : i32, message = "bqd,bkd->bqk"}> : () -> ()
    %cst_17 = arith.constant dense<0.000000e+00> : vector<2x16x16xf32>
    %33 = tpu.matmul %32, %27, %cst_17 {dimension_numbers = #tpu.dot_dimension_numbers<[2], [2], [1], [1], [0, 0, 0, 1, 1, 1], [0], [0]>} : vector<2x16x32xbf16>, vector<2x16x32xbf16>, vector<2x16x16xf32> -> vector<2x16x16xf32>
    %cst_18 = arith.constant -1.000000e+10 : f32
    "tpu.trace_stop"() : () -> ()
    %34 = vector.shape_cast %24 : vector<1x16x16xi1> to vector<1x16x16xi1>
    %35 = vector.broadcast %34 : vector<1x16x16xi1> to vector<2x16x16xi1>
    %36 = vector.broadcast %cst_18 : f32 to vector<2x16x16xf32>
    %37 = arith.select %35, %33, %36 : vector<2x16x16xi1>, vector<2x16x16xf32>
    %c0_19 = arith.constant 0 : index
    %c0_20 = arith.constant 0 : index
    %c0_21 = arith.constant 0 : index
    %c0_22 = arith.constant 0 : index
    %38 = vector.load %arg22[%c0_19, %c0_20, %c0_21, %c0_22] : memref<4x2x16x1xf32, #tpu.memory_space<vmem>>, vector<1x2x16x1xf32>
    %39 = vector.shape_cast %38 : vector<1x2x16x1xf32> to vector<2x16x1xf32>
    %cst_23 = arith.constant dense<0xFF800000> : vector<2x16xf32>
    %40 = vector.multi_reduction <maximumf>, %37, %cst_23 [2] : vector<2x16x16xf32> to vector<2x16xf32>
    %41 = vector.shape_cast %40 : vector<2x16xf32> to vector<2x16x1xf32>
    %42 = arith.maximumf %39, %41 : vector<2x16x1xf32>
    %43 = arith.subf %39, %42 : vector<2x16x1xf32>
    %44 = math.exp %43 : vector<2x16x1xf32>
    %45 = vector.broadcast %42 : vector<2x16x1xf32> to vector<2x16x16xf32>
    %46 = arith.subf %37, %45 : vector<2x16x16xf32>
    %47 = math.exp %46 : vector<2x16x16xf32>
    %cst_24 = arith.constant 0.000000e+00 : f32
    %48 = vector.shape_cast %24 : vector<1x16x16xi1> to vector<1x16x16xi1>
    %49 = vector.broadcast %48 : vector<1x16x16xi1> to vector<2x16x16xi1>
    %50 = vector.broadcast %cst_24 : f32 to vector<2x16x16xf32>
    %51 = arith.select %49, %47, %50 : vector<2x16x16xi1>, vector<2x16x16xf32>
    %c0_25 = arith.constant 0 : index
    %c0_26 = arith.constant 0 : index
    %c0_27 = arith.constant 0 : index
    %c0_28 = arith.constant 0 : index
    %52 = vector.load %arg23[%c0_25, %c0_26, %c0_27, %c0_28] : memref<4x2x16x1xf32, #tpu.memory_space<vmem>>, vector<1x2x16x1xf32>
    %53 = vector.shape_cast %52 : vector<1x2x16x1xf32> to vector<2x16x1xf32>
    %54 = arith.mulf %44, %53 : vector<2x16x1xf32>
    %cst_29 = arith.constant dense<0.000000e+00> : vector<2x16xf32>
    %55 = vector.multi_reduction <add>, %51, %cst_29 [2] : vector<2x16x16xf32> to vector<2x16xf32>
    %56 = vector.shape_cast %55 : vector<2x16xf32> to vector<2x16x1xf32>
    %57 = arith.addf %54, %56 : vector<2x16x1xf32>
    %c0_30 = arith.constant 0 : index
    %c0_31 = arith.constant 0 : index
    %c0_32 = arith.constant 0 : index
    %c0_33 = arith.constant 0 : index
    %58 = vector.load %arg23[%c0_30, %c0_31, %c0_32, %c0_33] : memref<4x2x16x1xf32, #tpu.memory_space<vmem>>, vector<1x2x16x1xf32>
    %59 = vector.shape_cast %58 : vector<1x2x16x1xf32> to vector<2x16x1xf32>
    %60 = vector.shape_cast %57 : vector<2x16x1xf32> to vector<1x2x16x1xf32>
    tpu.vector_store %arg23[%c0_30, %c0_31, %c0_32, %c0_33], %60 {strides = array<i32>} : memref<4x2x16x1xf32, #tpu.memory_space<vmem>>, vector<1x2x16x1xf32>,
    %c0_34 = arith.constant 0 : index
    %c0_35 = arith.constant 0 : index
    %c0_36 = arith.constant 0 : index
    %c0_37 = arith.constant 0 : index
    %61 = vector.load %arg24[%c0_34, %c0_35, %c0_36, %c0_37] : memref<4x2x16x32xf32, #tpu.memory_space<vmem>>, vector<1x2x16x32xf32>
    %62 = vector.shape_cast %61 : vector<1x2x16x32xf32> to vector<2x16x32xf32>
    %63 = vector.broadcast %44 : vector<2x16x1xf32> to vector<2x16x32xf32>
    %64 = arith.mulf %63, %62 : vector<2x16x32xf32>
    %65 = arith.truncf %51 : vector<2x16x16xf32> to vector<2x16x16xbf16>
    "tpu.trace_start"() <{level = 10 : i32, message = "bqk,bkd->bqd"}> : () -> ()
    %cst_38 = arith.constant dense<0.000000e+00> : vector<2x16x32xf32>
    %66 = tpu.matmul %65, %30, %cst_38 {dimension_numbers = #tpu.dot_dimension_numbers<[2], [1], [1], [2], [0, 0, 0, 1, 1, 2], [0], [0]>} : vector<2x16x16xbf16>, vector<2x16x32xbf16>, vector<2x16x32xf32> -> vector<2x16x32xf32>
    "tpu.trace_stop"() : () -> ()
    %67 = arith.addf %64, %66 : vector<2x16x32xf32>
    %c0_39 = arith.constant 0 : index
    %c0_40 = arith.constant 0 : index
    %c0_41 = arith.constant 0 : index
    %c0_42 = arith.constant 0 : index
    %68 = vector.load %arg24[%c0_39, %c0_40, %c0_41, %c0_42] : memref<4x2x16x32xf32, #tpu.memory_space<vmem>>, vector<1x2x16x32xf32>
    %69 = vector.shape_cast %68 : vector<1x2x16x32xf32> to vector<2x16x32xf32>
    %70 = vector.shape_cast %67 : vector<2x16x32xf32> to vector<1x2x16x32xf32>
    tpu.vector_store %arg24[%c0_39, %c0_40, %c0_41, %c0_42], %70 {strides = array<i32>} : memref<4x2x16x32xf32, #tpu.memory_space<vmem>>, vector<1x2x16x32xf32>,
    %c0_43 = arith.constant 0 : index
    %c0_44 = arith.constant 0 : index
    %c0_45 = arith.constant 0 : index
    %c0_46 = arith.constant 0 : index
    %71 = vector.load %arg22[%c0_43, %c0_44, %c0_45, %c0_46] : memref<4x2x16x1xf32, #tpu.memory_space<vmem>>, vector<1x2x16x1xf32>
    %72 = vector.shape_cast %71 : vector<1x2x16x1xf32> to vector<2x16x1xf32>
    %73 = vector.shape_cast %42 : vector<2x16x1xf32> to vector<1x2x16x1xf32>
    tpu.vector_store %arg22[%c0_43, %c0_44, %c0_45, %c0_46], %73 {strides = array<i32>} : memref<4x2x16x1xf32, #tpu.memory_space<vmem>>, vector<1x2x16x1xf32>,
    %74 = vector.extract_strided_slice %10 {offsets = [0, 32], sizes = [32, 32], strides = [1, 1]} : vector<32x128xf32> to vector<32x32xf32>
    %75 = arith.truncf %74 : vector<32x32xf32> to vector<32x32xbf16>
    %76 = vector.shape_cast %75 : vector<32x32xbf16> to vector<2x16x32xbf16>
    %77 = vector.extract_strided_slice %15 {offsets = [0, 32], sizes = [32, 32], strides = [1, 1]} : vector<32x128xf32> to vector<32x32xf32>
    %78 = arith.truncf %77 : vector<32x32xf32> to vector<32x32xbf16>
    %79 = vector.shape_cast %78 : vector<32x32xbf16> to vector<2x16x32xbf16>
    %c1 = arith.constant 1 : index
    %c0_47 = arith.constant 0 : index
    %c0_48 = arith.constant 0 : index
    %c0_49 = arith.constant 0 : index
    %80 = vector.load %arg21[%c1, %c0_47, %c0_48, %c0_49] : memref<4x2x16x32xbf16, #tpu.memory_space<vmem>>, vector<1x2x16x32xbf16>
    %81 = vector.shape_cast %80 : vector<1x2x16x32xbf16> to vector<2x16x32xbf16>
    "tpu.trace_start"() <{level = 10 : i32, message = "bqd,bkd->bqk"}> : () -> ()
    %cst_50 = arith.constant dense<0.000000e+00> : vector<2x16x16xf32>
    %82 = tpu.matmul %81, %76, %cst_50 {dimension_numbers = #tpu.dot_dimension_numbers<[2], [2], [1], [1], [0, 0, 0, 1, 1, 1], [0], [0]>} : vector<2x16x32xbf16>, vector<2x16x32xbf16>, vector<2x16x16xf32> -> vector<2x16x16xf32>
    %cst_51 = arith.constant -1.000000e+10 : f32
    "tpu.trace_stop"() : () -> ()
    %83 = vector.shape_cast %24 : vector<1x16x16xi1> to vector<1x16x16xi1>
    %84 = vector.broadcast %83 : vector<1x16x16xi1> to vector<2x16x16xi1>
    %85 = vector.broadcast %cst_51 : f32 to vector<2x16x16xf32>
    %86 = arith.select %84, %82, %85 : vector<2x16x16xi1>, vector<2x16x16xf32>
    %c1_52 = arith.constant 1 : index
    %c0_53 = arith.constant 0 : index
    %c0_54 = arith.constant 0 : index
    %c0_55 = arith.constant 0 : index
    %87 = vector.load %arg22[%c1_52, %c0_53, %c0_54, %c0_55] : memref<4x2x16x1xf32, #tpu.memory_space<vmem>>, vector<1x2x16x1xf32>
    %88 = vector.shape_cast %87 : vector<1x2x16x1xf32> to vector<2x16x1xf32>
    %cst_56 = arith.constant dense<0xFF800000> : vector<2x16xf32>
    %89 = vector.multi_reduction <maximumf>, %86, %cst_56 [2] : vector<2x16x16xf32> to vector<2x16xf32>
    %90 = vector.shape_cast %89 : vector<2x16xf32> to vector<2x16x1xf32>
    %91 = arith.maximumf %88, %90 : vector<2x16x1xf32>
    %92 = arith.subf %88, %91 : vector<2x16x1xf32>
    %93 = math.exp %92 : vector<2x16x1xf32>
    %94 = vector.broadcast %91 : vector<2x16x1xf32> to vector<2x16x16xf32>
    %95 = arith.subf %86, %94 : vector<2x16x16xf32>
    %96 = math.exp %95 : vector<2x16x16xf32>
    %cst_57 = arith.constant 0.000000e+00 : f32
    %97 = vector.shape_cast %24 : vector<1x16x16xi1> to vector<1x16x16xi1>
    %98 = vector.broadcast %97 : vector<1x16x16xi1> to vector<2x16x16xi1>
    %99 = vector.broadcast %cst_57 : f32 to vector<2x16x16xf32>
    %100 = arith.select %98, %96, %99 : vector<2x16x16xi1>, vector<2x16x16xf32>
    %c1_58 = arith.constant 1 : index
    %c0_59 = arith.constant 0 : index
    %c0_60 = arith.constant 0 : index
    %c0_61 = arith.constant 0 : index
    %101 = vector.load %arg23[%c1_58, %c0_59, %c0_60, %c0_61] : memref<4x2x16x1xf32, #tpu.memory_space<vmem>>, vector<1x2x16x1xf32>
    %102 = vector.shape_cast %101 : vector<1x2x16x1xf32> to vector<2x16x1xf32>
    %103 = arith.mulf %93, %102 : vector<2x16x1xf32>
    %cst_62 = arith.constant dense<0.000000e+00> : vector<2x16xf32>
    %104 = vector.multi_reduction <add>, %100, %cst_62 [2] : vector<2x16x16xf32> to vector<2x16xf32>
    %105 = vector.shape_cast %104 : vector<2x16xf32> to vector<2x16x1xf32>
    %106 = arith.addf %103, %105 : vector<2x16x1xf32>
    %c1_63 = arith.constant 1 : index
    %c0_64 = arith.constant 0 : index
    %c0_65 = arith.constant 0 : index
    %c0_66 = arith.constant 0 : index
    %107 = vector.load %arg23[%c1_63, %c0_64, %c0_65, %c0_66] : memref<4x2x16x1xf32, #tpu.memory_space<vmem>>, vector<1x2x16x1xf32>
    %108 = vector.shape_cast %107 : vector<1x2x16x1xf32> to vector<2x16x1xf32>
    %109 = vector.shape_cast %106 : vector<2x16x1xf32> to vector<1x2x16x1xf32>
    tpu.vector_store %arg23[%c1_63, %c0_64, %c0_65, %c0_66], %109 {strides = array<i32>} : memref<4x2x16x1xf32, #tpu.memory_space<vmem>>, vector<1x2x16x1xf32>,
    %c1_67 = arith.constant 1 : index
    %c0_68 = arith.constant 0 : index
    %c0_69 = arith.constant 0 : index
    %c0_70 = arith.constant 0 : index
    %110 = vector.load %arg24[%c1_67, %c0_68, %c0_69, %c0_70] : memref<4x2x16x32xf32, #tpu.memory_space<vmem>>, vector<1x2x16x32xf32>
    %111 = vector.shape_cast %110 : vector<1x2x16x32xf32> to vector<2x16x32xf32>
    %112 = vector.broadcast %93 : vector<2x16x1xf32> to vector<2x16x32xf32>
    %113 = arith.mulf %112, %111 : vector<2x16x32xf32>
    %114 = arith.truncf %100 : vector<2x16x16xf32> to vector<2x16x16xbf16>
    "tpu.trace_start"() <{level = 10 : i32, message = "bqk,bkd->bqd"}> : () -> ()
    %cst_71 = arith.constant dense<0.000000e+00> : vector<2x16x32xf32>
    %115 = tpu.matmul %114, %79, %cst_71 {dimension_numbers = #tpu.dot_dimension_numbers<[2], [1], [1], [2], [0, 0, 0, 1, 1, 2], [0], [0]>} : vector<2x16x16xbf16>, vector<2x16x32xbf16>, vector<2x16x32xf32> -> vector<2x16x32xf32>
    "tpu.trace_stop"() : () -> ()
    %116 = arith.addf %113, %115 : vector<2x16x32xf32>
    %c1_72 = arith.constant 1 : index
    %c0_73 = arith.constant 0 : index
    %c0_74 = arith.constant 0 : index
    %c0_75 = arith.constant 0 : index
    %117 = vector.load %arg24[%c1_72, %c0_73, %c0_74, %c0_75] : memref<4x2x16x32xf32, #tpu.memory_space<vmem>>, vector<1x2x16x32xf32>
    %118 = vector.shape_cast %117 : vector<1x2x16x32xf32> to vector<2x16x32xf32>
    %119 = vector.shape_cast %116 : vector<2x16x32xf32> to vector<1x2x16x32xf32>
    tpu.vector_store %arg24[%c1_72, %c0_73, %c0_74, %c0_75], %119 {strides = array<i32>} : memref<4x2x16x32xf32, #tpu.memory_space<vmem>>, vector<1x2x16x32xf32>,
    %c1_76 = arith.constant 1 : index
    %c0_77 = arith.constant 0 : index
    %c0_78 = arith.constant 0 : index
    %c0_79 = arith.constant 0 : index
    %120 = vector.load %arg22[%c1_76, %c0_77, %c0_78, %c0_79] : memref<4x2x16x1xf32, #tpu.memory_space<vmem>>, vector<1x2x16x1xf32>
    %121 = vector.shape_cast %120 : vector<1x2x16x1xf32> to vector<2x16x1xf32>
    %122 = vector.shape_cast %91 : vector<2x16x1xf32> to vector<1x2x16x1xf32>
    tpu.vector_store %arg22[%c1_76, %c0_77, %c0_78, %c0_79], %122 {strides = array<i32>} : memref<4x2x16x1xf32, #tpu.memory_space<vmem>>, vector<1x2x16x1xf32>,
    %123 = vector.extract_strided_slice %10 {offsets = [0, 64], sizes = [32, 32], strides = [1, 1]} : vector<32x128xf32> to vector<32x32xf32>
    %124 = arith.truncf %123 : vector<32x32xf32> to vector<32x32xbf16>
    %125 = vector.shape_cast %124 : vector<32x32xbf16> to vector<2x16x32xbf16>
    %126 = vector.extract_strided_slice %15 {offsets = [0, 64], sizes = [32, 32], strides = [1, 1]} : vector<32x128xf32> to vector<32x32xf32>
    %127 = arith.truncf %126 : vector<32x32xf32> to vector<32x32xbf16>
    %128 = vector.shape_cast %127 : vector<32x32xbf16> to vector<2x16x32xbf16>
    %c2 = arith.constant 2 : index
    %c0_80 = arith.constant 0 : index
    %c0_81 = arith.constant 0 : index
    %c0_82 = arith.constant 0 : index
    %129 = vector.load %arg21[%c2, %c0_80, %c0_81, %c0_82] : memref<4x2x16x32xbf16, #tpu.memory_space<vmem>>, vector<1x2x16x32xbf16>
    %130 = vector.shape_cast %129 : vector<1x2x16x32xbf16> to vector<2x16x32xbf16>
    "tpu.trace_start"() <{level = 10 : i32, message = "bqd,bkd->bqk"}> : () -> ()
    %cst_83 = arith.constant dense<0.000000e+00> : vector<2x16x16xf32>
    %131 = tpu.matmul %130, %125, %cst_83 {dimension_numbers = #tpu.dot_dimension_numbers<[2], [2], [1], [1], [0, 0, 0, 1, 1, 1], [0], [0]>} : vector<2x16x32xbf16>, vector<2x16x32xbf16>, vector<2x16x16xf32> -> vector<2x16x16xf32>
    %cst_84 = arith.constant -1.000000e+10 : f32
    "tpu.trace_stop"() : () -> ()
    %132 = vector.shape_cast %24 : vector<1x16x16xi1> to vector<1x16x16xi1>
    %133 = vector.broadcast %132 : vector<1x16x16xi1> to vector<2x16x16xi1>
    %134 = vector.broadcast %cst_84 : f32 to vector<2x16x16xf32>
    %135 = arith.select %133, %131, %134 : vector<2x16x16xi1>, vector<2x16x16xf32>
    %c2_85 = arith.constant 2 : index
    %c0_86 = arith.constant 0 : index
    %c0_87 = arith.constant 0 : index
    %c0_88 = arith.constant 0 : index
    %136 = vector.load %arg22[%c2_85, %c0_86, %c0_87, %c0_88] : memref<4x2x16x1xf32, #tpu.memory_space<vmem>>, vector<1x2x16x1xf32>
    %137 = vector.shape_cast %136 : vector<1x2x16x1xf32> to vector<2x16x1xf32>
    %cst_89 = arith.constant dense<0xFF800000> : vector<2x16xf32>
    %138 = vector.multi_reduction <maximumf>, %135, %cst_89 [2] : vector<2x16x16xf32> to vector<2x16xf32>
    %139 = vector.shape_cast %138 : vector<2x16xf32> to vector<2x16x1xf32>
    %140 = arith.maximumf %137, %139 : vector<2x16x1xf32>
    %141 = arith.subf %137, %140 : vector<2x16x1xf32>
    %142 = math.exp %141 : vector<2x16x1xf32>
    %143 = vector.broadcast %140 : vector<2x16x1xf32> to vector<2x16x16xf32>
    %144 = arith.subf %135, %143 : vector<2x16x16xf32>
    %145 = math.exp %144 : vector<2x16x16xf32>
    %cst_90 = arith.constant 0.000000e+00 : f32
    %146 = vector.shape_cast %24 : vector<1x16x16xi1> to vector<1x16x16xi1>
    %147 = vector.broadcast %146 : vector<1x16x16xi1> to vector<2x16x16xi1>
    %148 = vector.broadcast %cst_90 : f32 to vector<2x16x16xf32>
    %149 = arith.select %147, %145, %148 : vector<2x16x16xi1>, vector<2x16x16xf32>
    %c2_91 = arith.constant 2 : index
    %c0_92 = arith.constant 0 : index
    %c0_93 = arith.constant 0 : index
    %c0_94 = arith.constant 0 : index
    %150 = vector.load %arg23[%c2_91, %c0_92, %c0_93, %c0_94] : memref<4x2x16x1xf32, #tpu.memory_space<vmem>>, vector<1x2x16x1xf32>
    %151 = vector.shape_cast %150 : vector<1x2x16x1xf32> to vector<2x16x1xf32>
    %152 = arith.mulf %142, %151 : vector<2x16x1xf32>
    %cst_95 = arith.constant dense<0.000000e+00> : vector<2x16xf32>
    %153 = vector.multi_reduction <add>, %149, %cst_95 [2] : vector<2x16x16xf32> to vector<2x16xf32>
    %154 = vector.shape_cast %153 : vector<2x16xf32> to vector<2x16x1xf32>
    %155 = arith.addf %152, %154 : vector<2x16x1xf32>
    %c2_96 = arith.constant 2 : index
    %c0_97 = arith.constant 0 : index
    %c0_98 = arith.constant 0 : index
    %c0_99 = arith.constant 0 : index
    %156 = vector.load %arg23[%c2_96, %c0_97, %c0_98, %c0_99] : memref<4x2x16x1xf32, #tpu.memory_space<vmem>>, vector<1x2x16x1xf32>
    %157 = vector.shape_cast %156 : vector<1x2x16x1xf32> to vector<2x16x1xf32>
    %158 = vector.shape_cast %155 : vector<2x16x1xf32> to vector<1x2x16x1xf32>
    tpu.vector_store %arg23[%c2_96, %c0_97, %c0_98, %c0_99], %158 {strides = array<i32>} : memref<4x2x16x1xf32, #tpu.memory_space<vmem>>, vector<1x2x16x1xf32>,
    %c2_100 = arith.constant 2 : index
    %c0_101 = arith.constant 0 : index
    %c0_102 = arith.constant 0 : index
    %c0_103 = arith.constant 0 : index
    %159 = vector.load %arg24[%c2_100, %c0_101, %c0_102, %c0_103] : memref<4x2x16x32xf32, #tpu.memory_space<vmem>>, vector<1x2x16x32xf32>
    %160 = vector.shape_cast %159 : vector<1x2x16x32xf32> to vector<2x16x32xf32>
    %161 = vector.broadcast %142 : vector<2x16x1xf32> to vector<2x16x32xf32>
    %162 = arith.mulf %161, %160 : vector<2x16x32xf32>
    %163 = arith.truncf %149 : vector<2x16x16xf32> to vector<2x16x16xbf16>
    "tpu.trace_start"() <{level = 10 : i32, message = "bqk,bkd->bqd"}> : () -> ()
    %cst_104 = arith.constant dense<0.000000e+00> : vector<2x16x32xf32>
    %164 = tpu.matmul %163, %128, %cst_104 {dimension_numbers = #tpu.dot_dimension_numbers<[2], [1], [1], [2], [0, 0, 0, 1, 1, 2], [0], [0]>} : vector<2x16x16xbf16>, vector<2x16x32xbf16>, vector<2x16x32xf32> -> vector<2x16x32xf32>
    "tpu.trace_stop"() : () -> ()
    %165 = arith.addf %162, %164 : vector<2x16x32xf32>
    %c2_105 = arith.constant 2 : index
    %c0_106 = arith.constant 0 : index
    %c0_107 = arith.constant 0 : index
    %c0_108 = arith.constant 0 : index
    %166 = vector.load %arg24[%c2_105, %c0_106, %c0_107, %c0_108] : memref<4x2x16x32xf32, #tpu.memory_space<vmem>>, vector<1x2x16x32xf32>
    %167 = vector.shape_cast %166 : vector<1x2x16x32xf32> to vector<2x16x32xf32>
    %168 = vector.shape_cast %165 : vector<2x16x32xf32> to vector<1x2x16x32xf32>
    tpu.vector_store %arg24[%c2_105, %c0_106, %c0_107, %c0_108], %168 {strides = array<i32>} : memref<4x2x16x32xf32, #tpu.memory_space<vmem>>, vector<1x2x16x32xf32>,
    %c2_109 = arith.constant 2 : index
    %c0_110 = arith.constant 0 : index
    %c0_111 = arith.constant 0 : index
    %c0_112 = arith.constant 0 : index
    %169 = vector.load %arg22[%c2_109, %c0_110, %c0_111, %c0_112] : memref<4x2x16x1xf32, #tpu.memory_space<vmem>>, vector<1x2x16x1xf32>
    %170 = vector.shape_cast %169 : vector<1x2x16x1xf32> to vector<2x16x1xf32>
    %171 = vector.shape_cast %140 : vector<2x16x1xf32> to vector<1x2x16x1xf32>
    tpu.vector_store %arg22[%c2_109, %c0_110, %c0_111, %c0_112], %171 {strides = array<i32>} : memref<4x2x16x1xf32, #tpu.memory_space<vmem>>, vector<1x2x16x1xf32>,
    %172 = vector.extract_strided_slice %10 {offsets = [0, 96], sizes = [32, 32], strides = [1, 1]} : vector<32x128xf32> to vector<32x32xf32>
    %173 = arith.truncf %172 : vector<32x32xf32> to vector<32x32xbf16>
    %174 = vector.shape_cast %173 : vector<32x32xbf16> to vector<2x16x32xbf16>
    %175 = vector.extract_strided_slice %15 {offsets = [0, 96], sizes = [32, 32], strides = [1, 1]} : vector<32x128xf32> to vector<32x32xf32>
    %176 = arith.truncf %175 : vector<32x32xf32> to vector<32x32xbf16>
    %177 = vector.shape_cast %176 : vector<32x32xbf16> to vector<2x16x32xbf16>
    %c3 = arith.constant 3 : index
    %c0_113 = arith.constant 0 : index
    %c0_114 = arith.constant 0 : index
    %c0_115 = arith.constant 0 : index
    %178 = vector.load %arg21[%c3, %c0_113, %c0_114, %c0_115] : memref<4x2x16x32xbf16, #tpu.memory_space<vmem>>, vector<1x2x16x32xbf16>
    %179 = vector.shape_cast %178 : vector<1x2x16x32xbf16> to vector<2x16x32xbf16>
    "tpu.trace_start"() <{level = 10 : i32, message = "bqd,bkd->bqk"}> : () -> ()
    %cst_116 = arith.constant dense<0.000000e+00> : vector<2x16x16xf32>
    %180 = tpu.matmul %179, %174, %cst_116 {dimension_numbers = #tpu.dot_dimension_numbers<[2], [2], [1], [1], [0, 0, 0, 1, 1, 1], [0], [0]>} : vector<2x16x32xbf16>, vector<2x16x32xbf16>, vector<2x16x16xf32> -> vector<2x16x16xf32>
    %cst_117 = arith.constant -1.000000e+10 : f32
    "tpu.trace_stop"() : () -> ()
    %181 = vector.shape_cast %24 : vector<1x16x16xi1> to vector<1x16x16xi1>
    %182 = vector.broadcast %181 : vector<1x16x16xi1> to vector<2x16x16xi1>
    %183 = vector.broadcast %cst_117 : f32 to vector<2x16x16xf32>
    %184 = arith.select %182, %180, %183 : vector<2x16x16xi1>, vector<2x16x16xf32>
    %c3_118 = arith.constant 3 : index
    %c0_119 = arith.constant 0 : index
    %c0_120 = arith.constant 0 : index
    %c0_121 = arith.constant 0 : index
    %185 = vector.load %arg22[%c3_118, %c0_119, %c0_120, %c0_121] : memref<4x2x16x1xf32, #tpu.memory_space<vmem>>, vector<1x2x16x1xf32>
    %186 = vector.shape_cast %185 : vector<1x2x16x1xf32> to vector<2x16x1xf32>
    %cst_122 = arith.constant dense<0xFF800000> : vector<2x16xf32>
    %187 = vector.multi_reduction <maximumf>, %184, %cst_122 [2] : vector<2x16x16xf32> to vector<2x16xf32>
    %188 = vector.shape_cast %187 : vector<2x16xf32> to vector<2x16x1xf32>
    %189 = arith.maximumf %186, %188 : vector<2x16x1xf32>
    %190 = arith.subf %186, %189 : vector<2x16x1xf32>
    %191 = math.exp %190 : vector<2x16x1xf32>
    %192 = vector.broadcast %189 : vector<2x16x1xf32> to vector<2x16x16xf32>
    %193 = arith.subf %184, %192 : vector<2x16x16xf32>
    %194 = math.exp %193 : vector<2x16x16xf32>
    %cst_123 = arith.constant 0.000000e+00 : f32
    %195 = vector.shape_cast %24 : vector<1x16x16xi1> to vector<1x16x16xi1>
    %196 = vector.broadcast %195 : vector<1x16x16xi1> to vector<2x16x16xi1>
    %197 = vector.broadcast %cst_123 : f32 to vector<2x16x16xf32>
    %198 = arith.select %196, %194, %197 : vector<2x16x16xi1>, vector<2x16x16xf32>
    %c3_124 = arith.constant 3 : index
    %c0_125 = arith.constant 0 : index
    %c0_126 = arith.constant 0 : index
    %c0_127 = arith.constant 0 : index
    %199 = vector.load %arg23[%c3_124, %c0_125, %c0_126, %c0_127] : memref<4x2x16x1xf32, #tpu.memory_space<vmem>>, vector<1x2x16x1xf32>
    %200 = vector.shape_cast %199 : vector<1x2x16x1xf32> to vector<2x16x1xf32>
    %201 = arith.mulf %191, %200 : vector<2x16x1xf32>
    %cst_128 = arith.constant dense<0.000000e+00> : vector<2x16xf32>
    %202 = vector.multi_reduction <add>, %198, %cst_128 [2] : vector<2x16x16xf32> to vector<2x16xf32>
    %203 = vector.shape_cast %202 : vector<2x16xf32> to vector<2x16x1xf32>
    %204 = arith.addf %201, %203 : vector<2x16x1xf32>
    %c3_129 = arith.constant 3 : index
    %c0_130 = arith.constant 0 : index
    %c0_131 = arith.constant 0 : index
    %c0_132 = arith.constant 0 : index
    %205 = vector.load %arg23[%c3_129, %c0_130, %c0_131, %c0_132] : memref<4x2x16x1xf32, #tpu.memory_space<vmem>>, vector<1x2x16x1xf32>
    %206 = vector.shape_cast %205 : vector<1x2x16x1xf32> to vector<2x16x1xf32>
    %207 = vector.shape_cast %204 : vector<2x16x1xf32> to vector<1x2x16x1xf32>
    tpu.vector_store %arg23[%c3_129, %c0_130, %c0_131, %c0_132], %207 {strides = array<i32>} : memref<4x2x16x1xf32, #tpu.memory_space<vmem>>, vector<1x2x16x1xf32>,
    %c3_133 = arith.constant 3 : index
    %c0_134 = arith.constant 0 : index
    %c0_135 = arith.constant 0 : index
    %c0_136 = arith.constant 0 : index
    %208 = vector.load %arg24[%c3_133, %c0_134, %c0_135, %c0_136] : memref<4x2x16x32xf32, #tpu.memory_space<vmem>>, vector<1x2x16x32xf32>
    %209 = vector.shape_cast %208 : vector<1x2x16x32xf32> to vector<2x16x32xf32>
    %210 = vector.broadcast %191 : vector<2x16x1xf32> to vector<2x16x32xf32>
    %211 = arith.mulf %210, %209 : vector<2x16x32xf32>
    %212 = arith.truncf %198 : vector<2x16x16xf32> to vector<2x16x16xbf16>
    "tpu.trace_start"() <{level = 10 : i32, message = "bqk,bkd->bqd"}> : () -> ()
    %cst_137 = arith.constant dense<0.000000e+00> : vector<2x16x32xf32>
    %213 = tpu.matmul %212, %177, %cst_137 {dimension_numbers = #tpu.dot_dimension_numbers<[2], [1], [1], [2], [0, 0, 0, 1, 1, 2], [0], [0]>} : vector<2x16x16xbf16>, vector<2x16x32xbf16>, vector<2x16x32xf32> -> vector<2x16x32xf32>
    "tpu.trace_stop"() : () -> ()
    %214 = arith.addf %211, %213 : vector<2x16x32xf32>
    %c3_138 = arith.constant 3 : index
    %c0_139 = arith.constant 0 : index
    %c0_140 = arith.constant 0 : index
    %c0_141 = arith.constant 0 : index
    %215 = vector.load %arg24[%c3_138, %c0_139, %c0_140, %c0_141] : memref<4x2x16x32xf32, #tpu.memory_space<vmem>>, vector<1x2x16x32xf32>
    %216 = vector.shape_cast %215 : vector<1x2x16x32xf32> to vector<2x16x32xf32>
    %217 = vector.shape_cast %214 : vector<2x16x32xf32> to vector<1x2x16x32xf32>
    tpu.vector_store %arg24[%c3_138, %c0_139, %c0_140, %c0_141], %217 {strides = array<i32>} : memref<4x2x16x32xf32, #tpu.memory_space<vmem>>, vector<1x2x16x32xf32>,
    %c3_142 = arith.constant 3 : index
    %c0_143 = arith.constant 0 : index
    %c0_144 = arith.constant 0 : index
    %c0_145 = arith.constant 0 : index
    %218 = vector.load %arg22[%c3_142, %c0_143, %c0_144, %c0_145] : memref<4x2x16x1xf32, #tpu.memory_space<vmem>>, vector<1x2x16x1xf32>
    %219 = vector.shape_cast %218 : vector<1x2x16x1xf32> to vector<2x16x1xf32>
    %220 = vector.shape_cast %189 : vector<2x16x1xf32> to vector<1x2x16x1xf32>
    tpu.vector_store %arg22[%c3_142, %c0_143, %c0_144, %c0_145], %220 {strides = array<i32>} : memref<4x2x16x1xf32, #tpu.memory_space<vmem>>, vector<1x2x16x1xf32>,
    %c1_i32 = arith.constant 1 : i32
    %221 = arith.cmpi eq, %arg1, %c1_i32 : i32
    %222 = arith.extui %221 : i1 to i32
    %c0_i32_146 = arith.constant 0 : i32
    %223 = arith.cmpi ne, %222, %c0_i32_146 : i32
    scf.if %223 {
      %c0_147 = arith.constant 0 : index
      %c0_148 = arith.constant 0 : index
      %c0_149 = arith.constant 0 : index
      %224 = vector.load %arg2[%c0_147, %c0_148, %c0_149] : memref<2x16x128xf32, #tpu.memory_space<vmem>>, vector<2x16x128xf32>
      %225 = vector.shape_cast %224 : vector<2x16x128xf32> to vector<32x128xf32>
      %cst_150 = arith.constant 0.000000e+00 : f32
      %226 = vector.broadcast %cst_150 : f32 to vector<32x128xf32>
      %c0_151 = arith.constant 0 : index
      %c0_152 = arith.constant 0 : index
      %c0_153 = arith.constant 0 : index
      %c0_154 = arith.constant 0 : index
      %227 = vector.load %arg24[%c0_151, %c0_152, %c0_153, %c0_154] : memref<4x2x16x32xf32, #tpu.memory_space<vmem>>, vector<1x2x16x32xf32>
      %228 = vector.shape_cast %227 : vector<1x2x16x32xf32> to vector<2x16x32xf32>
      %c0_155 = arith.constant 0 : index
      %c0_156 = arith.constant 0 : index
      %c0_157 = arith.constant 0 : index
      %c0_158 = arith.constant 0 : index
      %229 = vector.load %arg23[%c0_155, %c0_156, %c0_157, %c0_158] : memref<4x2x16x1xf32, #tpu.memory_space<vmem>>, vector<1x2x16x1xf32>
      %230 = vector.shape_cast %229 : vector<1x2x16x1xf32> to vector<2x16x1xf32>
      %231 = tpu.reciprocal %230 {approx = true} : vector<2x16x1xf32> -> vector<2x16x1xf32>
      %232 = vector.broadcast %231 : vector<2x16x1xf32> to vector<2x16x32xf32>
      %233 = arith.mulf %228, %232 : vector<2x16x32xf32>
      %234 = vector.shape_cast %233 : vector<2x16x32xf32> to vector<32x32xf32>
      %235 = arith.truncf %234 : vector<32x32xf32> to vector<32x32xbf16>
      %c0_159 = arith.constant 0 : index
      %c0_160 = arith.constant 0 : index
      %236 = vector.load %arg10[%c0_159, %c0_160] : memref<128x128xbf16, #tpu.memory_space<vmem>>, vector<32x128xbf16>
      %cst_161 = arith.constant dense<0.000000e+00> : vector<32x128xf32>
      %237 = tpu.matmul %235, %236, %cst_161 {dimension_numbers = #tpu.dot_dimension_numbers<[1], [0], [0], [1], [0, 0, 1, 1], [], []>} : vector<32x32xbf16>, vector<32x128xbf16>, vector<32x128xf32> -> vector<32x128xf32>
      %238 = arith.addf %226, %237 : vector<32x128xf32>
      %c1_162 = arith.constant 1 : index
      %c0_163 = arith.constant 0 : index
      %c0_164 = arith.constant 0 : index
      %c0_165 = arith.constant 0 : index
      %239 = vector.load %arg24[%c1_162, %c0_163, %c0_164, %c0_165] : memref<4x2x16x32xf32, #tpu.memory_space<vmem>>, vector<1x2x16x32xf32>
      %240 = vector.shape_cast %239 : vector<1x2x16x32xf32> to vector<2x16x32xf32>
      %c1_166 = arith.constant 1 : index
      %c0_167 = arith.constant 0 : index
      %c0_168 = arith.constant 0 : index
      %c0_169 = arith.constant 0 : index
      %241 = vector.load %arg23[%c1_166, %c0_167, %c0_168, %c0_169] : memref<4x2x16x1xf32, #tpu.memory_space<vmem>>, vector<1x2x16x1xf32>
      %242 = vector.shape_cast %241 : vector<1x2x16x1xf32> to vector<2x16x1xf32>
      %243 = tpu.reciprocal %242 {approx = true} : vector<2x16x1xf32> -> vector<2x16x1xf32>
      %244 = vector.broadcast %243 : vector<2x16x1xf32> to vector<2x16x32xf32>
      %245 = arith.mulf %240, %244 : vector<2x16x32xf32>
      %246 = vector.shape_cast %245 : vector<2x16x32xf32> to vector<32x32xf32>
      %247 = arith.truncf %246 : vector<32x32xf32> to vector<32x32xbf16>
      %c32 = arith.constant 32 : index
      %c0_170 = arith.constant 0 : index
      %248 = vector.load %arg10[%c32, %c0_170] : memref<128x128xbf16, #tpu.memory_space<vmem>>, vector<32x128xbf16>
      %cst_171 = arith.constant dense<0.000000e+00> : vector<32x128xf32>
      %249 = tpu.matmul %247, %248, %cst_171 {dimension_numbers = #tpu.dot_dimension_numbers<[1], [0], [0], [1], [0, 0, 1, 1], [], []>} : vector<32x32xbf16>, vector<32x128xbf16>, vector<32x128xf32> -> vector<32x128xf32>
      %250 = arith.addf %238, %249 : vector<32x128xf32>
      %c2_172 = arith.constant 2 : index
      %c0_173 = arith.constant 0 : index
      %c0_174 = arith.constant 0 : index
      %c0_175 = arith.constant 0 : index
      %251 = vector.load %arg24[%c2_172, %c0_173, %c0_174, %c0_175] : memref<4x2x16x32xf32, #tpu.memory_space<vmem>>, vector<1x2x16x32xf32>
      %252 = vector.shape_cast %251 : vector<1x2x16x32xf32> to vector<2x16x32xf32>
      %c2_176 = arith.constant 2 : index
      %c0_177 = arith.constant 0 : index
      %c0_178 = arith.constant 0 : index
      %c0_179 = arith.constant 0 : index
      %253 = vector.load %arg23[%c2_176, %c0_177, %c0_178, %c0_179] : memref<4x2x16x1xf32, #tpu.memory_space<vmem>>, vector<1x2x16x1xf32>
      %254 = vector.shape_cast %253 : vector<1x2x16x1xf32> to vector<2x16x1xf32>
      %255 = tpu.reciprocal %254 {approx = true} : vector<2x16x1xf32> -> vector<2x16x1xf32>
      %256 = vector.broadcast %255 : vector<2x16x1xf32> to vector<2x16x32xf32>
      %257 = arith.mulf %252, %256 : vector<2x16x32xf32>
      %258 = vector.shape_cast %257 : vector<2x16x32xf32> to vector<32x32xf32>
      %259 = arith.truncf %258 : vector<32x32xf32> to vector<32x32xbf16>
      %c64 = arith.constant 64 : index
      %c0_180 = arith.constant 0 : index
      %260 = vector.load %arg10[%c64, %c0_180] : memref<128x128xbf16, #tpu.memory_space<vmem>>, vector<32x128xbf16>
      %cst_181 = arith.constant dense<0.000000e+00> : vector<32x128xf32>
      %261 = tpu.matmul %259, %260, %cst_181 {dimension_numbers = #tpu.dot_dimension_numbers<[1], [0], [0], [1], [0, 0, 1, 1], [], []>} : vector<32x32xbf16>, vector<32x128xbf16>, vector<32x128xf32> -> vector<32x128xf32>
      %262 = arith.addf %250, %261 : vector<32x128xf32>
      %c3_182 = arith.constant 3 : index
      %c0_183 = arith.constant 0 : index
      %c0_184 = arith.constant 0 : index
      %c0_185 = arith.constant 0 : index
      %263 = vector.load %arg24[%c3_182, %c0_183, %c0_184, %c0_185] : memref<4x2x16x32xf32, #tpu.memory_space<vmem>>, vector<1x2x16x32xf32>
      %264 = vector.shape_cast %263 : vector<1x2x16x32xf32> to vector<2x16x32xf32>
      %c3_186 = arith.constant 3 : index
      %c0_187 = arith.constant 0 : index
      %c0_188 = arith.constant 0 : index
      %c0_189 = arith.constant 0 : index
      %265 = vector.load %arg23[%c3_186, %c0_187, %c0_188, %c0_189] : memref<4x2x16x1xf32, #tpu.memory_space<vmem>>, vector<1x2x16x1xf32>
      %266 = vector.shape_cast %265 : vector<1x2x16x1xf32> to vector<2x16x1xf32>
      %267 = tpu.reciprocal %266 {approx = true} : vector<2x16x1xf32> -> vector<2x16x1xf32>
      %268 = vector.broadcast %267 : vector<2x16x1xf32> to vector<2x16x32xf32>
      %269 = arith.mulf %264, %268 : vector<2x16x32xf32>
      %270 = vector.shape_cast %269 : vector<2x16x32xf32> to vector<32x32xf32>
      %271 = arith.truncf %270 : vector<32x32xf32> to vector<32x32xbf16>
      %c96 = arith.constant 96 : index
      %c0_190 = arith.constant 0 : index
      %272 = vector.load %arg10[%c96, %c0_190] : memref<128x128xbf16, #tpu.memory_space<vmem>>, vector<32x128xbf16>
      %cst_191 = arith.constant dense<0.000000e+00> : vector<32x128xf32>
      %273 = tpu.matmul %271, %272, %cst_191 {dimension_numbers = #tpu.dot_dimension_numbers<[1], [0], [0], [1], [0, 0, 1, 1], [], []>} : vector<32x32xbf16>, vector<32x128xbf16>, vector<32x128xf32> -> vector<32x128xf32>
      %274 = arith.addf %262, %273 : vector<32x128xf32>
      %275 = arith.addf %225, %274 : vector<32x128xf32>
      %c0_192 = arith.constant 0 : index
      %c0_193 = arith.constant 0 : index
      %276 = vector.load %arg11[%c0_192, %c0_193] : memref<1x128xf32, #tpu.memory_space<vmem>>, vector<1x128xf32>
      %277 = vector.broadcast %276 : vector<1x128xf32> to vector<32x128xf32>
      %278 = arith.addf %275, %277 : vector<32x128xf32>
      %c0_194 = arith.constant 0 : index
      %c0_195 = arith.constant 0 : index
      %279 = vector.load %arg14[%c0_194, %c0_195] : memref<1x128xf32, #tpu.memory_space<vmem>>, vector<1x128xf32>
      %c0_196 = arith.constant 0 : index
      %c0_197 = arith.constant 0 : index
      %280 = vector.load %arg15[%c0_196, %c0_197] : memref<1x128xf32, #tpu.memory_space<vmem>>, vector<1x128xf32>
      %cst_198 = arith.constant dense<0.000000e+00> : vector<32xf32>
      %281 = vector.multi_reduction <add>, %278, %cst_198 [1] : vector<32x128xf32> to vector<32xf32>
      %282 = vector.shape_cast %281 : vector<32xf32> to vector<32x1xf32>
      %cst_199 = arith.constant 1.280000e+02 : f32
      %283 = vector.broadcast %cst_199 : f32 to vector<32x1xf32>
      %284 = arith.divf %282, %283 : vector<32x1xf32>
      %285 = vector.broadcast %284 : vector<32x1xf32> to vector<32x128xf32>
      %286 = arith.subf %278, %285 : vector<32x128xf32>
      %287 = arith.mulf %286, %286 : vector<32x128xf32>
      %cst_200 = arith.constant dense<0.000000e+00> : vector<32xf32>
      %288 = vector.multi_reduction <add>, %287, %cst_200 [1] : vector<32x128xf32> to vector<32xf32>
      %289 = vector.shape_cast %288 : vector<32xf32> to vector<32x1xf32>
      %cst_201 = arith.constant 1.280000e+02 : f32
      %290 = vector.broadcast %cst_201 : f32 to vector<32x1xf32>
      %291 = arith.divf %289, %290 : vector<32x1xf32>
      %292 = vector.broadcast %284 : vector<32x1xf32> to vector<32x128xf32>
      %293 = arith.subf %278, %292 : vector<32x128xf32>
      %cst_202 = arith.constant 9.99999974E-6 : f32
      %294 = vector.broadcast %cst_202 : f32 to vector<32x1xf32>
      %295 = arith.addf %291, %294 : vector<32x1xf32>
      %296 = math.rsqrt %295 : vector<32x1xf32>
      %297 = vector.broadcast %296 : vector<32x1xf32> to vector<32x128xf32>
      %298 = arith.mulf %293, %297 : vector<32x128xf32>
      %299 = vector.broadcast %279 : vector<1x128xf32> to vector<32x128xf32>
      %300 = arith.mulf %298, %299 : vector<32x128xf32>
      %301 = vector.broadcast %280 : vector<1x128xf32> to vector<32x128xf32>
      %302 = arith.addf %300, %301 : vector<32x128xf32>
      %303 = arith.truncf %302 : vector<32x128xf32> to vector<32x128xbf16>
      %c0_203 = arith.constant 0 : index
      %c0_204 = arith.constant 0 : index
      %304 = vector.load %arg16[%c0_203, %c0_204] : memref<128x512xbf16, #tpu.memory_space<vmem>>, vector<128x512xbf16>
      %cst_205 = arith.constant dense<0.000000e+00> : vector<32x512xf32>
      %305 = tpu.matmul %303, %304, %cst_205 {dimension_numbers = #tpu.dot_dimension_numbers<[1], [0], [0], [1], [0, 0, 1, 1], [], []>} : vector<32x128xbf16>, vector<128x512xbf16>, vector<32x512xf32> -> vector<32x512xf32>
      %c0_206 = arith.constant 0 : index
      %c0_207 = arith.constant 0 : index
      %306 = vector.load %arg17[%c0_206, %c0_207] : memref<1x512xf32, #tpu.memory_space<vmem>>, vector<1x512xf32>
      %307 = vector.broadcast %306 : vector<1x512xf32> to vector<32x512xf32>
      %308 = arith.addf %305, %307 : vector<32x512xf32>
      %cst_208 = arith.constant 5.000000e-01 : f32
      %309 = vector.broadcast %cst_208 : f32 to vector<32x512xf32>
      %310 = arith.mulf %309, %308 : vector<32x512xf32>
      %cst_209 = arith.constant 0.707106769 : f32
      %311 = vector.broadcast %cst_209 : f32 to vector<32x512xf32>
      %312 = arith.mulf %308, %311 : vector<32x512xf32>
      %313 = math.erf %312 : vector<32x512xf32>
      %cst_210 = arith.constant 1.000000e+00 : f32
      %314 = vector.broadcast %cst_210 : f32 to vector<32x512xf32>
      %315 = arith.addf %314, %313 : vector<32x512xf32>
      %316 = arith.mulf %310, %315 : vector<32x512xf32>
      %317 = arith.truncf %316 : vector<32x512xf32> to vector<32x512xbf16>
      %c0_211 = arith.constant 0 : index
      %c0_212 = arith.constant 0 : index
      %318 = vector.load %arg18[%c0_211, %c0_212] : memref<512x128xbf16, #tpu.memory_space<vmem>>, vector<512x128xbf16>
      %cst_213 = arith.constant dense<0.000000e+00> : vector<32x128xf32>
      %319 = tpu.matmul %317, %318, %cst_213 {dimension_numbers = #tpu.dot_dimension_numbers<[1], [0], [0], [1], [0, 0, 1, 1], [], []>} : vector<32x512xbf16>, vector<512x128xbf16>, vector<32x128xf32> -> vector<32x128xf32>
      %c0_214 = arith.constant 0 : index
      %c0_215 = arith.constant 0 : index
      %320 = vector.load %arg19[%c0_214, %c0_215] : memref<1x128xf32, #tpu.memory_space<vmem>>, vector<1x128xf32>
      %321 = vector.broadcast %320 : vector<1x128xf32> to vector<32x128xf32>
      %322 = arith.addf %319, %321 : vector<32x128xf32>
      %323 = arith.addf %278, %322 : vector<32x128xf32>
      %324 = vector.shape_cast %323 : vector<32x128xf32> to vector<2x16x128xf32>
      %c0_216 = arith.constant 0 : index
      %c0_217 = arith.constant 0 : index
      %c0_218 = arith.constant 0 : index
      %325 = vector.load %arg20[%c0_216, %c0_217, %c0_218] : memref<2x16x128xf32, #tpu.memory_space<vmem>>, vector<2x16x128xf32>
      tpu.vector_store %arg20[%c0_216, %c0_217, %c0_218], %324 {strides = array<i32>} : memref<2x16x128xf32, #tpu.memory_space<vmem>>, vector<2x16x128xf32>,
    } else {
    }
    return
  }
  func.func @transform_0(%arg0: i32, %arg1: i32) -> (i32, i32, i32) {
    %c0_i32 = arith.constant 0 : i32
    %c0_i32_0 = arith.constant 0 : i32
    %c0_i32_1 = arith.constant 0 : i32
    return %arg0, %c0_i32, %c0_i32_0 : i32, i32, i32
  }
  func.func @transform_1(%arg0: i32, %arg1: i32) -> (i32, i32, i32) {
    %c0_i32 = arith.constant 0 : i32
    %c0_i32_0 = arith.constant 0 : i32
    return %arg0, %arg1, %c0_i32 : i32, i32, i32
  }
  func.func @transform_2(%arg0: i32, %arg1: i32) -> (i32, i32) {
    %c0_i32 = arith.constant 0 : i32
    %c0_i32_0 = arith.constant 0 : i32
    %c0_i32_1 = arith.constant 0 : i32
    return %c0_i32, %c0_i32_0 : i32, i32
  }
  func.func @transform_3(%arg0: i32, %arg1: i32) -> (i32, i32) {
    %c0_i32 = arith.constant 0 : i32
    %c0_i32_0 = arith.constant 0 : i32
    %c0_i32_1 = arith.constant 0 : i32
    return %c0_i32, %c0_i32_0 : i32, i32
  }
  func.func @transform_4(%arg0: i32, %arg1: i32) -> (i32, i32) {
    %c0_i32 = arith.constant 0 : i32
    %c0_i32_0 = arith.constant 0 : i32
    %c0_i32_1 = arith.constant 0 : i32
    return %c0_i32, %c0_i32_0 : i32, i32
  }
  func.func @transform_5(%arg0: i32, %arg1: i32) -> (i32, i32) {
    %c0_i32 = arith.constant 0 : i32
    %c0_i32_0 = arith.constant 0 : i32
    %c0_i32_1 = arith.constant 0 : i32
    return %c0_i32, %c0_i32_0 : i32, i32
  }
  func.func @transform_6(%arg0: i32, %arg1: i32) -> (i32, i32) {
    %c0_i32 = arith.constant 0 : i32
    %c0_i32_0 = arith.constant 0 : i32
    %c0_i32_1 = arith.constant 0 : i32
    return %c0_i32, %c0_i32_0 : i32, i32
  }
  func.func @transform_7(%arg0: i32, %arg1: i32) -> (i32, i32) {
    %c0_i32 = arith.constant 0 : i32
    %c0_i32_0 = arith.constant 0 : i32
    %c0_i32_1 = arith.constant 0 : i32
    return %c0_i32, %c0_i32_0 : i32, i32
  }
  func.func @transform_8(%arg0: i32, %arg1: i32) -> (i32, i32) {
    %c0_i32 = arith.constant 0 : i32
    %c0_i32_0 = arith.constant 0 : i32
    %c0_i32_1 = arith.constant 0 : i32
    return %c0_i32, %c0_i32_0 : i32, i32
  }
  func.func @transform_9(%arg0: i32, %arg1: i32) -> (i32, i32) {
    %c0_i32 = arith.constant 0 : i32
    %c0_i32_0 = arith.constant 0 : i32
    %c0_i32_1 = arith.constant 0 : i32
    return %c0_i32, %c0_i32_0 : i32, i32
  }
  func.func @transform_10(%arg0: i32, %arg1: i32) -> (i32, i32) {
    %c0_i32 = arith.constant 0 : i32
    %c0_i32_0 = arith.constant 0 : i32
    %c0_i32_1 = arith.constant 0 : i32
    return %c0_i32, %c0_i32_0 : i32, i32
  }
  func.func @transform_11(%arg0: i32, %arg1: i32) -> (i32, i32) {
    %c0_i32 = arith.constant 0 : i32
    %c0_i32_0 = arith.constant 0 : i32
    %c0_i32_1 = arith.constant 0 : i32
    return %c0_i32, %c0_i32_0 : i32, i32
  }
  func.func @transform_12(%arg0: i32, %arg1: i32) -> (i32, i32) {
    %c0_i32 = arith.constant 0 : i32
    %c0_i32_0 = arith.constant 0 : i32
    %c0_i32_1 = arith.constant 0 : i32
    return %c0_i32, %c0_i32_0 : i32, i32
  }
  func.func @transform_13(%arg0: i32, %arg1: i32) -> (i32, i32) {
    %c0_i32 = arith.constant 0 : i32
    %c0_i32_0 = arith.constant 0 : i32
    %c0_i32_1 = arith.constant 0 : i32
    return %c0_i32, %c0_i32_0 : i32, i32
  }
  func.func @transform_14(%arg0: i32, %arg1: i32) -> (i32, i32) {
    %c0_i32 = arith.constant 0 : i32
    %c0_i32_0 = arith.constant 0 : i32
    %c0_i32_1 = arith.constant 0 : i32
    return %c0_i32, %c0_i32_0 : i32, i32
  }
  func.func @transform_15(%arg0: i32, %arg1: i32) -> (i32, i32) {
    %c0_i32 = arith.constant 0 : i32
    %c0_i32_0 = arith.constant 0 : i32
    %c0_i32_1 = arith.constant 0 : i32
    return %c0_i32, %c0_i32_0 : i32, i32
  }
  func.func @transform_16(%arg0: i32, %arg1: i32) -> (i32, i32) {
    %c0_i32 = arith.constant 0 : i32
    %c0_i32_0 = arith.constant 0 : i32
    %c0_i32_1 = arith.constant 0 : i32
    return %c0_i32, %c0_i32_0 : i32, i32
  }
  func.func @transform_17(%arg0: i32, %arg1: i32) -> (i32, i32) {
    %c0_i32 = arith.constant 0 : i32
    %c0_i32_0 = arith.constant 0 : i32
    %c0_i32_1 = arith.constant 0 : i32
    return %c0_i32, %c0_i32_0 : i32, i32
  }
  func.func @transform_18(%arg0: i32, %arg1: i32) -> (i32, i32, i32) {
    %c0_i32 = arith.constant 0 : i32
    %c0_i32_0 = arith.constant 0 : i32
    %c0_i32_1 = arith.constant 0 : i32
    return %arg0, %c0_i32, %c0_i32_0 : i32, i32, i32
  }
}

</mosaic_0001>

<llo_original>
// kernel: tpu_custom_call.1
$region0: #{tpu_custom_call.1}
  #allocation0 [shape = 'u32[]', space=smem, size = 0x4, offset = 0x4, fixed_abs, tag = 'smem constant byte address 0x4 - core index']
  #allocation1 [shape = 'u32[144,128]{1,0:T(1,128)}', space=vmem, size = 0x12000, scoped, tag = 'internal scratch']
  #allocation2 [shape = 'bf16[4,2,16,32]{3,2,1,0:T(8,128)(2,1)}', space=vmem, size = 0x8000, scoped, tag = 'scratch operand']
  #allocation3 [shape = 'f32[4,2,16,1]{3,2,1,0:T(8,128)}', space=vmem, size = 0x10000, scoped, tag = 'scratch operand']
  #allocation4 [shape = 'f32[4,2,16,1]{3,2,1,0:T(8,128)}', space=vmem, size = 0x10000, scoped, tag = 'scratch operand']
  #allocation5 [shape = 'f32[4,2,16,32]{3,2,1,0:T(8,128)}', space=vmem, size = 0x10000, scoped, tag = 'scratch operand']
  #allocation21 [shape = 's32[]', space=sflag, size = 0x4, offset = 0, fixed_abs, tag = 'sflag constant byte address 0x0 - dummy sync flag']
  %s0 = inlined_call_operand.hbm [shape: f32[2,16,128], index: 0, kind: input, shape index: {}]
  %s1 = inlined_call_operand.hbm [shape: f32[2,32,128], index: 1, kind: input, shape index: {}]
  %s2 = inlined_call_operand.hbm [shape: bf16[128,128], index: 2, kind: input, shape index: {}]
  %s3 = inlined_call_operand.vmem [shape: f32[1,128], index: 3, kind: input, shape index: {}]
  %s4 = inlined_call_operand.hbm [shape: bf16[128,128], index: 4, kind: input, shape index: {}]
  %s5 = inlined_call_operand.vmem [shape: f32[1,128], index: 5, kind: input, shape index: {}]
  %s6 = inlined_call_operand.hbm [shape: bf16[128,128], index: 6, kind: input, shape index: {}]
  %s7 = inlined_call_operand.vmem [shape: f32[1,128], index: 7, kind: input, shape index: {}]
  %s8 = inlined_call_operand.hbm [shape: bf16[128,128], index: 8, kind: input, shape index: {}]
  %s9 = inlined_call_operand.vmem [shape: f32[1,128], index: 9, kind: input, shape index: {}]
  %s10 = inlined_call_operand.vmem [shape: f32[1,128], index: 10, kind: input, shape index: {}]
  %s11 = inlined_call_operand.vmem [shape: f32[1,128], index: 11, kind: input, shape index: {}]
  %s12 = inlined_call_operand.vmem [shape: f32[1,128], index: 12, kind: input, shape index: {}]
  %s13 = inlined_call_operand.vmem [shape: f32[1,128], index: 13, kind: input, shape index: {}]
  %s14 = inlined_call_operand.hbm [shape: bf16[128,512], index: 14, kind: input, shape index: {}]
  %s15 = inlined_call_operand.vmem [shape: f32[1,512], index: 15, kind: input, shape index: {}]
  %s16 = inlined_call_operand.hbm [shape: bf16[512,128], index: 16, kind: input, shape index: {}]
  %s17 = inlined_call_operand.vmem [shape: f32[1,128], index: 17, kind: input, shape index: {}]
  %s18 = inlined_call_operand.hbm [shape: f32[2,16,128], index: 18, kind: output, shape index: {}]
  %s19 = sld [smem:[#allocation0]]
  $region145: #{tpu_custom_call.1} parent=0
    _
  %s21 = ssub.s32 1, %s19
  %s22 = scalar_select 0, %s21, %s19
  $region1: #{tpu_custom_call.1} parent=0
    #allocation6 [shape = 'u8[16384]{0}', space=vmem, size = 0x4000, scoped, tag = 'input window, operand 0, single buffered']
    #allocation7 [shape = 's32[2]{0}', space=sflag, size = 0x8, scoped, tag = 'scoped memory for tpu_custom_call.1']
    #allocation8 [shape = 's32[2]{0}', space=sflag, size = 0x8, scoped, tag = 'scoped memory for tpu_custom_call.1']
    #allocation9 [shape = 'u8[32768]{0}', space=vmem, size = 0x8000, scoped, tag = 'input window, operand 1']
    #allocation10 [shape = 's32[2]{0}', space=sflag, size = 0x8, scoped, tag = 'scoped memory for tpu_custom_call.1']
    #allocation11 [shape = 'u8[32768]{0}', space=vmem, size = 0x8000, scoped, tag = 'input window, operand 2, single buffered']
    #allocation12 [shape = 'u8[32768]{0}', space=vmem, size = 0x8000, scoped, tag = 'input window, operand 4, single buffered']
    #allocation13 [shape = 's32[1]{0}', space=sflag, size = 0x4, scoped, tag = 'scoped memory for tpu_custom_call.1']
    #allocation14 [shape = 'u8[32768]{0}', space=vmem, size = 0x8000, scoped, tag = 'input window, operand 6, single buffered']
    #allocation15 [shape = 'u8[32768]{0}', space=vmem, size = 0x8000, scoped, tag = 'input window, operand 8, single buffered']
    #allocation16 [shape = 's32[1]{0}', space=sflag, size = 0x4, scoped, tag = 'scoped memory for tpu_custom_call.1']
    #allocation17 [shape = 'u8[131072]{0}', space=vmem, size = 0x20000, scoped, tag = 'input window, operand 14, single buffered']
    #allocation18 [shape = 'u8[131072]{0}', space=vmem, size = 0x20000, scoped, tag = 'input window, operand 16, single buffered']
    #allocation19 [shape = 's32[1]{0}', space=sflag, size = 0x4, scoped, tag = 'scoped memory for tpu_custom_call.1']
    #allocation20 [shape = 'u8[16384]{0}', space=vmem, size = 0x4000, scoped, tag = 'output window, operand 0, single buffered']
    %23 = vsyncpa [#allocation7], 0
    %24 = vsyncpa [#allocation10], 0
    %s25 = scalar_lea.sflag [#allocation10], 1
    %26 = vsyncpa %s25, 0
    %27 = vsyncpa [#allocation13], 0
    %28 = vsyncpa [#allocation16], 0
    %29 = vsyncpa [#allocation19], 0
    %30 = vsyncpa [#allocation8], 0
    loop: start=0, step=1, limit=4
    $region2: #{tpu_custom_call.1} parent=1 // loop_pre_header
      _
    $region3: #{tpu_custom_call.1} parent=1 // loop_header
      %s32 = sphi 0, %s36
      %p33 = scmp.ge.s32.totalorder %s32, 4
      %s39 = sphi 0, %s51
      %s40 = sphi 0, %s47
      %s41 = sphi 0, %s39
      %s42 = sphi 0, %s40
      %s43 = sphi 0, %s41
      %s44 = sphi 0, %s42
      %s54 = sphi 0, %s56
      %s57 = sphi 0, %s54
      %s58 = sphi 0, %s57
      %s74 = sphi 0, %s58
      %s82 = sphi 0, %s84
      %s85 = sphi 0, %s82
      %s86 = sphi 0, %s85
      %s102 = sphi 0, %s86
      %s106 = sphi 0, %s106
      %s108 = sphi 0, %s106
      %s109 = sphi 0, %s108
      %s123 = sphi 0, %s109
      %s127 = sphi 0, %s127
      %s129 = sphi 0, %s127
      %s130 = sphi 0, %s129
      %s144 = sphi 0, %s130
      %s148 = sphi 0, %s148
      %s150 = sphi 0, %s148
      %s151 = sphi 0, %s150
      %s165 = sphi 0, %s151
      %s169 = sphi 0, %s169
      %s171 = sphi 0, %s169
      %s172 = sphi 0, %s171
      %s186 = sphi 0, %s172
      %s190 = sphi 0, %s190
      %s192 = sphi 0, %s190
      %s193 = sphi 0, %s192
      %s207 = sphi 0, %s193
      %s211 = sphi 0, %s211
      %s213 = sphi 0, %s211
      %s214 = sphi 0, %s213
      %s228 = sphi 0, %s214
      %s232 = sphi 0, %s232
      %s234 = sphi 0, %s232
      %s235 = sphi 0, %s234
      %s249 = sphi 0, %s235
      %s253 = sphi 0, %s253
      %s255 = sphi 0, %s253
      %s256 = sphi 0, %s255
      %s270 = sphi 0, %s256
      %s274 = sphi 0, %s274
      %s276 = sphi 0, %s274
      %s277 = sphi 0, %s276
      %s291 = sphi 0, %s277
      %s295 = sphi 0, %s295
      %s297 = sphi 0, %s295
      %s298 = sphi 0, %s297
      %s312 = sphi 0, %s298
      %s316 = sphi 0, %s316
      %s318 = sphi 0, %s316
      %s319 = sphi 0, %s318
      %s333 = sphi 0, %s319
      %s337 = sphi 0, %s337
      %s339 = sphi 0, %s337
      %s340 = sphi 0, %s339
      %s354 = sphi 0, %s340
      %s358 = sphi 0, %s358
      %s360 = sphi 0, %s358
      %s361 = sphi 0, %s360
      %s375 = sphi 0, %s361
      %s379 = sphi 0, %s379
      %s381 = sphi 0, %s379
      %s382 = sphi 0, %s381
      %s396 = sphi 0, %s382
      %s400 = sphi 0, %s400
      %s402 = sphi 0, %s400
      %s403 = sphi 0, %s402
      %s417 = sphi 0, %s403
      %s421 = sphi 0, %s421
      %s423 = sphi 0, %s421
      %s424 = sphi 0, %s423
      %s438 = sphi 0, %s424
      %s444 = sphi 0, %s446
      %s447 = sphi 0, %s444
      %s448 = sphi 0, %s447
      %s464 = sphi 0, %s448
    $region4: #{tpu_custom_call.1} parent=1 // loop_header_branch
      %35 = sbr.rel (%p33) target = $region8
    $region5: #{tpu_custom_call.1} parent=1 // loop_body
      %s37 = ssub.s32 %s32, 1
      %s38 = ssub.s32 %s32, 2
      %s45 = sadd.s32 1, %s40
      %p46 = scmp.ge.s32.totalorder %s45, 2
      %s47 = scalar_select %p46, 0, %s45
      %s48 = sadd.s32 1, %s39
      %s49 = scalar_select %p46, %s48, %s39
      %p50 = scmp.ge.s32.totalorder %s49, 1
      %s51 = scalar_select %p50, 0, %s49
      %s52 = ssub.s32 %s39, %s51
      %p53 = scmp.eq.s32.totalorder %s52, 0
      %s55 = sadd.s32 %s54, 1
      %s56 = scalar_select %p53, %s54, %s55
      %p59 = pneg %p53
      %p60 = scmp.eq.s32.totalorder %s32, 1
      %p61 = por %p59, %p60
      %p62 = scmp.ne.s32.totalorder %s54, %s57
      %p63 = scmp.eq.s32.totalorder %s32, 0
      %p64 = por %p62, %p63
      %p65 = scmp.ne.s32.totalorder %s54, %s57
      %p66 = scmp.eq.s32.totalorder %s37, 1
      %p67 = por %p65, %p66
      %p68 = scmp.ne.s32.totalorder %s57, %s58
      %p69 = scmp.eq.s32.totalorder %s37, 0
      %p70 = por %p68, %p69
      %p71 = scmp.ne.s32.totalorder %s57, %s58
      %p72 = scmp.eq.s32.totalorder %s38, 1
      %p73 = por %p71, %p72
      %p75 = scmp.ne.s32.totalorder %s58, %s74
      %p76 = scmp.eq.s32.totalorder %s38, 0
      %p77 = por %p75, %p76
      %s78 = ssub.s32 %s39, %s51
      %s79 = ssub.s32 %s40, %s47
      %s80 = sor.u32 %s78, %s79
      %p81 = scmp.eq.s32.totalorder %s80, 0
      %s83 = sadd.s32 %s82, 1
      %s84 = scalar_select %p81, %s82, %s83
      %p87 = pneg %p81
      %p88 = scmp.eq.s32.totalorder %s32, 1
      %p89 = por %p87, %p88
      %p90 = scmp.ne.s32.totalorder %s82, %s85
      %p91 = scmp.eq.s32.totalorder %s32, 0
      %p92 = por %p90, %p91
      %p93 = scmp.ne.s32.totalorder %s82, %s85
      %p94 = scmp.eq.s32.totalorder %s37, 1
      %p95 = por %p93, %p94
      %p96 = scmp.ne.s32.totalorder %s85, %s86
      %p97 = scmp.eq.s32.totalorder %s37, 0
      %p98 = por %p96, %p97
      %p99 = scmp.ne.s32.totalorder %s85, %s86
      %p100 = scmp.eq.s32.totalorder %s38, 1
      %p101 = por %p99, %p100
      %p103 = scmp.ne.s32.totalorder %s86, %s102
      %p104 = scmp.eq.s32.totalorder %s38, 0
      %p105 = por %p103, %p104
      %s107 = sadd.s32 %s106, 1
      %p110 = scmp.eq.s32.totalorder %s32, 1
      %p111 = scmp.ne.s32.totalorder %s106, %s108
      %p112 = scmp.eq.s32.totalorder %s32, 0
      %p113 = por %p111, %p112
      %p114 = scmp.ne.s32.totalorder %s106, %s108
      %p115 = scmp.eq.s32.totalorder %s37, 1
      %p116 = por %p114, %p115
      %p117 = scmp.ne.s32.totalorder %s108, %s109
      %p118 = scmp.eq.s32.totalorder %s37, 0
      %p119 = por %p117, %p118
      %p120 = scmp.ne.s32.totalorder %s108, %s109
      %p121 = scmp.eq.s32.totalorder %s38, 1
      %p122 = por %p120, %p121
      %p124 = scmp.ne.s32.totalorder %s109, %s123
      %p125 = scmp.eq.s32.totalorder %s38, 0
      %p126 = por %p124, %p125
      %s128 = sadd.s32 %s127, 1
      %p131 = scmp.eq.s32.totalorder %s32, 1
      %p132 = scmp.ne.s32.totalorder %s127, %s129
      %p133 = scmp.eq.s32.totalorder %s32, 0
      %p134 = por %p132, %p133
      %p135 = scmp.ne.s32.totalorder %s127, %s129
      %p136 = scmp.eq.s32.totalorder %s37, 1
      %p137 = por %p135, %p136
      %p138 = scmp.ne.s32.totalorder %s129, %s130
      %p139 = scmp.eq.s32.totalorder %s37, 0
      %p140 = por %p138, %p139
      %p141 = scmp.ne.s32.totalorder %s129, %s130
      %p142 = scmp.eq.s32.totalorder %s38, 1
      %p143 = por %p141, %p142
      %p145 = scmp.ne.s32.totalorder %s130, %s144
      %p146 = scmp.eq.s32.totalorder %s38, 0
      %p147 = por %p145, %p146
      %s149 = sadd.s32 %s148, 1
      %p152 = scmp.eq.s32.totalorder %s32, 1
      %p153 = scmp.ne.s32.totalorder %s148, %s150
      %p154 = scmp.eq.s32.totalorder %s32, 0
      %p155 = por %p153, %p154
      %p156 = scmp.ne.s32.totalorder %s148, %s150
      %p157 = scmp.eq.s32.totalorder %s37, 1
      %p158 = por %p156, %p157
      %p159 = scmp.ne.s32.totalorder %s150, %s151
      %p160 = scmp.eq.s32.totalorder %s37, 0
      %p161 = por %p159, %p160
      %p162 = scmp.ne.s32.totalorder %s150, %s151
      %p163 = scmp.eq.s32.totalorder %s38, 1
      %p164 = por %p162, %p163
      %p166 = scmp.ne.s32.totalorder %s151, %s165
      %p167 = scmp.eq.s32.totalorder %s38, 0
      %p168 = por %p166, %p167
      %s170 = sadd.s32 %s169, 1
      %p173 = scmp.eq.s32.totalorder %s32, 1
      %p174 = scmp.ne.s32.totalorder %s169, %s171
      %p175 = scmp.eq.s32.totalorder %s32, 0
      %p176 = por %p174, %p175
      %p177 = scmp.ne.s32.totalorder %s169, %s171
      %p178 = scmp.eq.s32.totalorder %s37, 1
      %p179 = por %p177, %p178
      %p180 = scmp.ne.s32.totalorder %s171, %s172
      %p181 = scmp.eq.s32.totalorder %s37, 0
      %p182 = por %p180, %p181
      %p183 = scmp.ne.s32.totalorder %s171, %s172
      %p184 = scmp.eq.s32.totalorder %s38, 1
      %p185 = por %p183, %p184
      %p187 = scmp.ne.s32.totalorder %s172, %s186
      %p188 = scmp.eq.s32.totalorder %s38, 0
      %p189 = por %p187, %p188
      %s191 = sadd.s32 %s190, 1
      %p194 = scmp.eq.s32.totalorder %s32, 1
      %p195 = scmp.ne.s32.totalorder %s190, %s192
      %p196 = scmp.eq.s32.totalorder %s32, 0
      %p197 = por %p195, %p196
      %p198 = scmp.ne.s32.totalorder %s190, %s192
      %p199 = scmp.eq.s32.totalorder %s37, 1
      %p200 = por %p198, %p199
      %p201 = scmp.ne.s32.totalorder %s192, %s193
      %p202 = scmp.eq.s32.totalorder %s37, 0
      %p203 = por %p201, %p202
      %p204 = scmp.ne.s32.totalorder %s192, %s193
      %p205 = scmp.eq.s32.totalorder %s38, 1
      %p206 = por %p204, %p205
      %p208 = scmp.ne.s32.totalorder %s193, %s207
      %p209 = scmp.eq.s32.totalorder %s38, 0
      %p210 = por %p208, %p209
      %s212 = sadd.s32 %s211, 1
      %p215 = scmp.eq.s32.totalorder %s32, 1
      %p216 = scmp.ne.s32.totalorder %s211, %s213
      %p217 = scmp.eq.s32.totalorder %s32, 0
      %p218 = por %p216, %p217
      %p219 = scmp.ne.s32.totalorder %s211, %s213
      %p220 = scmp.eq.s32.totalorder %s37, 1
      %p221 = por %p219, %p220
      %p222 = scmp.ne.s32.totalorder %s213, %s214
      %p223 = scmp.eq.s32.totalorder %s37, 0
      %p224 = por %p222, %p223
      %p225 = scmp.ne.s32.totalorder %s213, %s214
      %p226 = scmp.eq.s32.totalorder %s38, 1
      %p227 = por %p225, %p226
      %p229 = scmp.ne.s32.totalorder %s214, %s228
      %p230 = scmp.eq.s32.totalorder %s38, 0
      %p231 = por %p229, %p230
      %s233 = sadd.s32 %s232, 1
      %p236 = scmp.eq.s32.totalorder %s32, 1
      %p237 = scmp.ne.s32.totalorder %s232, %s234
      %p238 = scmp.eq.s32.totalorder %s32, 0
      %p239 = por %p237, %p238
      %p240 = scmp.ne.s32.totalorder %s232, %s234
      %p241 = scmp.eq.s32.totalorder %s37, 1
      %p242 = por %p240, %p241
      %p243 = scmp.ne.s32.totalorder %s234, %s235
      %p244 = scmp.eq.s32.totalorder %s37, 0
      %p245 = por %p243, %p244
      %p246 = scmp.ne.s32.totalorder %s234, %s235
      %p247 = scmp.eq.s32.totalorder %s38, 1
      %p248 = por %p246, %p247
      %p250 = scmp.ne.s32.totalorder %s235, %s249
      %p251 = scmp.eq.s32.totalorder %s38, 0
      %p252 = por %p250, %p251
      %s254 = sadd.s32 %s253, 1
      %p257 = scmp.eq.s32.totalorder %s32, 1
      %p258 = scmp.ne.s32.totalorder %s253, %s255
      %p259 = scmp.eq.s32.totalorder %s32, 0
      %p260 = por %p258, %p259
      %p261 = scmp.ne.s32.totalorder %s253, %s255
      %p262 = scmp.eq.s32.totalorder %s37, 1
      %p263 = por %p261, %p262
      %p264 = scmp.ne.s32.totalorder %s255, %s256
      %p265 = scmp.eq.s32.totalorder %s37, 0
      %p266 = por %p264, %p265
      %p267 = scmp.ne.s32.totalorder %s255, %s256
      %p268 = scmp.eq.s32.totalorder %s38, 1
      %p269 = por %p267, %p268
      %p271 = scmp.ne.s32.totalorder %s256, %s270
      %p272 = scmp.eq.s32.totalorder %s38, 0
      %p273 = por %p271, %p272
      %s275 = sadd.s32 %s274, 1
      %p278 = scmp.eq.s32.totalorder %s32, 1
      %p279 = scmp.ne.s32.totalorder %s274, %s276
      %p280 = scmp.eq.s32.totalorder %s32, 0
      %p281 = por %p279, %p280
      %p282 = scmp.ne.s32.totalorder %s274, %s276
      %p283 = scmp.eq.s32.totalorder %s37, 1
      %p284 = por %p282, %p283
      %p285 = scmp.ne.s32.totalorder %s276, %s277
      %p286 = scmp.eq.s32.totalorder %s37, 0
      %p287 = por %p285, %p286
      %p288 = scmp.ne.s32.totalorder %s276, %s277
      %p289 = scmp.eq.s32.totalorder %s38, 1
      %p290 = por %p288, %p289
      %p292 = scmp.ne.s32.totalorder %s277, %s291
      %p293 = scmp.eq.s32.totalorder %s38, 0
      %p294 = por %p292, %p293
      %s296 = sadd.s32 %s295, 1
      %p299 = scmp.eq.s32.totalorder %s32, 1
      %p300 = scmp.ne.s32.totalorder %s295, %s297
      %p301 = scmp.eq.s32.totalorder %s32, 0
      %p302 = por %p300, %p301
      %p303 = scmp.ne.s32.totalorder %s295, %s297
      %p304 = scmp.eq.s32.totalorder %s37, 1
      %p305 = por %p303, %p304
      %p306 = scmp.ne.s32.totalorder %s297, %s298
      %p307 = scmp.eq.s32.totalorder %s37, 0
      %p308 = por %p306, %p307
      %p309 = scmp.ne.s32.totalorder %s297, %s298
      %p310 = scmp.eq.s32.totalorder %s38, 1
      %p311 = por %p309, %p310
      %p313 = scmp.ne.s32.totalorder %s298, %s312
      %p314 = scmp.eq.s32.totalorder %s38, 0
      %p315 = por %p313, %p314
      %s317 = sadd.s32 %s316, 1
      %p320 = scmp.eq.s32.totalorder %s32, 1
      %p321 = scmp.ne.s32.totalorder %s316, %s318
      %p322 = scmp.eq.s32.totalorder %s32, 0
      %p323 = por %p321, %p322
      %p324 = scmp.ne.s32.totalorder %s316, %s318
      %p325 = scmp.eq.s32.totalorder %s37, 1
      %p326 = por %p324, %p325
      %p327 = scmp.ne.s32.totalorder %s318, %s319
      %p328 = scmp.eq.s32.totalorder %s37, 0
      %p329 = por %p327, %p328
      %p330 = scmp.ne.s32.totalorder %s318, %s319
      %p331 = scmp.eq.s32.totalorder %s38, 1
      %p332 = por %p330, %p331
      %p334 = scmp.ne.s32.totalorder %s319, %s333
      %p335 = scmp.eq.s32.totalorder %s38, 0
      %p336 = por %p334, %p335
      %s338 = sadd.s32 %s337, 1
      %p341 = scmp.eq.s32.totalorder %s32, 1
      %p342 = scmp.ne.s32.totalorder %s337, %s339
      %p343 = scmp.eq.s32.totalorder %s32, 0
      %p344 = por %p342, %p343
      %p345 = scmp.ne.s32.totalorder %s337, %s339
      %p346 = scmp.eq.s32.totalorder %s37, 1
      %p347 = por %p345, %p346
      %p348 = scmp.ne.s32.totalorder %s339, %s340
      %p349 = scmp.eq.s32.totalorder %s37, 0
      %p350 = por %p348, %p349
      %p351 = scmp.ne.s32.totalorder %s339, %s340
      %p352 = scmp.eq.s32.totalorder %s38, 1
      %p353 = por %p351, %p352
      %p355 = scmp.ne.s32.totalorder %s340, %s354
      %p356 = scmp.eq.s32.totalorder %s38, 0
      %p357 = por %p355, %p356
      %s359 = sadd.s32 %s358, 1
      %p362 = scmp.eq.s32.totalorder %s32, 1
      %p363 = scmp.ne.s32.totalorder %s358, %s360
      %p364 = scmp.eq.s32.totalorder %s32, 0
      %p365 = por %p363, %p364
      %p366 = scmp.ne.s32.totalorder %s358, %s360
      %p367 = scmp.eq.s32.totalorder %s37, 1
      %p368 = por %p366, %p367
      %p369 = scmp.ne.s32.totalorder %s360, %s361
      %p370 = scmp.eq.s32.totalorder %s37, 0
      %p371 = por %p369, %p370
      %p372 = scmp.ne.s32.totalorder %s360, %s361
      %p373 = scmp.eq.s32.totalorder %s38, 1
      %p374 = por %p372, %p373
      %p376 = scmp.ne.s32.totalorder %s361, %s375
      %p377 = scmp.eq.s32.totalorder %s38, 0
      %p378 = por %p376, %p377
      %s380 = sadd.s32 %s379, 1
      %p383 = scmp.eq.s32.totalorder %s32, 1
      %p384 = scmp.ne.s32.totalorder %s379, %s381
      %p385 = scmp.eq.s32.totalorder %s32, 0
      %p386 = por %p384, %p385
      %p387 = scmp.ne.s32.totalorder %s379, %s381
      %p388 = scmp.eq.s32.totalorder %s37, 1
      %p389 = por %p387, %p388
      %p390 = scmp.ne.s32.totalorder %s381, %s382
      %p391 = scmp.eq.s32.totalorder %s37, 0
      %p392 = por %p390, %p391
      %p393 = scmp.ne.s32.totalorder %s381, %s382
      %p394 = scmp.eq.s32.totalorder %s38, 1
      %p395 = por %p393, %p394
      %p397 = scmp.ne.s32.totalorder %s382, %s396
      %p398 = scmp.eq.s32.totalorder %s38, 0
      %p399 = por %p397, %p398
      %s401 = sadd.s32 %s400, 1
      %p404 = scmp.eq.s32.totalorder %s32, 1
      %p405 = scmp.ne.s32.totalorder %s400, %s402
      %p406 = scmp.eq.s32.totalorder %s32, 0
      %p407 = por %p405, %p406
      %p408 = scmp.ne.s32.totalorder %s400, %s402
      %p409 = scmp.eq.s32.totalorder %s37, 1
      %p410 = por %p408, %p409
      %p411 = scmp.ne.s32.totalorder %s402, %s403
      %p412 = scmp.eq.s32.totalorder %s37, 0
      %p413 = por %p411, %p412
      %p414 = scmp.ne.s32.totalorder %s402, %s403
      %p415 = scmp.eq.s32.totalorder %s38, 1
      %p416 = por %p414, %p415
      %p418 = scmp.ne.s32.totalorder %s403, %s417
      %p419 = scmp.eq.s32.totalorder %s38, 0
      %p420 = por %p418, %p419
      %s422 = sadd.s32 %s421, 1
      %p425 = scmp.eq.s32.totalorder %s32, 1
      %p426 = scmp.ne.s32.totalorder %s421, %s423
      %p427 = scmp.eq.s32.totalorder %s32, 0
      %p428 = por %p426, %p427
      %p429 = scmp.ne.s32.totalorder %s421, %s423
      %p430 = scmp.eq.s32.totalorder %s37, 1
      %p431 = por %p429, %p430
      %p432 = scmp.ne.s32.totalorder %s423, %s424
      %p433 = scmp.eq.s32.totalorder %s37, 0
      %p434 = por %p432, %p433
      %p435 = scmp.ne.s32.totalorder %s423, %s424
      %p436 = scmp.eq.s32.totalorder %s38, 1
      %p437 = por %p435, %p436
      %p439 = scmp.ne.s32.totalorder %s424, %s438
      %p440 = scmp.eq.s32.totalorder %s38, 0
      %p441 = por %p439, %p440
      %s442 = ssub.s32 %s39, %s51
      %p443 = scmp.eq.s32.totalorder %s442, 0
      %s445 = sadd.s32 %s444, 1
      %s446 = scalar_select %p443, %s444, %s445
      %p449 = pneg %p443
      %p450 = scmp.eq.s32.totalorder %s32, 1
      %p451 = por %p449, %p450
      %p452 = scmp.ne.s32.totalorder %s444, %s447
      %p453 = scmp.eq.s32.totalorder %s32, 0
      %p454 = por %p452, %p453
      %p455 = scmp.ne.s32.totalorder %s444, %s447
      %p456 = scmp.eq.s32.totalorder %s37, 1
      %p457 = por %p455, %p456
      %p458 = scmp.ne.s32.totalorder %s447, %s448
      %p459 = scmp.eq.s32.totalorder %s37, 0
      %p460 = por %p458, %p459
      %p461 = scmp.ne.s32.totalorder %s447, %s448
      %p462 = scmp.eq.s32.totalorder %s38, 1
      %p463 = por %p461, %p462
      %p465 = scmp.ne.s32.totalorder %s448, %s464
      %p466 = scmp.eq.s32.totalorder %s38, 0
      %p467 = por %p465, %p466
      %p468 = scmp.le.s32.totalorder 1, %s32
      %p469 = scmp.lt.s32.totalorder %s32, 3
      %p470 = pnand %p468, %p469
      %p471 = pneg %p470
      // Predicated region
      $region9: #{tpu_custom_call.1} parent=5 // pred_check
        _
      $region10: #{tpu_custom_call.1} parent=5 // pred_check_branch
        %473 = sbr.rel (%p470) target = $region12
      $region11: #{tpu_custom_call.1} parent=5 // pred_region
        %s474 = ssub.s32 %s32, 1
        // Predicated region
        $region13: #{tpu_custom_call.1} parent=11 // pred_check
          %p475 = pneg %p70
        $region14: #{tpu_custom_call.1} parent=11 // pred_check_branch
          %477 = sbr.rel (%p475) target = $region16
        $region15: #{tpu_custom_call.1} parent=11 // pred_region
          %s478 = smul.u32 2, %s41
          %s480 = ssub.s32 512, 512
          %481 = vsyncadd [#allocation7], %s480
          %s482 = smul.addr %s478, 2
          %s483 = smul.addr %s482, 128
          %s484 = scalar_lea.hbm %s0, %s483
          %s485 = sshll.u32 [#allocation6], 4
          %s486 = int_to_ptr.vmem [resolvable:$true] %s485
          %491 = dma.hbm_to_vmem [thread:$0]  %s484, 512, %s486, [#allocation7], 128, 128, 8
        $region16: #{tpu_custom_call.1} parent=11 // pred_fallthru
          _
        // Predicated region
        $region17: #{tpu_custom_call.1} parent=11 // pred_check
          %p492 = pneg %p119
        $region18: #{tpu_custom_call.1} parent=11 // pred_check_branch
          %494 = sbr.rel (%p492) target = $region20
        $region19: #{tpu_custom_call.1} parent=11 // pred_region
          %s496 = ssub.s32 1024, 1024
          %497 = vsyncadd [#allocation10], %s496
          %s498 = sshll.u32 [#allocation11], 4
          %s499 = int_to_ptr.vmem [resolvable:$true] %s498
          %504 = dma.hbm_to_vmem [thread:$0]  %s2, 1024, %s499, [#allocation10], 64, 64, 4
        $region20: #{tpu_custom_call.1} parent=11 // pred_fallthru
          _
        // Predicated region
        $region21: #{tpu_custom_call.1} parent=11 // pred_check
          %p505 = pneg %p140
        $region22: #{tpu_custom_call.1} parent=11 // pred_check_branch
          %507 = sbr.rel (%p505) target = $region24
        $region23: #{tpu_custom_call.1} parent=11 // pred_region
          _
        $region24: #{tpu_custom_call.1} parent=11 // pred_fallthru
          _
        // Predicated region
        $region25: #{tpu_custom_call.1} parent=11 // pred_check
          %p508 = pneg %p161
        $region26: #{tpu_custom_call.1} parent=11 // pred_check_branch
          %510 = sbr.rel (%p508) target = $region28
        $region27: #{tpu_custom_call.1} parent=11 // pred_region
          %s512 = ssub.s32 1024, 1024
          %513 = vsyncadd [#allocation13], %s512
          %s514 = sshll.u32 [#allocation12], 4
          %s515 = int_to_ptr.vmem [resolvable:$true] %s514
          %520 = dma.hbm_to_vmem [thread:$0]  %s4, 1024, %s515, [#allocation13], 64, 64, 4
        $region28: #{tpu_custom_call.1} parent=11 // pred_fallthru
          _
        // Predicated region
        $region29: #{tpu_custom_call.1} parent=11 // pred_check
          %p521 = pneg %p182
        $region30: #{tpu_custom_call.1} parent=11 // pred_check_branch
          %523 = sbr.rel (%p521) target = $region32
        $region31: #{tpu_custom_call.1} parent=11 // pred_region
          _
        $region32: #{tpu_custom_call.1} parent=11 // pred_fallthru
          _
        // Predicated region
        $region33: #{tpu_custom_call.1} parent=11 // pred_check
          %p524 = pneg %p203
        $region34: #{tpu_custom_call.1} parent=11 // pred_check_branch
          %526 = sbr.rel (%p524) target = $region36
        $region35: #{tpu_custom_call.1} parent=11 // pred_region
          %s528 = ssub.s32 1024, 1024
          %529 = vsyncadd [#allocation13], %s528
          %s530 = sshll.u32 [#allocation14], 4
          %s531 = int_to_ptr.vmem [resolvable:$true] %s530
          %536 = dma.hbm_to_vmem [thread:$0]  %s6, 1024, %s531, [#allocation13], 64, 64, 4
        $region36: #{tpu_custom_call.1} parent=11 // pred_fallthru
          _
        // Predicated region
        $region37: #{tpu_custom_call.1} parent=11 // pred_check
          %p537 = pneg %p224
        $region38: #{tpu_custom_call.1} parent=11 // pred_check_branch
          %539 = sbr.rel (%p537) target = $region40
        $region39: #{tpu_custom_call.1} parent=11 // pred_region
          _
        $region40: #{tpu_custom_call.1} parent=11 // pred_fallthru
          _
        // Predicated region
        $region41: #{tpu_custom_call.1} parent=11 // pred_check
          %p540 = pneg %p245
        $region42: #{tpu_custom_call.1} parent=11 // pred_check_branch
          %542 = sbr.rel (%p540) target = $region44
        $region43: #{tpu_custom_call.1} parent=11 // pred_region
          %s544 = ssub.s32 1024, 1024
          %545 = vsyncadd [#allocation16], %s544
          %s546 = sshll.u32 [#allocation15], 4
          %s547 = int_to_ptr.vmem [resolvable:$true] %s546
          %552 = dma.hbm_to_vmem [thread:$0]  %s8, 1024, %s547, [#allocation16], 64, 64, 4
        $region44: #{tpu_custom_call.1} parent=11 // pred_fallthru
          _
        // Predicated region
        $region45: #{tpu_custom_call.1} parent=11 // pred_check
          %p553 = pneg %p266
        $region46: #{tpu_custom_call.1} parent=11 // pred_check_branch
          %555 = sbr.rel (%p553) target = $region48
        $region47: #{tpu_custom_call.1} parent=11 // pred_region
          _
        $region48: #{tpu_custom_call.1} parent=11 // pred_fallthru
          _
        // Predicated region
        $region49: #{tpu_custom_call.1} parent=11 // pred_check
          %p556 = pneg %p287
        $region50: #{tpu_custom_call.1} parent=11 // pred_check_branch
          %558 = sbr.rel (%p556) target = $region52
        $region51: #{tpu_custom_call.1} parent=11 // pred_region
          _
        $region52: #{tpu_custom_call.1} parent=11 // pred_fallthru
          _
        // Predicated region
        $region53: #{tpu_custom_call.1} parent=11 // pred_check
          %p559 = pneg %p308
        $region54: #{tpu_custom_call.1} parent=11 // pred_check_branch
          %561 = sbr.rel (%p559) target = $region56
        $region55: #{tpu_custom_call.1} parent=11 // pred_region
          _
        $region56: #{tpu_custom_call.1} parent=11 // pred_fallthru
          _
        // Predicated region
        $region57: #{tpu_custom_call.1} parent=11 // pred_check
          %p562 = pneg %p329
        $region58: #{tpu_custom_call.1} parent=11 // pred_check_branch
          %564 = sbr.rel (%p562) target = $region60
        $region59: #{tpu_custom_call.1} parent=11 // pred_region
          _
        $region60: #{tpu_custom_call.1} parent=11 // pred_fallthru
          _
        // Predicated region
        $region61: #{tpu_custom_call.1} parent=11 // pred_check
          %p565 = pneg %p350
        $region62: #{tpu_custom_call.1} parent=11 // pred_check_branch
          %567 = sbr.rel (%p565) target = $region64
        $region63: #{tpu_custom_call.1} parent=11 // pred_region
          _
        $region64: #{tpu_custom_call.1} parent=11 // pred_fallthru
          _
        // Predicated region
        $region65: #{tpu_custom_call.1} parent=11 // pred_check
          %p568 = pneg %p371
        $region66: #{tpu_custom_call.1} parent=11 // pred_check_branch
          %570 = sbr.rel (%p568) target = $region68
        $region67: #{tpu_custom_call.1} parent=11 // pred_region
          %s572 = ssub.s32 4096, 4096
          %573 = vsyncadd [#allocation16], %s572
          %s574 = sshll.u32 [#allocation17], 4
          %s575 = int_to_ptr.vmem [resolvable:$true] %s574
          %580 = dma.hbm_to_vmem [thread:$0]  %s14, 4096, %s575, [#allocation16], 256, 256, 16
        $region68: #{tpu_custom_call.1} parent=11 // pred_fallthru
          _
        // Predicated region
        $region69: #{tpu_custom_call.1} parent=11 // pred_check
          %p581 = pneg %p392
        $region70: #{tpu_custom_call.1} parent=11 // pred_check_branch
          %583 = sbr.rel (%p581) target = $region72
        $region71: #{tpu_custom_call.1} parent=11 // pred_region
          _
        $region72: #{tpu_custom_call.1} parent=11 // pred_fallthru
          _
        // Predicated region
        $region73: #{tpu_custom_call.1} parent=11 // pred_check
          %p584 = pneg %p413
        $region74: #{tpu_custom_call.1} parent=11 // pred_check_branch
          %586 = sbr.rel (%p584) target = $region76
        $region75: #{tpu_custom_call.1} parent=11 // pred_region
          %s588 = ssub.s32 4096, 4096
          %589 = vsyncadd [#allocation19], %s588
          %s590 = sshll.u32 [#allocation18], 4
          %s591 = int_to_ptr.vmem [resolvable:$true] %s590
          %596 = dma.hbm_to_vmem [thread:$0]  %s16, 4096, %s591, [#allocation19], 64, 64, 4
        $region76: #{tpu_custom_call.1} parent=11 // pred_fallthru
          _
        // Predicated region
        $region77: #{tpu_custom_call.1} parent=11 // pred_check
          %p597 = pneg %p434
        $region78: #{tpu_custom_call.1} parent=11 // pred_check_branch
          %599 = sbr.rel (%p597) target = $region80
        $region79: #{tpu_custom_call.1} parent=11 // pred_region
          _
        $region80: #{tpu_custom_call.1} parent=11 // pred_fallthru
          _
      $region12: #{tpu_custom_call.1} parent=5 // pred_fallthru
        _
      %p600 = scmp.lt.s32.totalorder %s32, 2
      // Predicated region
      $region81: #{tpu_custom_call.1} parent=5 // pred_check
        %p601 = pneg %p600
      $region82: #{tpu_custom_call.1} parent=5 // pred_check_branch
        %603 = sbr.rel (%p601) target = $region84
      $region83: #{tpu_custom_call.1} parent=5 // pred_region
        // Predicated region
        $region85: #{tpu_custom_call.1} parent=83 // pred_check
          %p604 = pneg %p92
        $region86: #{tpu_custom_call.1} parent=83 // pred_check_branch
          %606 = sbr.rel (%p604) target = $region88
        $region87: #{tpu_custom_call.1} parent=83 // pred_region
          #allocation22 [shape = 'u32[6]{0}', space=smem, size = 0x18, scoped, tag = 'DMA stride descriptor']
          %s607 = sand.u32 %s32, 1
          %s608 = scalar_lea.sflag [#allocation10], %s607
          %s609 = sand.u32 %s82, 1
          %s610 = smul.addr %s609, 32
          %s611 = scalar_lea.vmem [#allocation9], %s610
          %s612 = smul.u32 2, %s39
          %s613 = smul.u32 2, %s40
          %s615 = ssub.s32 512, 512
          %616 = vsyncadd %s608, %s615
          %s617 = smul.addr %s612, 4
          %s618 = sadd.s32 %s613, %s617
          %s619 = smul.addr %s618, 128
          %s620 = scalar_lea.hbm %s1, %s619
          %s622 = sshll.u32 1, 14
          %s623 = sxor.u32 4294967295, %s622
          %s625 = sld [smem:[#allocation0]]
          %s626 = sadd.s32 2, %s625
          %s628 = sshll.u32 7, 26
          %s629 = sxor.u32 4294967295, %s628
          %s630 = sand.u32 0, %s629
          %s631 = sshll.u32 %s626, 26
          %s632 = sor.u32 %s630, %s631
          %s633 = sshll.u32 %s611, 4
          %s634 = int_to_ptr.vmem [resolvable:$true] %s633
          %640 = sst [smem:[#allocation22]] 512
          %s641 = scalar_lea.smem [#allocation22], 1
          %642 = sst [smem:[%s641]] 256
          %s643 = scalar_lea.smem [#allocation22], 2
          %644 = sst [smem:[%s643]] 2
          %s645 = scalar_lea.smem [#allocation22], 3
          %646 = sst [smem:[%s645]] 128
          %s647 = scalar_lea.smem [#allocation22], 4
          %648 = sst [smem:[%s647]] 128
          %s649 = scalar_lea.smem [#allocation22], 5
          %650 = sst [smem:[%s649]] 8
          %652 = dma.general %s620, 512, %s634, %s608, 131072, [#allocation22], %s632, 0
        $region88: #{tpu_custom_call.1} parent=83 // pred_fallthru
          _
      $region84: #{tpu_custom_call.1} parent=5 // pred_fallthru
        _
      %p653 = scmp.le.s32.totalorder 1, %s32
      %p654 = scmp.lt.s32.totalorder %s32, 3
      %p655 = pnand %p653, %p654
      %p656 = pneg %p655
      // Predicated region
      $region89: #{tpu_custom_call.1} parent=5 // pred_check
        _
      $region90: #{tpu_custom_call.1} parent=5 // pred_check_branch
        %658 = sbr.rel (%p655) target = $region92
      $region91: #{tpu_custom_call.1} parent=5 // pred_region
        %s659 = ssub.s32 %s32, 1
        // Predicated region
        $region93: #{tpu_custom_call.1} parent=91 // pred_check
          %p660 = pneg %p70
        $region94: #{tpu_custom_call.1} parent=91 // pred_check_branch
          %662 = sbr.rel (%p660) target = $region96
        $region95: #{tpu_custom_call.1} parent=91 // pred_region
          %663 = dma.done [#allocation7], 512
        $region96: #{tpu_custom_call.1} parent=91 // pred_fallthru
          _
        %s664 = sand.u32 %s37, 1
        %s665 = scalar_lea.sflag [#allocation10], %s664
        %s666 = sand.u32 %s85, 1
        %s667 = smul.addr %s666, 32
        %s668 = scalar_lea.vmem [#allocation9], %s667
        // Predicated region
        $region97: #{tpu_custom_call.1} parent=91 // pred_check
          %p669 = pneg %p98
        $region98: #{tpu_custom_call.1} parent=91 // pred_check_branch
          %671 = sbr.rel (%p669) target = $region100
        $region99: #{tpu_custom_call.1} parent=91 // pred_region
          %672 = dma.done %s665, 512
        $region100: #{tpu_custom_call.1} parent=91 // pred_fallthru
          _
        // Predicated region
        $region101: #{tpu_custom_call.1} parent=91 // pred_check
          %p673 = pneg %p119
        $region102: #{tpu_custom_call.1} parent=91 // pred_check_branch
          %675 = sbr.rel (%p673) target = $region104
        $region103: #{tpu_custom_call.1} parent=91 // pred_region
          %676 = dma.done [#allocation10], 1024
        $region104: #{tpu_custom_call.1} parent=91 // pred_fallthru
          _
        // Predicated region
        $region105: #{tpu_custom_call.1} parent=91 // pred_check
          %p677 = pneg %p161
        $region106: #{tpu_custom_call.1} parent=91 // pred_check_branch
          %679 = sbr.rel (%p677) target = $region108
        $region107: #{tpu_custom_call.1} parent=91 // pred_region
          %680 = dma.done [#allocation13], 1024
        $region108: #{tpu_custom_call.1} parent=91 // pred_fallthru
          _
        // Predicated region
        $region109: #{tpu_custom_call.1} parent=91 // pred_check
          %p681 = pneg %p203
        $region110: #{tpu_custom_call.1} parent=91 // pred_check_branch
          %683 = sbr.rel (%p681) target = $region112
        $region111: #{tpu_custom_call.1} parent=91 // pred_region
          %684 = dma.done [#allocation13], 1024
        $region112: #{tpu_custom_call.1} parent=91 // pred_fallthru
          _
        // Predicated region
        $region113: #{tpu_custom_call.1} parent=91 // pred_check
          %p685 = pneg %p245
        $region114: #{tpu_custom_call.1} parent=91 // pred_check_branch
          %687 = sbr.rel (%p685) target = $region116
        $region115: #{tpu_custom_call.1} parent=91 // pred_region
          %688 = dma.done [#allocation16], 1024
        $region116: #{tpu_custom_call.1} parent=91 // pred_fallthru
          _
        // Predicated region
        $region117: #{tpu_custom_call.1} parent=91 // pred_check
          %p689 = pneg %p371
        $region118: #{tpu_custom_call.1} parent=91 // pred_check_branch
          %691 = sbr.rel (%p689) target = $region120
        $region119: #{tpu_custom_call.1} parent=91 // pred_region
          %692 = dma.done [#allocation16], 4096
        $region120: #{tpu_custom_call.1} parent=91 // pred_fallthru
          _
        // Predicated region
        $region121: #{tpu_custom_call.1} parent=91 // pred_check
          %p693 = pneg %p413
        $region122: #{tpu_custom_call.1} parent=91 // pred_check_branch
          %695 = sbr.rel (%p693) target = $region124
        $region123: #{tpu_custom_call.1} parent=91 // pred_region
          %696 = dma.done [#allocation19], 4096
        $region124: #{tpu_custom_call.1} parent=91 // pred_fallthru
          _
        %p697 = pneg %p70
        %p698 = pneg %p67
        %s699 = sand.u32 %s37, 1
        %s700 = scalar_lea.sflag [#allocation10], %s699
        %s701 = sand.u32 %s85, 1
        %s702 = smul.addr %s701, 32
        %s703 = scalar_lea.vmem [#allocation9], %s702
        %p704 = pneg %p98
        %p705 = pneg %p95
        %p706 = pneg %p119
        %p707 = pneg %p116
        %p708 = pneg %p140
        %p709 = pneg %p137
        %p710 = pneg %p161
        %p711 = pneg %p158
        %p712 = pneg %p182
        %p713 = pneg %p179
        %p714 = pneg %p203
        %p715 = pneg %p200
        %p716 = pneg %p224
        %p717 = pneg %p221
        %p718 = pneg %p245
        %p719 = pneg %p242
        %p720 = pneg %p266
        %p721 = pneg %p263
        %p722 = pneg %p287
        %p723 = pneg %p284
        %p724 = pneg %p308
        %p725 = pneg %p305
        %p726 = pneg %p329
        %p727 = pneg %p326
        %p728 = pneg %p350
        %p729 = pneg %p347
        %p730 = pneg %p371
        %p731 = pneg %p368
        %p732 = pneg %p392
        %p733 = pneg %p389
        %p734 = pneg %p413
        %p735 = pneg %p410
        %p736 = pneg %p434
        %p737 = pneg %p431
        %p738 = pneg %p460
        %p739 = pneg %p457
        %s740 = smul.u32 2, %s41
        %s741 = smul.u32 2, %s41
        %s742 = smul.u32 2, %s42
        %s743 = smul.u32 2, %s41
        %p745 = scmp.eq.s32.totalorder %s42, 0
        // Predicated region
        $region125: #{tpu_custom_call.1} parent=91 // pred_check
          %p746 = pneg %p745
        $region126: #{tpu_custom_call.1} parent=91 // pred_check_branch
          %748 = sbr.rel (%p746) target = $region128
        $region127: #{tpu_custom_call.1} parent=91 // pred_region
          %v749 = vld [vmem:[#allocation6] sm:$0xff]
          %v750 = vld [vmem:[#allocation6 + $0x8] sm:$0xff]
          %v751 = vld [vmem:[#allocation6 + $0x10] sm:$0xff]
          %v752 = vld [vmem:[#allocation6 + $0x18] sm:$0xff]
          %v753 = vld [vmem:[%s10] sm:$0x1]
          %v754 = vld [vmem:[%s11] sm:$0x1]
          %755 = vadd.xlane.f32.xlu0 %v749
          %v756 = vpop.xlane.xlu0 %755
          %757 = vadd.xlane.f32.xlu0 %v750
          %v758 = vpop.xlane.xlu0 %757
          %759 = vadd.xlane.f32.xlu0 %v751
          %v760 = vpop.xlane.xlu0 %759
          %761 = vadd.xlane.f32.xlu0 %v752
          %v762 = vpop.xlane.xlu0 %761
          %v763 = vrcp.pop 128.0
          %v764 = vmul.f32 %v756, %v763
          %v765 = vmul.f32 %v758, %v763
          %v766 = vmul.f32 %v760, %v763
          %v767 = vmul.f32 %v762, %v763
          %v768 = vsub.f32 %v749, %v764
          %v769 = vsub.f32 %v750, %v765
          %v770 = vsub.f32 %v751, %v766
          %v771 = vsub.f32 %v752, %v767
          %v772 = vmul.f32 %v768, %v768
          %v773 = vmul.f32 %v769, %v769
          %v774 = vmul.f32 %v770, %v770
          %v775 = vmul.f32 %v771, %v771
          %776 = vadd.xlane.f32.xlu0 %v772
          %v777 = vpop.xlane.xlu0 %776
          %778 = vadd.xlane.f32.xlu0 %v773
          %v779 = vpop.xlane.xlu0 %778
          %780 = vadd.xlane.f32.xlu0 %v774
          %v781 = vpop.xlane.xlu0 %780
          %782 = vadd.xlane.f32.xlu0 %v775
          %v783 = vpop.xlane.xlu0 %782
          %v784 = vmul.f32 %v777, %v763
          %v785 = vmul.f32 %v779, %v763
          %v786 = vmul.f32 %v781, %v763
          %v787 = vmul.f32 %v783, %v763
          %v788 = vadd.f32 %v784, 1e-05
          %v789 = vadd.f32 %v785, 1e-05
          %v790 = vadd.f32 %v786, 1e-05
          %v791 = vadd.f32 %v787, 1e-05
          %v792 = vrsqrt.pop %v788
          %v793 = vrsqrt.pop %v789
          %v794 = vrsqrt.pop %v790
          %v795 = vrsqrt.pop %v791
          %v796 = vmul.f32 %v768, %v792
          %v797 = vmul.f32 %v769, %v793
          %v798 = vmul.f32 %v770, %v794
          %v799 = vmul.f32 %v771, %v795
          %v801 = vlaneseq
          %v802 = vshrl.u32 %v801, 7
          %v803 = vsub.s32 0, %v802
          %v804 = vrot.slane %v753, %v803
          %v806 = vmul.f32 %v796, %v804
          %v807 = vmul.f32 %v797, %v804
          %v808 = vmul.f32 %v798, %v804
          %v809 = vmul.f32 %v799, %v804
          %v811 = vlaneseq
          %v812 = vshrl.u32 %v811, 7
          %v813 = vsub.s32 0, %v812
          %v814 = vrot.slane %v754, %v813
          %v816 = vadd.f32 %v806, %v814
          %v817 = vadd.f32 %v807, %v814
          %v818 = vadd.f32 %v808, %v814
          %v819 = vadd.f32 %v809, %v814
          %v820 = vpack.c.bf16 %v817, %v816
          %v821 = vpack.c.bf16 %v819, %v818
          %v822 = vld [vmem:[#allocation11] sm:$0xf]
          %v823 = vld [vmem:[#allocation11 + $0x4] sm:$0xf]
          %v824 = vld [vmem:[#allocation11 + $0x8] sm:$0xf]
          %v825 = vld [vmem:[#allocation11 + $0xc] sm:$0xf]
          %v826 = vld [vmem:[#allocation11 + $0x10] sm:$0xf]
          %v827 = vld [vmem:[#allocation11 + $0x14] sm:$0xf]
          %v828 = vld [vmem:[#allocation11 + $0x18] sm:$0xf]
          %v829 = vld [vmem:[#allocation11 + $0x1c] sm:$0xf]
          %v830 = vld [vmem:[#allocation11 + $0x20] sm:$0xf]
          %v831 = vld [vmem:[#allocation11 + $0x24] sm:$0xf]
          %v832 = vld [vmem:[#allocation11 + $0x28] sm:$0xf]
          %v833 = vld [vmem:[#allocation11 + $0x2c] sm:$0xf]
          %v834 = vld [vmem:[#allocation11 + $0x30] sm:$0xf]
          %v835 = vld [vmem:[#allocation11 + $0x34] sm:$0xf]
          %v836 = vld [vmem:[#allocation11 + $0x38] sm:$0xf]
          %v837 = vld [vmem:[#allocation11 + $0x3c] sm:$0xf]
          %v838 = vld [vmem:[%s3] sm:$0x1]
          %v840 = vlaneseq
          %v841 = vshrl.u32 %v840, 7
          %v842 = vsub.s32 0, %v841
          %v843 = vrot.slane %v838, %v842
          %v861 = vunpack.c.l.b16 %v822
          %v862 = vunpack.c.l.b16 %v823
          %v863 = vunpack.c.l.b16 %v824
          %v864 = vunpack.c.l.b16 %v825
          %v865 = vunpack.c.l.b16 %v826
          %v866 = vunpack.c.l.b16 %v827
          %v867 = vunpack.c.l.b16 %v828
          %v868 = vunpack.c.l.b16 %v829
          %v869 = vunpack.c.l.b16 %v830
          %v870 = vunpack.c.l.b16 %v831
          %v871 = vunpack.c.l.b16 %v832
          %v872 = vunpack.c.l.b16 %v833
          %v873 = vunpack.c.l.b16 %v834
          %v874 = vunpack.c.l.b16 %v835
          %v875 = vunpack.c.l.b16 %v836
          %v876 = vunpack.c.l.b16 %v837
          %v877 = vpack.c.b16 %v862, %v861
          %v878 = vpack.c.b16 %v864, %v863
          %v879 = vpack.c.b16 %v866, %v865
          %v880 = vpack.c.b16 %v868, %v867
          %v881 = vpack.c.b16 %v870, %v869
          %v882 = vpack.c.b16 %v872, %v871
          %v883 = vpack.c.b16 %v874, %v873
          %v884 = vpack.c.b16 %v876, %v875
          %893 = vmatprep.subr.bf16.mxu0 0
          %894 = vmatpush1.bf16.msra.mxu0 %v884
          %895 = vmatprep.subr.bf16.mxu0 0
          %896 = vmatpush1.bf16.msra.mxu0 %v883
          %897 = vmatprep.subr.bf16.mxu0 0
          %898 = vmatpush1.bf16.msra.mxu0 %v882
          %899 = vmatprep.subr.bf16.mxu0 0
          %900 = vmatpush1.bf16.msra.mxu0 %v881
          %901 = vmatprep.subr.bf16.mxu0 0
          %902 = vmatpush1.bf16.msra.mxu0 %v880
          %903 = vmatprep.subr.bf16.mxu0 0
          %904 = vmatpush1.bf16.msra.mxu0 %v879
          %905 = vmatprep.subr.bf16.mxu0 0
          %906 = vmatpush1.bf16.msra.mxu0 %v878
          %907 = vmatprep.subr.bf16.mxu0 0
          %908 = vmatpush1.bf16.msra.mxu0 %v877
          %909 = vmatprep.subr.bf16.mxu0 0
          %910 = vmatpush2.bf16.msra.mxu0 0
          %911 = vmatprep.subr.bf16.mxu0 0
          %912 = vmatpush2.bf16.msra.mxu0 0
          %913 = vmatprep.subr.bf16.mxu0 0
          %914 = vmatpush2.bf16.msra.mxu0 0
          %915 = vmatprep.subr.bf16.mxu0 0
          %916 = vmatpush2.bf16.msra.mxu0 0
          %917 = vmatprep.subr.bf16.mxu0 0
          %918 = vmatpush2.bf16.msra.mxu0 0
          %919 = vmatprep.subr.bf16.mxu0 0
          %920 = vmatpush2.bf16.msra.mxu0 0
          %921 = vmatprep.subr.bf16.mxu0 0
          %922 = vmatpush2.bf16.msra.mxu0 0
          %923 = vmatprep.subr.bf16.mxu0 0
          %924 = vmatpush2.bf16.msra.mxu0 0
          %925 = vmatprep.mubr.bf16.mxu0 0
          %926 = vmatmul.mubr.bf16.gmra.mxu0 %v820
          %v927 = vpop.f32.mrf.mxu0
          %v928 = vadd.f32 %v843, %v927
          %v929 = vpop.f32.mrf.mxu0
          %v930 = vpop.f32.mrf.mxu0
          %v931 = vadd.f32 %v843, %v930
          %v932 = vpop.f32.mrf.mxu0
          %933 = vmatprep.mubr.bf16.mxu0 0
          %934 = vmatmul.mubr.bf16.gmra.mxu0 %v821
          %v935 = vpop.f32.mrf.mxu0
          %v936 = vadd.f32 %v843, %v935
          %v937 = vpop.f32.mrf.mxu0
          %v938 = vpop.f32.mrf.mxu0
          %v939 = vadd.f32 %v843, %v938
          %v940 = vpop.f32.mrf.mxu0
          %941 = vdwg.mxu0
          %v942 = vmul.f32 %v928, 0.17677669
          %v943 = vmul.f32 %v931, 0.17677669
          %v944 = vmul.f32 %v936, 0.17677669
          %v945 = vmul.f32 %v939, 0.17677669
          %v946 = vpack.c.bf16 %v943, %v942
          %v947 = vpack.c.bf16 %v945, %v944
          %v950 = vunpack.c.l.b16 %v946
          %v951 = vunpack.c.h.b16 %v946
          %v952 = vunpack.c.l.b16 %v947
          %v953 = vunpack.c.h.b16 %v947
          %v954 = vpack.c.b16 %v950, %v950
          %v955 = vpack.c.b16 %v951, %v951
          %v956 = vpack.c.b16 %v952, %v952
          %v957 = vpack.c.b16 %v953, %v953
          %vm962 = vcmask 257024
          %963 = vst.msk [vmem:[#allocation2] sm:$0xf] %vm962, %v954
          %964 = vst.msk [vmem:[#allocation2 + $0x4] sm:$0xf] %vm962, %v955
          %965 = vst.msk [vmem:[#allocation2 + $0x8] sm:$0xf] %vm962, %v956
          %966 = vst.msk [vmem:[#allocation2 + $0xc] sm:$0xf] %vm962, %v957
          %967 = vrot.lane.b32.xlu0 %v954, 96
          %v968 = vpop.permute.xlu0 %967
          %969 = vrot.lane.b32.xlu0 %v955, 96
          %v970 = vpop.permute.xlu0 %969
          %971 = vrot.lane.b32.xlu0 %v956, 96
          %v972 = vpop.permute.xlu0 %971
          %973 = vrot.lane.b32.xlu0 %v957, 96
          %v974 = vpop.permute.xlu0 %973
          %s979 = scalar_lea.vmem [#allocation2], 16
          %980 = vst.msk [vmem:[%s979] sm:$0xf] %vm962, %v968
          %981 = vst.msk [vmem:[%s979 + $0x4] sm:$0xf] %vm962, %v970
          %982 = vst.msk [vmem:[%s979 + $0x8] sm:$0xf] %vm962, %v972
          %983 = vst.msk [vmem:[%s979 + $0xc] sm:$0xf] %vm962, %v974
          %984 = vrot.lane.b32.xlu0 %v954, 64
          %v985 = vpop.permute.xlu0 %984
          %986 = vrot.lane.b32.xlu0 %v955, 64
          %v987 = vpop.permute.xlu0 %986
          %988 = vrot.lane.b32.xlu0 %v956, 64
          %v989 = vpop.permute.xlu0 %988
          %990 = vrot.lane.b32.xlu0 %v957, 64
          %v991 = vpop.permute.xlu0 %990
          %s996 = scalar_lea.vmem [#allocation2], 32
          %997 = vst.msk [vmem:[%s996] sm:$0xf] %vm962, %v985
          %998 = vst.msk [vmem:[%s996 + $0x4] sm:$0xf] %vm962, %v987
          %999 = vst.msk [vmem:[%s996 + $0x8] sm:$0xf] %vm962, %v989
          %1000 = vst.msk [vmem:[%s996 + $0xc] sm:$0xf] %vm962, %v991
          %1001 = vrot.lane.b32.xlu0 %v954, 32
          %v1002 = vpop.permute.xlu0 %1001
          %1003 = vrot.lane.b32.xlu0 %v955, 32
          %v1004 = vpop.permute.xlu0 %1003
          %1005 = vrot.lane.b32.xlu0 %v956, 32
          %v1006 = vpop.permute.xlu0 %1005
          %1007 = vrot.lane.b32.xlu0 %v957, 32
          %v1008 = vpop.permute.xlu0 %1007
          %s1013 = scalar_lea.vmem [#allocation2], 48
          %1014 = vst.msk [vmem:[%s1013] sm:$0xf] %vm962, %v1002
          %1015 = vst.msk [vmem:[%s1013 + $0x4] sm:$0xf] %vm962, %v1004
          %1016 = vst.msk [vmem:[%s1013 + $0x8] sm:$0xf] %vm962, %v1006
          %1017 = vst.msk [vmem:[%s1013 + $0xc] sm:$0xf] %vm962, %v1008
          %vm1018 = vcmask 7168
          %1019 = vst.msk [vmem:[#allocation3] sm:$0xff] %vm1018, -inf
          %1020 = vst.msk [vmem:[#allocation3 + $0x8] sm:$0xff] %vm1018, -inf
          %1021 = vst.msk [vmem:[#allocation3 + $0x10] sm:$0xff] %vm1018, -inf
          %1022 = vst.msk [vmem:[#allocation3 + $0x18] sm:$0xff] %vm1018, -inf
          %1023 = vst.msk [vmem:[#allocation3 + $0x20] sm:$0xff] %vm1018, -inf
          %1024 = vst.msk [vmem:[#allocation3 + $0x28] sm:$0xff] %vm1018, -inf
          %1025 = vst.msk [vmem:[#allocation3 + $0x30] sm:$0xff] %vm1018, -inf
          %1026 = vst.msk [vmem:[#allocation3 + $0x38] sm:$0xff] %vm1018, -inf
          %1027 = vst.msk [vmem:[#allocation3 + $0x40] sm:$0xff] %vm1018, -inf
          %1028 = vst.msk [vmem:[#allocation3 + $0x48] sm:$0xff] %vm1018, -inf
          %1029 = vst.msk [vmem:[#allocation3 + $0x50] sm:$0xff] %vm1018, -inf
          %1030 = vst.msk [vmem:[#allocation3 + $0x58] sm:$0xff] %vm1018, -inf
          %1031 = vst.msk [vmem:[#allocation3 + $0x60] sm:$0xff] %vm1018, -inf
          %1032 = vst.msk [vmem:[#allocation3 + $0x68] sm:$0xff] %vm1018, -inf
          %1033 = vst.msk [vmem:[#allocation3 + $0x70] sm:$0xff] %vm1018, -inf
          %1034 = vst.msk [vmem:[#allocation3 + $0x78] sm:$0xff] %vm1018, -inf
          %1035 = vst.msk [vmem:[#allocation4] sm:$0xff] %vm1018, 0.0
          %1036 = vst.msk [vmem:[#allocation4 + $0x8] sm:$0xff] %vm1018, 0.0
          %1037 = vst.msk [vmem:[#allocation4 + $0x10] sm:$0xff] %vm1018, 0.0
          %1038 = vst.msk [vmem:[#allocation4 + $0x18] sm:$0xff] %vm1018, 0.0
          %1039 = vst.msk [vmem:[#allocation4 + $0x20] sm:$0xff] %vm1018, 0.0
          %1040 = vst.msk [vmem:[#allocation4 + $0x28] sm:$0xff] %vm1018, 0.0
          %1041 = vst.msk [vmem:[#allocation4 + $0x30] sm:$0xff] %vm1018, 0.0
          %1042 = vst.msk [vmem:[#allocation4 + $0x38] sm:$0xff] %vm1018, 0.0
          %1043 = vst.msk [vmem:[#allocation4 + $0x40] sm:$0xff] %vm1018, 0.0
          %1044 = vst.msk [vmem:[#allocation4 + $0x48] sm:$0xff] %vm1018, 0.0
          %1045 = vst.msk [vmem:[#allocation4 + $0x50] sm:$0xff] %vm1018, 0.0
          %1046 = vst.msk [vmem:[#allocation4 + $0x58] sm:$0xff] %vm1018, 0.0
          %1047 = vst.msk [vmem:[#allocation4 + $0x60] sm:$0xff] %vm1018, 0.0
          %1048 = vst.msk [vmem:[#allocation4 + $0x68] sm:$0xff] %vm1018, 0.0
          %1049 = vst.msk [vmem:[#allocation4 + $0x70] sm:$0xff] %vm1018, 0.0
          %1050 = vst.msk [vmem:[#allocation4 + $0x78] sm:$0xff] %vm1018, 0.0
          %vm1051 = vcmask 261120
          %1052 = vst.msk [vmem:[#allocation5] sm:$0xff] %vm1051, 0.0
          %1053 = vst.msk [vmem:[#allocation5 + $0x8] sm:$0xff] %vm1051, 0.0
          %1054 = vst.msk [vmem:[#allocation5 + $0x10] sm:$0xff] %vm1051, 0.0
          %1055 = vst.msk [vmem:[#allocation5 + $0x18] sm:$0xff] %vm1051, 0.0
          %1056 = vst.msk [vmem:[#allocation5 + $0x20] sm:$0xff] %vm1051, 0.0
          %1057 = vst.msk [vmem:[#allocation5 + $0x28] sm:$0xff] %vm1051, 0.0
          %1058 = vst.msk [vmem:[#allocation5 + $0x30] sm:$0xff] %vm1051, 0.0
          %1059 = vst.msk [vmem:[#allocation5 + $0x38] sm:$0xff] %vm1051, 0.0
          %1060 = vst.msk [vmem:[#allocation5 + $0x40] sm:$0xff] %vm1051, 0.0
          %1061 = vst.msk [vmem:[#allocation5 + $0x48] sm:$0xff] %vm1051, 0.0
          %1062 = vst.msk [vmem:[#allocation5 + $0x50] sm:$0xff] %vm1051, 0.0
          %1063 = vst.msk [vmem:[#allocation5 + $0x58] sm:$0xff] %vm1051, 0.0
          %1064 = vst.msk [vmem:[#allocation5 + $0x60] sm:$0xff] %vm1051, 0.0
          %1065 = vst.msk [vmem:[#allocation5 + $0x68] sm:$0xff] %vm1051, 0.0
          %1066 = vst.msk [vmem:[#allocation5 + $0x70] sm:$0xff] %vm1051, 0.0
          %1067 = vst.msk [vmem:[#allocation5 + $0x78] sm:$0xff] %vm1051, 0.0
        $region128: #{tpu_custom_call.1} parent=91 // pred_fallthru
          _
        %v1068 = vld [vmem:[%s668] sm:$0xff]
        %v1069 = vld [vmem:[%s668 + $0x8] sm:$0xff]
        %v1070 = vld [vmem:[%s668 + $0x10] sm:$0xff]
        %v1071 = vld [vmem:[%s668 + $0x18] sm:$0xff]
        %v1072 = vpack.c.bf16 %v1069, %v1068
        %v1073 = vpack.c.bf16 %v1071, %v1070
        %v1074 = vld [vmem:[#allocation12] sm:$0xf]
        %v1075 = vld [vmem:[#allocation12 + $0x4] sm:$0xf]
        %v1076 = vld [vmem:[#allocation12 + $0x8] sm:$0xf]
        %v1077 = vld [vmem:[#allocation12 + $0xc] sm:$0xf]
        %v1078 = vld [vmem:[#allocation12 + $0x10] sm:$0xf]
        %v1079 = vld [vmem:[#allocation12 + $0x14] sm:$0xf]
        %v1080 = vld [vmem:[#allocation12 + $0x18] sm:$0xf]
        %v1081 = vld [vmem:[#allocation12 + $0x1c] sm:$0xf]
        %v1082 = vld [vmem:[#allocation12 + $0x20] sm:$0xf]
        %v1083 = vld [vmem:[#allocation12 + $0x24] sm:$0xf]
        %v1084 = vld [vmem:[#allocation12 + $0x28] sm:$0xf]
        %v1085 = vld [vmem:[#allocation12 + $0x2c] sm:$0xf]
        %v1086 = vld [vmem:[#allocation12 + $0x30] sm:$0xf]
        %v1087 = vld [vmem:[#allocation12 + $0x34] sm:$0xf]
        %v1088 = vld [vmem:[#allocation12 + $0x38] sm:$0xf]
        %v1089 = vld [vmem:[#allocation12 + $0x3c] sm:$0xf]
        %v1090 = vld [vmem:[%s5] sm:$0x1]
        %v1092 = vlaneseq
        %v1093 = vshrl.u32 %v1092, 7
        %v1094 = vsub.s32 0, %v1093
        %v1095 = vrot.slane %v1090, %v1094
        %v1113 = vunpack.c.l.b16 %v1074
        %v1114 = vunpack.c.l.b16 %v1075
        %v1115 = vunpack.c.l.b16 %v1076
        %v1116 = vunpack.c.l.b16 %v1077
        %v1117 = vunpack.c.l.b16 %v1078
        %v1118 = vunpack.c.l.b16 %v1079
        %v1119 = vunpack.c.l.b16 %v1080
        %v1120 = vunpack.c.l.b16 %v1081
        %v1121 = vunpack.c.l.b16 %v1082
        %v1122 = vunpack.c.l.b16 %v1083
        %v1123 = vunpack.c.l.b16 %v1084
        %v1124 = vunpack.c.l.b16 %v1085
        %v1125 = vunpack.c.l.b16 %v1086
        %v1126 = vunpack.c.l.b16 %v1087
        %v1127 = vunpack.c.l.b16 %v1088
        %v1128 = vunpack.c.l.b16 %v1089
        %v1129 = vpack.c.b16 %v1114, %v1113
        %v1130 = vpack.c.b16 %v1116, %v1115
        %v1131 = vpack.c.b16 %v1118, %v1117
        %v1132 = vpack.c.b16 %v1120, %v1119
        %v1133 = vpack.c.b16 %v1122, %v1121
        %v1134 = vpack.c.b16 %v1124, %v1123
        %v1135 = vpack.c.b16 %v1126, %v1125
        %v1136 = vpack.c.b16 %v1128, %v1127
        %1145 = vmatprep.subr.bf16.mxu0 0
        %1146 = vmatpush1.bf16.msra.mxu0 %v1136
        %1147 = vmatprep.subr.bf16.mxu0 0
        %1148 = vmatpush1.bf16.msra.mxu0 %v1135
        %1149 = vmatprep.subr.bf16.mxu0 0
        %1150 = vmatpush1.bf16.msra.mxu0 %v1134
        %1151 = vmatprep.subr.bf16.mxu0 0
        %1152 = vmatpush1.bf16.msra.mxu0 %v1133
        %1153 = vmatprep.subr.bf16.mxu0 0
        %1154 = vmatpush1.bf16.msra.mxu0 %v1132
        %1155 = vmatprep.subr.bf16.mxu0 0
        %1156 = vmatpush1.bf16.msra.mxu0 %v1131
        %1157 = vmatprep.subr.bf16.mxu0 0
        %1158 = vmatpush1.bf16.msra.mxu0 %v1130
        %1159 = vmatprep.subr.bf16.mxu0 0
        %1160 = vmatpush1.bf16.msra.mxu0 %v1129
        %1161 = vmatprep.subr.bf16.mxu0 0
        %1162 = vmatpush2.bf16.msra.mxu0 0
        %1163 = vmatprep.subr.bf16.mxu0 0
        %1164 = vmatpush2.bf16.msra.mxu0 0
        %1165 = vmatprep.subr.bf16.mxu0 0
        %1166 = vmatpush2.bf16.msra.mxu0 0
        %1167 = vmatprep.subr.bf16.mxu0 0
        %1168 = vmatpush2.bf16.msra.mxu0 0
        %1169 = vmatprep.subr.bf16.mxu0 0
        %1170 = vmatpush2.bf16.msra.mxu0 0
        %1171 = vmatprep.subr.bf16.mxu0 0
        %1172 = vmatpush2.bf16.msra.mxu0 0
        %1173 = vmatprep.subr.bf16.mxu0 0
        %1174 = vmatpush2.bf16.msra.mxu0 0
        %1175 = vmatprep.subr.bf16.mxu0 0
        %1176 = vmatpush2.bf16.msra.mxu0 0
        %1177 = vmatprep.mubr.bf16.mxu0 0
        %1178 = vmatmul.mubr.bf16.gmra.mxu0 %v1072
        %v1179 = vpop.f32.mrf.mxu0
        %v1180 = vadd.f32 %v1095, %v1179
        %v1181 = vpop.f32.mrf.mxu0
        %v1182 = vpop.f32.mrf.mxu0
        %v1183 = vadd.f32 %v1095, %v1182
        %v1184 = vpop.f32.mrf.mxu0
        %1185 = vmatprep.mubr.bf16.mxu0 0
        %1186 = vmatmul.mubr.bf16.gmra.mxu0 %v1073
        %v1187 = vpop.f32.mrf.mxu0
        %v1188 = vadd.f32 %v1095, %v1187
        %v1189 = vpop.f32.mrf.mxu0
        %v1190 = vpop.f32.mrf.mxu0
        %v1191 = vadd.f32 %v1095, %v1190
        %v1192 = vpop.f32.mrf.mxu0
        %1193 = vdwg.mxu0
        %v1194 = vld [vmem:[#allocation14] sm:$0xf]
        %v1195 = vld [vmem:[#allocation14 + $0x4] sm:$0xf]
        %v1196 = vld [vmem:[#allocation14 + $0x8] sm:$0xf]
        %v1197 = vld [vmem:[#allocation14 + $0xc] sm:$0xf]
        %v1198 = vld [vmem:[#allocation14 + $0x10] sm:$0xf]
        %v1199 = vld [vmem:[#allocation14 + $0x14] sm:$0xf]
        %v1200 = vld [vmem:[#allocation14 + $0x18] sm:$0xf]
        %v1201 = vld [vmem:[#allocation14 + $0x1c] sm:$0xf]
        %v1202 = vld [vmem:[#allocation14 + $0x20] sm:$0xf]
        %v1203 = vld [vmem:[#allocation14 + $0x24] sm:$0xf]
        %v1204 = vld [vmem:[#allocation14 + $0x28] sm:$0xf]
        %v1205 = vld [vmem:[#allocation14 + $0x2c] sm:$0xf]
        %v1206 = vld [vmem:[#allocation14 + $0x30] sm:$0xf]
        %v1207 = vld [vmem:[#allocation14 + $0x34] sm:$0xf]
        %v1208 = vld [vmem:[#allocation14 + $0x38] sm:$0xf]
        %v1209 = vld [vmem:[#allocation14 + $0x3c] sm:$0xf]
        %v1210 = vld [vmem:[%s7] sm:$0x1]
        %v1212 = vlaneseq
        %v1213 = vshrl.u32 %v1212, 7
        %v1214 = vsub.s32 0, %v1213
        %v1215 = vrot.slane %v1210, %v1214
        %v1233 = vunpack.c.l.b16 %v1194
        %v1234 = vunpack.c.l.b16 %v1195
        %v1235 = vunpack.c.l.b16 %v1196
        %v1236 = vunpack.c.l.b16 %v1197
        %v1237 = vunpack.c.l.b16 %v1198
        %v1238 = vunpack.c.l.b16 %v1199
        %v1239 = vunpack.c.l.b16 %v1200
        %v1240 = vunpack.c.l.b16 %v1201
        %v1241 = vunpack.c.l.b16 %v1202
        %v1242 = vunpack.c.l.b16 %v1203
        %v1243 = vunpack.c.l.b16 %v1204
        %v1244 = vunpack.c.l.b16 %v1205
        %v1245 = vunpack.c.l.b16 %v1206
        %v1246 = vunpack.c.l.b16 %v1207
        %v1247 = vunpack.c.l.b16 %v1208
        %v1248 = vunpack.c.l.b16 %v1209
        %v1249 = vpack.c.b16 %v1234, %v1233
        %v1250 = vpack.c.b16 %v1236, %v1235
        %v1251 = vpack.c.b16 %v1238, %v1237
        %v1252 = vpack.c.b16 %v1240, %v1239
        %v1253 = vpack.c.b16 %v1242, %v1241
        %v1254 = vpack.c.b16 %v1244, %v1243
        %v1255 = vpack.c.b16 %v1246, %v1245
        %v1256 = vpack.c.b16 %v1248, %v1247
        %1265 = vmatprep.subr.bf16.mxu0 0
        %1266 = vmatpush1.bf16.msra.mxu0 %v1256
        %1267 = vmatprep.subr.bf16.mxu0 0
        %1268 = vmatpush1.bf16.msra.mxu0 %v1255
        %1269 = vmatprep.subr.bf16.mxu0 0
        %1270 = vmatpush1.bf16.msra.mxu0 %v1254
        %1271 = vmatprep.subr.bf16.mxu0 0
        %1272 = vmatpush1.bf16.msra.mxu0 %v1253
        %1273 = vmatprep.subr.bf16.mxu0 0
        %1274 = vmatpush1.bf16.msra.mxu0 %v1252
        %1275 = vmatprep.subr.bf16.mxu0 0
        %1276 = vmatpush1.bf16.msra.mxu0 %v1251
        %1277 = vmatprep.subr.bf16.mxu0 0
        %1278 = vmatpush1.bf16.msra.mxu0 %v1250
        %1279 = vmatprep.subr.bf16.mxu0 0
        %1280 = vmatpush1.bf16.msra.mxu0 %v1249
        %1281 = vmatprep.subr.bf16.mxu0 0
        %1282 = vmatpush2.bf16.msra.mxu0 0
        %1283 = vmatprep.subr.bf16.mxu0 0
        %1284 = vmatpush2.bf16.msra.mxu0 0
        %1285 = vmatprep.subr.bf16.mxu0 0
        %1286 = vmatpush2.bf16.msra.mxu0 0
        %1287 = vmatprep.subr.bf16.mxu0 0
        %1288 = vmatpush2.bf16.msra.mxu0 0
        %1289 = vmatprep.subr.bf16.mxu0 0
        %1290 = vmatpush2.bf16.msra.mxu0 0
        %1291 = vmatprep.subr.bf16.mxu0 0
        %1292 = vmatpush2.bf16.msra.mxu0 0
        %1293 = vmatprep.subr.bf16.mxu0 0
        %1294 = vmatpush2.bf16.msra.mxu0 0
        %1295 = vmatprep.subr.bf16.mxu0 0
        %1296 = vmatpush2.bf16.msra.mxu0 0
        %1297 = vmatprep.mubr.bf16.mxu0 0
        %1298 = vmatmul.mubr.bf16.gmra.mxu0 %v1072
        %v1299 = vpop.f32.mrf.mxu0
        %v1300 = vadd.f32 %v1215, %v1299
        %v1301 = vpop.f32.mrf.mxu0
        %v1302 = vpop.f32.mrf.mxu0
        %v1303 = vadd.f32 %v1215, %v1302
        %v1304 = vpop.f32.mrf.mxu0
        %1305 = vmatprep.mubr.bf16.mxu0 0
        %1306 = vmatmul.mubr.bf16.gmra.mxu0 %v1073
        %v1307 = vpop.f32.mrf.mxu0
        %v1308 = vadd.f32 %v1215, %v1307
        %v1309 = vpop.f32.mrf.mxu0
        %v1310 = vpop.f32.mrf.mxu0
        %v1311 = vadd.f32 %v1215, %v1310
        %v1312 = vpop.f32.mrf.mxu0
        %1313 = vdwg.mxu0
        %v1314 = vlaneseq
        %v1315 = vshrl.u32 %v1314, 7
        %v1316 = vadd.s32 %v1315, 8
        %v1317 = vlaneseq
        %v1318 = vand.u32 %v1317, 127
        %s1319 = smul.u32 %s42, 16
        %v1320 = vstv %s1319
        %v1321 = vadd.s32 %v1320, %v1318
        %v1322 = vadd.s32 %v1315, 16
        %v1323 = vadd.s32 %v1316, 16
        %vm1324 = vcmp.le.s32.totalorder %v1321, %v1322
        %vm1325 = vcmp.le.s32.totalorder %v1321, %v1323
        %v1326 = vpack.c.bf16 %v1183, %v1180
        %v1327 = vpack.c.bf16 %v1191, %v1188
        %v1328 = vpack.c.bf16 %v1303, %v1300
        %v1329 = vpack.c.bf16 %v1311, %v1308
        %v1330 = vld [vmem:[#allocation2] sm:$0xf]
        %v1331 = vld [vmem:[#allocation2 + $0x4] sm:$0xf]
        %v1332 = vld [vmem:[#allocation2 + $0x8] sm:$0xf]
        %v1333 = vld [vmem:[#allocation2 + $0xc] sm:$0xf]
        %v1336 = vunpack.c.l.b16 %v1330
        %v1337 = vunpack.c.l.b16 %v1331
        %v1338 = vpack.c.b16 %v1337, %v1336
        %vm1339 = vcmask 261120
        %v1341 = vsel %vm1339, %v1338, 0
        %v1344 = vsel %vm1339, %v1326, 0
        %1346 = vmatprep.subr.bf16.mxu0 0
        %1347 = vmatpush1.bf16.xpose.msra.mxu0 0
        %1348 = vmatprep.subr.bf16.mxu0 0
        %1349 = vmatpush1.bf16.xpose.msra.mxu0 0
        %1350 = vmatprep.subr.bf16.mxu0 0
        %1351 = vmatpush1.bf16.xpose.msra.mxu0 0
        %1352 = vmatprep.subr.bf16.mxu0 0
        %1353 = vmatpush1.bf16.xpose.msra.mxu0 0
        %1354 = vmatprep.subr.bf16.mxu0 0
        %1355 = vmatpush1.bf16.xpose.msra.mxu0 0
        %1356 = vmatprep.subr.bf16.mxu0 0
        %1357 = vmatpush1.bf16.xpose.msra.mxu0 0
        %1358 = vmatprep.subr.bf16.mxu0 0
        %1359 = vmatpush1.bf16.xpose.msra.mxu0 0
        %1360 = vmatprep.subr.bf16.mxu0 0
        %1361 = vmatpush1.bf16.xpose.msra.mxu0 %v1344
        %1362 = vmatprep.subr.bf16.mxu0 0
        %1363 = vmatpush2.bf16.xpose.msra.mxu0 0
        %1364 = vmatprep.subr.bf16.mxu0 0
        %1365 = vmatpush2.bf16.xpose.msra.mxu0 0
        %1366 = vmatprep.subr.bf16.mxu0 0
        %1367 = vmatpush2.bf16.xpose.msra.mxu0 0
        %1368 = vmatprep.subr.bf16.mxu0 0
        %1369 = vmatpush2.bf16.xpose.msra.mxu0 0
        %1370 = vmatprep.subr.bf16.mxu0 0
        %1371 = vmatpush2.bf16.xpose.msra.mxu0 0
        %1372 = vmatprep.subr.bf16.mxu0 0
        %1373 = vmatpush2.bf16.xpose.msra.mxu0 0
        %1374 = vmatprep.subr.bf16.mxu0 0
        %1375 = vmatpush2.bf16.xpose.msra.mxu0 0
        %1376 = vmatprep.subr.bf16.mxu0 0
        %1377 = vmatpush2.bf16.xpose.msra.mxu0 0
        %1378 = vmatprep.mubr.bf16.mxu0 0
        %1379 = vmatmul.mubr.bf16.gmra.mxu0 %v1341
        %v1380 = vpop.f32.mrf.mxu0
        %v1381 = vadd.f32 0.0, %v1380
        %v1382 = vpop.f32.mrf.mxu0
        %v1383 = vpop.f32.mrf.mxu0
        %v1384 = vadd.f32 0.0, %v1383
        %v1385 = vpop.f32.mrf.mxu0
        %1386 = vdwg.mxu0
        %v1389 = vunpack.c.l.b16 %v1332
        %v1390 = vunpack.c.l.b16 %v1333
        %v1391 = vpack.c.b16 %v1390, %v1389
        %v1393 = vsel %vm1339, %v1391, 0
        %v1396 = vsel %vm1339, %v1327, 0
        %1398 = vmatprep.subr.bf16.mxu0 0
        %1399 = vmatpush1.bf16.xpose.msra.mxu0 0
        %1400 = vmatprep.subr.bf16.mxu0 0
        %1401 = vmatpush1.bf16.xpose.msra.mxu0 0
        %1402 = vmatprep.subr.bf16.mxu0 0
        %1403 = vmatpush1.bf16.xpose.msra.mxu0 0
        %1404 = vmatprep.subr.bf16.mxu0 0
        %1405 = vmatpush1.bf16.xpose.msra.mxu0 0
        %1406 = vmatprep.subr.bf16.mxu0 0
        %1407 = vmatpush1.bf16.xpose.msra.mxu0 0
        %1408 = vmatprep.subr.bf16.mxu0 0
        %1409 = vmatpush1.bf16.xpose.msra.mxu0 0
        %1410 = vmatprep.subr.bf16.mxu0 0
        %1411 = vmatpush1.bf16.xpose.msra.mxu0 0
        %1412 = vmatprep.subr.bf16.mxu0 0
        %1413 = vmatpush1.bf16.xpose.msra.mxu0 %v1396
        %1414 = vmatprep.subr.bf16.mxu0 0
        %1415 = vmatpush2.bf16.xpose.msra.mxu0 0
        %1416 = vmatprep.subr.bf16.mxu0 0
        %1417 = vmatpush2.bf16.xpose.msra.mxu0 0
        %1418 = vmatprep.subr.bf16.mxu0 0
        %1419 = vmatpush2.bf16.xpose.msra.mxu0 0
        %1420 = vmatprep.subr.bf16.mxu0 0
        %1421 = vmatpush2.bf16.xpose.msra.mxu0 0
        %1422 = vmatprep.subr.bf16.mxu0 0
        %1423 = vmatpush2.bf16.xpose.msra.mxu0 0
        %1424 = vmatprep.subr.bf16.mxu0 0
        %1425 = vmatpush2.bf16.xpose.msra.mxu0 0
        %1426 = vmatprep.subr.bf16.mxu0 0
        %1427 = vmatpush2.bf16.xpose.msra.mxu0 0
        %1428 = vmatprep.subr.bf16.mxu0 0
        %1429 = vmatpush2.bf16.xpose.msra.mxu0 0
        %1430 = vmatprep.mubr.bf16.mxu0 0
        %1431 = vmatmul.mubr.bf16.gmra.mxu0 %v1393
        %v1432 = vpop.f32.mrf.mxu0
        %v1433 = vadd.f32 0.0, %v1432
        %v1434 = vpop.f32.mrf.mxu0
        %v1435 = vpop.f32.mrf.mxu0
        %v1436 = vadd.f32 0.0, %v1435
        %v1437 = vpop.f32.mrf.mxu0
        %1438 = vdwg.mxu0
        %v1439 = vsel %vm1324, 1, 0
        %v1440 = vsel %vm1325, 1, 0
        %vm1441 = vcmp.eq.s32.totalorder %v1439, 1
        %vm1442 = vcmp.eq.s32.totalorder %v1440, 1
        %v1443 = vsel %vm1441, %v1381, -1e+10
        %v1444 = vsel %vm1442, %v1384, -1e+10
        %v1445 = vsel %vm1441, %v1433, -1e+10
        %v1446 = vsel %vm1442, %v1436, -1e+10
        %v1447 = vld [vmem:[#allocation3] sm:$0xff]
        %v1448 = vld [vmem:[#allocation3 + $0x8] sm:$0xff]
        %v1449 = vld [vmem:[#allocation3 + $0x10] sm:$0xff]
        %v1450 = vld [vmem:[#allocation3 + $0x18] sm:$0xff]
        %vm1451 = vcmask 130048
        %v1452 = vsel %vm1451, %v1443, -inf
        %1453 = vmax.xlane.f32.xlu0 %v1452
        %v1454 = vpop.xlane.xlu0 %1453
        %v1455 = vsel %vm1451, %v1444, -inf
        %1456 = vmax.xlane.f32.xlu0 %v1455
        %v1457 = vpop.xlane.xlu0 %1456
        %v1458 = vsel %vm1451, %v1445, -inf
        %1459 = vmax.xlane.f32.xlu0 %v1458
        %v1460 = vpop.xlane.xlu0 %1459
        %v1461 = vsel %vm1451, %v1446, -inf
        %1462 = vmax.xlane.f32.xlu0 %v1461
        %v1463 = vpop.xlane.xlu0 %1462
        %v1464 = vmax.f32 %v1447, %v1454
        %v1465 = vmax.f32 %v1448, %v1457
        %v1466 = vmax.f32 %v1449, %v1460
        %v1467 = vmax.f32 %v1450, %v1463
        %v1468 = vsub.f32 %v1447, %v1464
        %v1469 = vsub.f32 %v1448, %v1465
        %v1470 = vsub.f32 %v1449, %v1466
        %v1471 = vsub.f32 %v1450, %v1467
        %v1472 = vmul.f32 %v1468, 1.442695
        %v1473 = vpow.pop %v1472
        %v1474 = vmul.f32 %v1469, 1.442695
        %v1475 = vpow.pop %v1474
        %v1476 = vmul.f32 %v1470, 1.442695
        %v1477 = vpow.pop %v1476
        %v1478 = vmul.f32 %v1471, 1.442695
        %v1479 = vpow.pop %v1478
        %1481 = vset.pattern.permute.xlu0 0
        %1482 = vperm.xlu0 %1481, %v1464
        %v1483 = vpop.permute.xlu0 %1482
        %1486 = vset.pattern.permute.xlu0 0
        %1487 = vperm.xlu0 %1486, %v1465
        %v1488 = vpop.permute.xlu0 %1487
        %1491 = vset.pattern.permute.xlu0 0
        %1492 = vperm.xlu0 %1491, %v1466
        %v1493 = vpop.permute.xlu0 %1492
        %1496 = vset.pattern.permute.xlu0 0
        %1497 = vperm.xlu0 %1496, %v1467
        %v1498 = vpop.permute.xlu0 %1497
        %v1500 = vsub.f32 %v1443, %v1483
        %v1501 = vsub.f32 %v1444, %v1488
        %v1502 = vsub.f32 %v1445, %v1493
        %v1503 = vsub.f32 %v1446, %v1498
        %v1504 = vmul.f32 %v1500, 1.442695
        %v1505 = vpow.pop %v1504
        %v1506 = vmul.f32 %v1501, 1.442695
        %v1507 = vpow.pop %v1506
        %v1508 = vmul.f32 %v1502, 1.442695
        %v1509 = vpow.pop %v1508
        %v1510 = vmul.f32 %v1503, 1.442695
        %v1511 = vpow.pop %v1510
        %v1512 = vsel %vm1441, %v1505, 0.0
        %v1513 = vsel %vm1442, %v1507, 0.0
        %v1514 = vsel %vm1441, %v1509, 0.0
        %v1515 = vsel %vm1442, %v1511, 0.0
        %v1516 = vld [vmem:[#allocation4] sm:$0xff]
        %v1517 = vld [vmem:[#allocation4 + $0x8] sm:$0xff]
        %v1518 = vld [vmem:[#allocation4 + $0x10] sm:$0xff]
        %v1519 = vld [vmem:[#allocation4 + $0x18] sm:$0xff]
        %v1520 = vmul.f32 %v1473, %v1516
        %v1521 = vmul.f32 %v1475, %v1517
        %v1522 = vmul.f32 %v1477, %v1518
        %v1523 = vmul.f32 %v1479, %v1519
        %v1524 = vsel %vm1451, %v1512, 0.0
        %1525 = vadd.xlane.f32.xlu0 %v1524
        %v1526 = vpop.xlane.xlu0 %1525
        %v1527 = vsel %vm1451, %v1513, 0.0
        %1528 = vadd.xlane.f32.xlu0 %v1527
        %v1529 = vpop.xlane.xlu0 %1528
        %v1530 = vsel %vm1451, %v1514, 0.0
        %1531 = vadd.xlane.f32.xlu0 %v1530
        %v1532 = vpop.xlane.xlu0 %1531
        %v1533 = vsel %vm1451, %v1515, 0.0
        %1534 = vadd.xlane.f32.xlu0 %v1533
        %v1535 = vpop.xlane.xlu0 %1534
        %v1536 = vadd.f32 %v1520, %v1526
        %v1537 = vadd.f32 %v1521, %v1529
        %v1538 = vadd.f32 %v1522, %v1532
        %v1539 = vadd.f32 %v1523, %v1535
        %vm1540 = vcmask 7168
        %1541 = vst.msk [vmem:[#allocation4] sm:$0xff] %vm1540, %v1536
        %1542 = vst.msk [vmem:[#allocation4 + $0x8] sm:$0xff] %vm1540, %v1537
        %1543 = vst.msk [vmem:[#allocation4 + $0x10] sm:$0xff] %vm1540, %v1538
        %1544 = vst.msk [vmem:[#allocation4 + $0x18] sm:$0xff] %vm1540, %v1539
        %v1545 = vld [vmem:[#allocation5] sm:$0xff]
        %v1546 = vld [vmem:[#allocation5 + $0x8] sm:$0xff]
        %v1547 = vld [vmem:[#allocation5 + $0x10] sm:$0xff]
        %v1548 = vld [vmem:[#allocation5 + $0x18] sm:$0xff]
        %1550 = vset.pattern.permute.xlu0 0
        %1551 = vperm.xlu0 %1550, %v1473
        %v1552 = vpop.permute.xlu0 %1551
        %1555 = vset.pattern.permute.xlu0 0
        %1556 = vperm.xlu0 %1555, %v1475
        %v1557 = vpop.permute.xlu0 %1556
        %1560 = vset.pattern.permute.xlu0 0
        %1561 = vperm.xlu0 %1560, %v1477
        %v1562 = vpop.permute.xlu0 %1561
        %1565 = vset.pattern.permute.xlu0 0
        %1566 = vperm.xlu0 %1565, %v1479
        %v1567 = vpop.permute.xlu0 %1566
        %v1569 = vmul.f32 %v1552, %v1545
        %v1570 = vmul.f32 %v1557, %v1546
        %v1571 = vmul.f32 %v1562, %v1547
        %v1572 = vmul.f32 %v1567, %v1548
        %v1573 = vpack.c.bf16 %v1513, %v1512
        %v1574 = vpack.c.bf16 %v1515, %v1514
        %v1576 = vsel %vm1451, %v1573, 0
        %1578 = vmatprep.subr.bf16.mxu0 0
        %1579 = vmatpush1.bf16.msra.mxu0 0
        %1580 = vmatprep.subr.bf16.mxu0 0
        %1581 = vmatpush1.bf16.msra.mxu0 0
        %1582 = vmatprep.subr.bf16.mxu0 0
        %1583 = vmatpush1.bf16.msra.mxu0 0
        %1584 = vmatprep.subr.bf16.mxu0 0
        %1585 = vmatpush1.bf16.msra.mxu0 0
        %1586 = vmatprep.subr.bf16.mxu0 0
        %1587 = vmatpush1.bf16.msra.mxu0 0
        %1588 = vmatprep.subr.bf16.mxu0 0
        %1589 = vmatpush1.bf16.msra.mxu0 0
        %1590 = vmatprep.subr.bf16.mxu0 0
        %1591 = vmatpush1.bf16.msra.mxu0 0
        %1592 = vmatprep.subr.bf16.mxu0 0
        %1593 = vmatpush1.bf16.msra.mxu0 %v1328
        %1594 = vmatprep.subr.bf16.mxu0 0
        %1595 = vmatpush2.bf16.msra.mxu0 0
        %1596 = vmatprep.subr.bf16.mxu0 0
        %1597 = vmatpush2.bf16.msra.mxu0 0
        %1598 = vmatprep.subr.bf16.mxu0 0
        %1599 = vmatpush2.bf16.msra.mxu0 0
        %1600 = vmatprep.subr.bf16.mxu0 0
        %1601 = vmatpush2.bf16.msra.mxu0 0
        %1602 = vmatprep.subr.bf16.mxu0 0
        %1603 = vmatpush2.bf16.msra.mxu0 0
        %1604 = vmatprep.subr.bf16.mxu0 0
        %1605 = vmatpush2.bf16.msra.mxu0 0
        %1606 = vmatprep.subr.bf16.mxu0 0
        %1607 = vmatpush2.bf16.msra.mxu0 0
        %1608 = vmatprep.subr.bf16.mxu0 0
        %1609 = vmatpush2.bf16.msra.mxu0 0
        %1610 = vmatprep.mubr.bf16.mxu0 0
        %1611 = vmatmul.mubr.bf16.gmra.mxu0 %v1576
        %v1612 = vpop.f32.mrf.mxu0
        %v1613 = vadd.f32 0.0, %v1612
        %v1614 = vpop.f32.mrf.mxu0
        %v1615 = vpop.f32.mrf.mxu0
        %v1616 = vadd.f32 0.0, %v1615
        %v1617 = vpop.f32.mrf.mxu0
        %1618 = vdwg.mxu0
        %v1620 = vsel %vm1451, %v1574, 0
        %1622 = vmatprep.subr.bf16.mxu0 0
        %1623 = vmatpush1.bf16.msra.mxu0 0
        %1624 = vmatprep.subr.bf16.mxu0 0
        %1625 = vmatpush1.bf16.msra.mxu0 0
        %1626 = vmatprep.subr.bf16.mxu0 0
        %1627 = vmatpush1.bf16.msra.mxu0 0
        %1628 = vmatprep.subr.bf16.mxu0 0
        %1629 = vmatpush1.bf16.msra.mxu0 0
        %1630 = vmatprep.subr.bf16.mxu0 0
        %1631 = vmatpush1.bf16.msra.mxu0 0
        %1632 = vmatprep.subr.bf16.mxu0 0
        %1633 = vmatpush1.bf16.msra.mxu0 0
        %1634 = vmatprep.subr.bf16.mxu0 0
        %1635 = vmatpush1.bf16.msra.mxu0 0
        %1636 = vmatprep.subr.bf16.mxu0 0
        %1637 = vmatpush1.bf16.msra.mxu0 %v1329
        %1638 = vmatprep.subr.bf16.mxu0 0
        %1639 = vmatpush2.bf16.msra.mxu0 0
        %1640 = vmatprep.subr.bf16.mxu0 0
        %1641 = vmatpush2.bf16.msra.mxu0 0
        %1642 = vmatprep.subr.bf16.mxu0 0
        %1643 = vmatpush2.bf16.msra.mxu0 0
        %1644 = vmatprep.subr.bf16.mxu0 0
        %1645 = vmatpush2.bf16.msra.mxu0 0
        %1646 = vmatprep.subr.bf16.mxu0 0
        %1647 = vmatpush2.bf16.msra.mxu0 0
        %1648 = vmatprep.subr.bf16.mxu0 0
        %1649 = vmatpush2.bf16.msra.mxu0 0
        %1650 = vmatprep.subr.bf16.mxu0 0
        %1651 = vmatpush2.bf16.msra.mxu0 0
        %1652 = vmatprep.subr.bf16.mxu0 0
        %1653 = vmatpush2.bf16.msra.mxu0 0
        %1654 = vmatprep.mubr.bf16.mxu0 0
        %1655 = vmatmul.mubr.bf16.gmra.mxu0 %v1620
        %v1656 = vpop.f32.mrf.mxu0
        %v1657 = vadd.f32 0.0, %v1656
        %v1658 = vpop.f32.mrf.mxu0
        %v1659 = vpop.f32.mrf.mxu0
        %v1660 = vadd.f32 0.0, %v1659
        %v1661 = vpop.f32.mrf.mxu0
        %1662 = vdwg.mxu0
        %v1663 = vadd.f32 %v1569, %v1613
        %v1664 = vadd.f32 %v1570, %v1616
        %v1665 = vadd.f32 %v1571, %v1657
        %v1666 = vadd.f32 %v1572, %v1660
        %1667 = vst.msk [vmem:[#allocation5] sm:$0xff] %vm1339, %v1663
        %1668 = vst.msk [vmem:[#allocation5 + $0x8] sm:$0xff] %vm1339, %v1664
        %1669 = vst.msk [vmem:[#allocation5 + $0x10] sm:$0xff] %vm1339, %v1665
        %1670 = vst.msk [vmem:[#allocation5 + $0x18] sm:$0xff] %vm1339, %v1666
        %1671 = vst.msk [vmem:[#allocation3] sm:$0xff] %vm1540, %v1464
        %1672 = vst.msk [vmem:[#allocation3 + $0x8] sm:$0xff] %vm1540, %v1465
        %1673 = vst.msk [vmem:[#allocation3 + $0x10] sm:$0xff] %vm1540, %v1466
        %1674 = vst.msk [vmem:[#allocation3 + $0x18] sm:$0xff] %vm1540, %v1467
        %s1675 = scalar_lea.vmem [#allocation2], 16
        %v1676 = vld [vmem:[%s1675] sm:$0xf]
        %v1677 = vld [vmem:[%s1675 + $0x4] sm:$0xf]
        %v1678 = vld [vmem:[%s1675 + $0x8] sm:$0xf]
        %v1679 = vld [vmem:[%s1675 + $0xc] sm:$0xf]
        %v1682 = vunpack.c.l.b16 %v1676
        %v1683 = vunpack.c.l.b16 %v1677
        %v1684 = vpack.c.b16 %v1683, %v1682
        %1686 = vrot.lane.b32.xlu0 %v1326, 96
        %v1687 = vpop.permute.xlu0 %1686
        %v1689 = vsel %vm1339, %v1684, 0
        %v1692 = vsel %vm1339, %v1687, 0
        %1694 = vmatprep.subr.bf16.mxu0 0
        %1695 = vmatpush1.bf16.xpose.msra.mxu0 0
        %1696 = vmatprep.subr.bf16.mxu0 0
        %1697 = vmatpush1.bf16.xpose.msra.mxu0 0
        %1698 = vmatprep.subr.bf16.mxu0 0
        %1699 = vmatpush1.bf16.xpose.msra.mxu0 0
        %1700 = vmatprep.subr.bf16.mxu0 0
        %1701 = vmatpush1.bf16.xpose.msra.mxu0 0
        %1702 = vmatprep.subr.bf16.mxu0 0
        %1703 = vmatpush1.bf16.xpose.msra.mxu0 0
        %1704 = vmatprep.subr.bf16.mxu0 0
        %1705 = vmatpush1.bf16.xpose.msra.mxu0 0
        %1706 = vmatprep.subr.bf16.mxu0 0
        %1707 = vmatpush1.bf16.xpose.msra.mxu0 0
        %1708 = vmatprep.subr.bf16.mxu0 0
        %1709 = vmatpush1.bf16.xpose.msra.mxu0 %v1692
        %1710 = vmatprep.subr.bf16.mxu0 0
        %1711 = vmatpush2.bf16.xpose.msra.mxu0 0
        %1712 = vmatprep.subr.bf16.mxu0 0
        %1713 = vmatpush2.bf16.xpose.msra.mxu0 0
        %1714 = vmatprep.subr.bf16.mxu0 0
        %1715 = vmatpush2.bf16.xpose.msra.mxu0 0
        %1716 = vmatprep.subr.bf16.mxu0 0
        %1717 = vmatpush2.bf16.xpose.msra.mxu0 0
        %1718 = vmatprep.subr.bf16.mxu0 0
        %1719 = vmatpush2.bf16.xpose.msra.mxu0 0
        %1720 = vmatprep.subr.bf16.mxu0 0
        %1721 = vmatpush2.bf16.xpose.msra.mxu0 0
        %1722 = vmatprep.subr.bf16.mxu0 0
        %1723 = vmatpush2.bf16.xpose.msra.mxu0 0
        %1724 = vmatprep.subr.bf16.mxu0 0
        %1725 = vmatpush2.bf16.xpose.msra.mxu0 0
        %1726 = vmatprep.mubr.bf16.mxu0 0
        %1727 = vmatmul.mubr.bf16.gmra.mxu0 %v1689
        %v1728 = vpop.f32.mrf.mxu0
        %v1729 = vadd.f32 0.0, %v1728
        %v1730 = vpop.f32.mrf.mxu0
        %v1731 = vpop.f32.mrf.mxu0
        %v1732 = vadd.f32 0.0, %v1731
        %v1733 = vpop.f32.mrf.mxu0
        %1734 = vdwg.mxu0
        %v1737 = vunpack.c.l.b16 %v1678
        %v1738 = vunpack.c.l.b16 %v1679
        %v1739 = vpack.c.b16 %v1738, %v1737
        %1741 = vrot.lane.b32.xlu0 %v1327, 96
        %v1742 = vpop.permute.xlu0 %1741
        %v1744 = vsel %vm1339, %v1739, 0
        %v1747 = vsel %vm1339, %v1742, 0
        %1749 = vmatprep.subr.bf16.mxu0 0
        %1750 = vmatpush1.bf16.xpose.msra.mxu0 0
        %1751 = vmatprep.subr.bf16.mxu0 0
        %1752 = vmatpush1.bf16.xpose.msra.mxu0 0
        %1753 = vmatprep.subr.bf16.mxu0 0
        %1754 = vmatpush1.bf16.xpose.msra.mxu0 0
        %1755 = vmatprep.subr.bf16.mxu0 0
        %1756 = vmatpush1.bf16.xpose.msra.mxu0 0
        %1757 = vmatprep.subr.bf16.mxu0 0
        %1758 = vmatpush1.bf16.xpose.msra.mxu0 0
        %1759 = vmatprep.subr.bf16.mxu0 0
        %1760 = vmatpush1.bf16.xpose.msra.mxu0 0
        %1761 = vmatprep.subr.bf16.mxu0 0
        %1762 = vmatpush1.bf16.xpose.msra.mxu0 0
        %1763 = vmatprep.subr.bf16.mxu0 0
        %1764 = vmatpush1.bf16.xpose.msra.mxu0 %v1747
        %1765 = vmatprep.subr.bf16.mxu0 0
        %1766 = vmatpush2.bf16.xpose.msra.mxu0 0
        %1767 = vmatprep.subr.bf16.mxu0 0
        %1768 = vmatpush2.bf16.xpose.msra.mxu0 0
        %1769 = vmatprep.subr.bf16.mxu0 0
        %1770 = vmatpush2.bf16.xpose.msra.mxu0 0
        %1771 = vmatprep.subr.bf16.mxu0 0
        %1772 = vmatpush2.bf16.xpose.msra.mxu0 0
        %1773 = vmatprep.subr.bf16.mxu0 0
        %1774 = vmatpush2.bf16.xpose.msra.mxu0 0
        %1775 = vmatprep.subr.bf16.mxu0 0
        %1776 = vmatpush2.bf16.xpose.msra.mxu0 0
        %1777 = vmatprep.subr.bf16.mxu0 0
        %1778 = vmatpush2.bf16.xpose.msra.mxu0 0
        %1779 = vmatprep.subr.bf16.mxu0 0
        %1780 = vmatpush2.bf16.xpose.msra.mxu0 0
        %1781 = vmatprep.mubr.bf16.mxu0 0
        %1782 = vmatmul.mubr.bf16.gmra.mxu0 %v1744
        %v1783 = vpop.f32.mrf.mxu0
        %v1784 = vadd.f32 0.0, %v1783
        %v1785 = vpop.f32.mrf.mxu0
        %v1786 = vpop.f32.mrf.mxu0
        %v1787 = vadd.f32 0.0, %v1786
        %v1788 = vpop.f32.mrf.mxu0
        %1789 = vdwg.mxu0
        %v1790 = vsel %vm1441, %v1729, -1e+10
        %v1791 = vsel %vm1442, %v1732, -1e+10
        %v1792 = vsel %vm1441, %v1784, -1e+10
        %v1793 = vsel %vm1442, %v1787, -1e+10
        %s1794 = scalar_lea.vmem [#allocation3], 32
        %v1795 = vld [vmem:[%s1794] sm:$0xff]
        %v1796 = vld [vmem:[%s1794 + $0x8] sm:$0xff]
        %v1797 = vld [vmem:[%s1794 + $0x10] sm:$0xff]
        %v1798 = vld [vmem:[%s1794 + $0x18] sm:$0xff]
        %v1799 = vsel %vm1451, %v1790, -inf
        %1800 = vmax.xlane.f32.xlu0 %v1799
        %v1801 = vpop.xlane.xlu0 %1800
        %v1802 = vsel %vm1451, %v1791, -inf
        %1803 = vmax.xlane.f32.xlu0 %v1802
        %v1804 = vpop.xlane.xlu0 %1803
        %v1805 = vsel %vm1451, %v1792, -inf
        %1806 = vmax.xlane.f32.xlu0 %v1805
        %v1807 = vpop.xlane.xlu0 %1806
        %v1808 = vsel %vm1451, %v1793, -inf
        %1809 = vmax.xlane.f32.xlu0 %v1808
        %v1810 = vpop.xlane.xlu0 %1809
        %v1811 = vmax.f32 %v1795, %v1801
        %v1812 = vmax.f32 %v1796, %v1804
        %v1813 = vmax.f32 %v1797, %v1807
        %v1814 = vmax.f32 %v1798, %v1810
        %v1815 = vsub.f32 %v1795, %v1811
        %v1816 = vsub.f32 %v1796, %v1812
        %v1817 = vsub.f32 %v1797, %v1813
        %v1818 = vsub.f32 %v1798, %v1814
        %v1819 = vmul.f32 %v1815, 1.442695
        %v1820 = vpow.pop %v1819
        %v1821 = vmul.f32 %v1816, 1.442695
        %v1822 = vpow.pop %v1821
        %v1823 = vmul.f32 %v1817, 1.442695
        %v1824 = vpow.pop %v1823
        %v1825 = vmul.f32 %v1818, 1.442695
        %v1826 = vpow.pop %v1825
        %1828 = vset.pattern.permute.xlu0 0
        %1829 = vperm.xlu0 %1828, %v1811
        %v1830 = vpop.permute.xlu0 %1829
        %1833 = vset.pattern.permute.xlu0 0
        %1834 = vperm.xlu0 %1833, %v1812
        %v1835 = vpop.permute.xlu0 %1834
        %1838 = vset.pattern.permute.xlu0 0
        %1839 = vperm.xlu0 %1838, %v1813
        %v1840 = vpop.permute.xlu0 %1839
        %1843 = vset.pattern.permute.xlu0 0
        %1844 = vperm.xlu0 %1843, %v1814
        %v1845 = vpop.permute.xlu0 %1844
        %v1847 = vsub.f32 %v1790, %v1830
        %v1848 = vsub.f32 %v1791, %v1835
        %v1849 = vsub.f32 %v1792, %v1840
        %v1850 = vsub.f32 %v1793, %v1845
        %v1851 = vmul.f32 %v1847, 1.442695
        %v1852 = vpow.pop %v1851
        %v1853 = vmul.f32 %v1848, 1.442695
        %v1854 = vpow.pop %v1853
        %v1855 = vmul.f32 %v1849, 1.442695
        %v1856 = vpow.pop %v1855
        %v1857 = vmul.f32 %v1850, 1.442695
        %v1858 = vpow.pop %v1857
        %v1859 = vsel %vm1441, %v1852, 0.0
        %v1860 = vsel %vm1442, %v1854, 0.0
        %v1861 = vsel %vm1441, %v1856, 0.0
        %v1862 = vsel %vm1442, %v1858, 0.0
        %s1863 = scalar_lea.vmem [#allocation4], 32
        %v1864 = vld [vmem:[%s1863] sm:$0xff]
        %v1865 = vld [vmem:[%s1863 + $0x8] sm:$0xff]
        %v1866 = vld [vmem:[%s1863 + $0x10] sm:$0xff]
        %v1867 = vld [vmem:[%s1863 + $0x18] sm:$0xff]
        %v1868 = vmul.f32 %v1820, %v1864
        %v1869 = vmul.f32 %v1822, %v1865
        %v1870 = vmul.f32 %v1824, %v1866
        %v1871 = vmul.f32 %v1826, %v1867
        %v1872 = vsel %vm1451, %v1859, 0.0
        %1873 = vadd.xlane.f32.xlu0 %v1872
        %v1874 = vpop.xlane.xlu0 %1873
        %v1875 = vsel %vm1451, %v1860, 0.0
        %1876 = vadd.xlane.f32.xlu0 %v1875
        %v1877 = vpop.xlane.xlu0 %1876
        %v1878 = vsel %vm1451, %v1861, 0.0
        %1879 = vadd.xlane.f32.xlu0 %v1878
        %v1880 = vpop.xlane.xlu0 %1879
        %v1881 = vsel %vm1451, %v1862, 0.0
        %1882 = vadd.xlane.f32.xlu0 %v1881
        %v1883 = vpop.xlane.xlu0 %1882
        %v1884 = vadd.f32 %v1868, %v1874
        %v1885 = vadd.f32 %v1869, %v1877
        %v1886 = vadd.f32 %v1870, %v1880
        %v1887 = vadd.f32 %v1871, %v1883
        %1888 = vst.msk [vmem:[%s1863] sm:$0xff] %vm1540, %v1884
        %1889 = vst.msk [vmem:[%s1863 + $0x8] sm:$0xff] %vm1540, %v1885
        %1890 = vst.msk [vmem:[%s1863 + $0x10] sm:$0xff] %vm1540, %v1886
        %1891 = vst.msk [vmem:[%s1863 + $0x18] sm:$0xff] %vm1540, %v1887
        %s1892 = scalar_lea.vmem [#allocation5], 32
        %v1893 = vld [vmem:[%s1892] sm:$0xff]
        %v1894 = vld [vmem:[%s1892 + $0x8] sm:$0xff]
        %v1895 = vld [vmem:[%s1892 + $0x10] sm:$0xff]
        %v1896 = vld [vmem:[%s1892 + $0x18] sm:$0xff]
        %1898 = vset.pattern.permute.xlu0 0
        %1899 = vperm.xlu0 %1898, %v1820
        %v1900 = vpop.permute.xlu0 %1899
        %1903 = vset.pattern.permute.xlu0 0
        %1904 = vperm.xlu0 %1903, %v1822
        %v1905 = vpop.permute.xlu0 %1904
        %1908 = vset.pattern.permute.xlu0 0
        %1909 = vperm.xlu0 %1908, %v1824
        %v1910 = vpop.permute.xlu0 %1909
        %1913 = vset.pattern.permute.xlu0 0
        %1914 = vperm.xlu0 %1913, %v1826
        %v1915 = vpop.permute.xlu0 %1914
        %v1917 = vmul.f32 %v1900, %v1893
        %v1918 = vmul.f32 %v1905, %v1894
        %v1919 = vmul.f32 %v1910, %v1895
        %v1920 = vmul.f32 %v1915, %v1896
        %v1921 = vpack.c.bf16 %v1860, %v1859
        %v1922 = vpack.c.bf16 %v1862, %v1861
        %1924 = vrot.lane.b32.xlu0 %v1328, 96
        %v1925 = vpop.permute.xlu0 %1924
        %v1928 = vsel %vm1451, %v1921, 0
        %1930 = vmatprep.subr.bf16.mxu0 0
        %1931 = vmatpush1.bf16.msra.mxu0 0
        %1932 = vmatprep.subr.bf16.mxu0 0
        %1933 = vmatpush1.bf16.msra.mxu0 0
        %1934 = vmatprep.subr.bf16.mxu0 0
        %1935 = vmatpush1.bf16.msra.mxu0 0
        %1936 = vmatprep.subr.bf16.mxu0 0
        %1937 = vmatpush1.bf16.msra.mxu0 0
        %1938 = vmatprep.subr.bf16.mxu0 0
        %1939 = vmatpush1.bf16.msra.mxu0 0
        %1940 = vmatprep.subr.bf16.mxu0 0
        %1941 = vmatpush1.bf16.msra.mxu0 0
        %1942 = vmatprep.subr.bf16.mxu0 0
        %1943 = vmatpush1.bf16.msra.mxu0 0
        %1944 = vmatprep.subr.bf16.mxu0 0
        %1945 = vmatpush1.bf16.msra.mxu0 %v1925
        %1946 = vmatprep.subr.bf16.mxu0 0
        %1947 = vmatpush2.bf16.msra.mxu0 0
        %1948 = vmatprep.subr.bf16.mxu0 0
        %1949 = vmatpush2.bf16.msra.mxu0 0
        %1950 = vmatprep.subr.bf16.mxu0 0
        %1951 = vmatpush2.bf16.msra.mxu0 0
        %1952 = vmatprep.subr.bf16.mxu0 0
        %1953 = vmatpush2.bf16.msra.mxu0 0
        %1954 = vmatprep.subr.bf16.mxu0 0
        %1955 = vmatpush2.bf16.msra.mxu0 0
        %1956 = vmatprep.subr.bf16.mxu0 0
        %1957 = vmatpush2.bf16.msra.mxu0 0
        %1958 = vmatprep.subr.bf16.mxu0 0
        %1959 = vmatpush2.bf16.msra.mxu0 0
        %1960 = vmatprep.subr.bf16.mxu0 0
        %1961 = vmatpush2.bf16.msra.mxu0 0
        %1962 = vmatprep.mubr.bf16.mxu0 0
        %1963 = vmatmul.mubr.bf16.gmra.mxu0 %v1928
        %v1964 = vpop.f32.mrf.mxu0
        %v1965 = vadd.f32 0.0, %v1964
        %v1966 = vpop.f32.mrf.mxu0
        %v1967 = vpop.f32.mrf.mxu0
        %v1968 = vadd.f32 0.0, %v1967
        %v1969 = vpop.f32.mrf.mxu0
        %1970 = vdwg.mxu0
        %1972 = vrot.lane.b32.xlu0 %v1329, 96
        %v1973 = vpop.permute.xlu0 %1972
        %v1976 = vsel %vm1451, %v1922, 0
        %1978 = vmatprep.subr.bf16.mxu0 0
        %1979 = vmatpush1.bf16.msra.mxu0 0
        %1980 = vmatprep.subr.bf16.mxu0 0
        %1981 = vmatpush1.bf16.msra.mxu0 0
        %1982 = vmatprep.subr.bf16.mxu0 0
        %1983 = vmatpush1.bf16.msra.mxu0 0
        %1984 = vmatprep.subr.bf16.mxu0 0
        %1985 = vmatpush1.bf16.msra.mxu0 0
        %1986 = vmatprep.subr.bf16.mxu0 0
        %1987 = vmatpush1.bf16.msra.mxu0 0
        %1988 = vmatprep.subr.bf16.mxu0 0
        %1989 = vmatpush1.bf16.msra.mxu0 0
        %1990 = vmatprep.subr.bf16.mxu0 0
        %1991 = vmatpush1.bf16.msra.mxu0 0
        %1992 = vmatprep.subr.bf16.mxu0 0
        %1993 = vmatpush1.bf16.msra.mxu0 %v1973
        %1994 = vmatprep.subr.bf16.mxu0 0
        %1995 = vmatpush2.bf16.msra.mxu0 0
        %1996 = vmatprep.subr.bf16.mxu0 0
        %1997 = vmatpush2.bf16.msra.mxu0 0
        %1998 = vmatprep.subr.bf16.mxu0 0
        %1999 = vmatpush2.bf16.msra.mxu0 0
        %2000 = vmatprep.subr.bf16.mxu0 0
        %2001 = vmatpush2.bf16.msra.mxu0 0
        %2002 = vmatprep.subr.bf16.mxu0 0
        %2003 = vmatpush2.bf16.msra.mxu0 0
        %2004 = vmatprep.subr.bf16.mxu0 0
        %2005 = vmatpush2.bf16.msra.mxu0 0
        %2006 = vmatprep.subr.bf16.mxu0 0
        %2007 = vmatpush2.bf16.msra.mxu0 0
        %2008 = vmatprep.subr.bf16.mxu0 0
        %2009 = vmatpush2.bf16.msra.mxu0 0
        %2010 = vmatprep.mubr.bf16.mxu0 0
        %2011 = vmatmul.mubr.bf16.gmra.mxu0 %v1976
        %v2012 = vpop.f32.mrf.mxu0
        %v2013 = vadd.f32 0.0, %v2012
        %v2014 = vpop.f32.mrf.mxu0
        %v2015 = vpop.f32.mrf.mxu0
        %v2016 = vadd.f32 0.0, %v2015
        %v2017 = vpop.f32.mrf.mxu0
        %2018 = vdwg.mxu0
        %v2019 = vadd.f32 %v1917, %v1965
        %v2020 = vadd.f32 %v1918, %v1968
        %v2021 = vadd.f32 %v1919, %v2013
        %v2022 = vadd.f32 %v1920, %v2016
        %2023 = vst.msk [vmem:[%s1892] sm:$0xff] %vm1339, %v2019
        %2024 = vst.msk [vmem:[%s1892 + $0x8] sm:$0xff] %vm1339, %v2020
        %2025 = vst.msk [vmem:[%s1892 + $0x10] sm:$0xff] %vm1339, %v2021
        %2026 = vst.msk [vmem:[%s1892 + $0x18] sm:$0xff] %vm1339, %v2022
        %2027 = vst.msk [vmem:[%s1794] sm:$0xff] %vm1540, %v1811
        %2028 = vst.msk [vmem:[%s1794 + $0x8] sm:$0xff] %vm1540, %v1812
        %2029 = vst.msk [vmem:[%s1794 + $0x10] sm:$0xff] %vm1540, %v1813
        %2030 = vst.msk [vmem:[%s1794 + $0x18] sm:$0xff] %vm1540, %v1814
        %s2031 = scalar_lea.vmem [#allocation2], 32
        %v2032 = vld [vmem:[%s2031] sm:$0xf]
        %v2033 = vld [vmem:[%s2031 + $0x4] sm:$0xf]
        %v2034 = vld [vmem:[%s2031 + $0x8] sm:$0xf]
        %v2035 = vld [vmem:[%s2031 + $0xc] sm:$0xf]
        %v2038 = vunpack.c.l.b16 %v2032
        %v2039 = vunpack.c.l.b16 %v2033
        %v2040 = vpack.c.b16 %v2039, %v2038
        %2041 = vrot.lane.b32.xlu0 %v1326, 64
        %v2042 = vpop.permute.xlu0 %2041
        %v2044 = vsel %vm1339, %v2040, 0
        %v2047 = vsel %vm1339, %v2042, 0
        %2049 = vmatprep.subr.bf16.mxu0 0
        %2050 = vmatpush1.bf16.xpose.msra.mxu0 0
        %2051 = vmatprep.subr.bf16.mxu0 0
        %2052 = vmatpush1.bf16.xpose.msra.mxu0 0
        %2053 = vmatprep.subr.bf16.mxu0 0
        %2054 = vmatpush1.bf16.xpose.msra.mxu0 0
        %2055 = vmatprep.subr.bf16.mxu0 0
        %2056 = vmatpush1.bf16.xpose.msra.mxu0 0
        %2057 = vmatprep.subr.bf16.mxu0 0
        %2058 = vmatpush1.bf16.xpose.msra.mxu0 0
        %2059 = vmatprep.subr.bf16.mxu0 0
        %2060 = vmatpush1.bf16.xpose.msra.mxu0 0
        %2061 = vmatprep.subr.bf16.mxu0 0
        %2062 = vmatpush1.bf16.xpose.msra.mxu0 0
        %2063 = vmatprep.subr.bf16.mxu0 0
        %2064 = vmatpush1.bf16.xpose.msra.mxu0 %v2047
        %2065 = vmatprep.subr.bf16.mxu0 0
        %2066 = vmatpush2.bf16.xpose.msra.mxu0 0
        %2067 = vmatprep.subr.bf16.mxu0 0
        %2068 = vmatpush2.bf16.xpose.msra.mxu0 0
        %2069 = vmatprep.subr.bf16.mxu0 0
        %2070 = vmatpush2.bf16.xpose.msra.mxu0 0
        %2071 = vmatprep.subr.bf16.mxu0 0
        %2072 = vmatpush2.bf16.xpose.msra.mxu0 0
        %2073 = vmatprep.subr.bf16.mxu0 0
        %2074 = vmatpush2.bf16.xpose.msra.mxu0 0
        %2075 = vmatprep.subr.bf16.mxu0 0
        %2076 = vmatpush2.bf16.xpose.msra.mxu0 0
        %2077 = vmatprep.subr.bf16.mxu0 0
        %2078 = vmatpush2.bf16.xpose.msra.mxu0 0
        %2079 = vmatprep.subr.bf16.mxu0 0
        %2080 = vmatpush2.bf16.xpose.msra.mxu0 0
        %2081 = vmatprep.mubr.bf16.mxu0 0
        %2082 = vmatmul.mubr.bf16.gmra.mxu0 %v2044
        %v2083 = vpop.f32.mrf.mxu0
        %v2084 = vadd.f32 0.0, %v2083
        %v2085 = vpop.f32.mrf.mxu0
        %v2086 = vpop.f32.mrf.mxu0
        %v2087 = vadd.f32 0.0, %v2086
        %v2088 = vpop.f32.mrf.mxu0
        %2089 = vdwg.mxu0
        %v2092 = vunpack.c.l.b16 %v2034
        %v2093 = vunpack.c.l.b16 %v2035
        %v2094 = vpack.c.b16 %v2093, %v2092
        %2095 = vrot.lane.b32.xlu0 %v1327, 64
        %v2096 = vpop.permute.xlu0 %2095
        %v2098 = vsel %vm1339, %v2094, 0
        %v2101 = vsel %vm1339, %v2096, 0
        %2103 = vmatprep.subr.bf16.mxu0 0
        %2104 = vmatpush1.bf16.xpose.msra.mxu0 0
        %2105 = vmatprep.subr.bf16.mxu0 0
        %2106 = vmatpush1.bf16.xpose.msra.mxu0 0
        %2107 = vmatprep.subr.bf16.mxu0 0
        %2108 = vmatpush1.bf16.xpose.msra.mxu0 0
        %2109 = vmatprep.subr.bf16.mxu0 0
        %2110 = vmatpush1.bf16.xpose.msra.mxu0 0
        %2111 = vmatprep.subr.bf16.mxu0 0
        %2112 = vmatpush1.bf16.xpose.msra.mxu0 0
        %2113 = vmatprep.subr.bf16.mxu0 0
        %2114 = vmatpush1.bf16.xpose.msra.mxu0 0
        %2115 = vmatprep.subr.bf16.mxu0 0
        %2116 = vmatpush1.bf16.xpose.msra.mxu0 0
        %2117 = vmatprep.subr.bf16.mxu0 0
        %2118 = vmatpush1.bf16.xpose.msra.mxu0 %v2101
        %2119 = vmatprep.subr.bf16.mxu0 0
        %2120 = vmatpush2.bf16.xpose.msra.mxu0 0
        %2121 = vmatprep.subr.bf16.mxu0 0
        %2122 = vmatpush2.bf16.xpose.msra.mxu0 0
        %2123 = vmatprep.subr.bf16.mxu0 0
        %2124 = vmatpush2.bf16.xpose.msra.mxu0 0
        %2125 = vmatprep.subr.bf16.mxu0 0
        %2126 = vmatpush2.bf16.xpose.msra.mxu0 0
        %2127 = vmatprep.subr.bf16.mxu0 0
        %2128 = vmatpush2.bf16.xpose.msra.mxu0 0
        %2129 = vmatprep.subr.bf16.mxu0 0
        %2130 = vmatpush2.bf16.xpose.msra.mxu0 0
        %2131 = vmatprep.subr.bf16.mxu0 0
        %2132 = vmatpush2.bf16.xpose.msra.mxu0 0
        %2133 = vmatprep.subr.bf16.mxu0 0
        %2134 = vmatpush2.bf16.xpose.msra.mxu0 0
        %2135 = vmatprep.mubr.bf16.mxu0 0
        %2136 = vmatmul.mubr.bf16.gmra.mxu0 %v2098
        %v2137 = vpop.f32.mrf.mxu0
        %v2138 = vadd.f32 0.0, %v2137
        %v2139 = vpop.f32.mrf.mxu0
        %v2140 = vpop.f32.mrf.mxu0
        %v2141 = vadd.f32 0.0, %v2140
        %v2142 = vpop.f32.mrf.mxu0
        %2143 = vdwg.mxu0
        %v2144 = vsel %vm1441, %v2084, -1e+10
        %v2145 = vsel %vm1442, %v2087, -1e+10
        %v2146 = vsel %vm1441, %v2138, -1e+10
        %v2147 = vsel %vm1442, %v2141, -1e+10
        %s2148 = scalar_lea.vmem [#allocation3], 64
        %v2149 = vld [vmem:[%s2148] sm:$0xff]
        %v2150 = vld [vmem:[%s2148 + $0x8] sm:$0xff]
        %v2151 = vld [vmem:[%s2148 + $0x10] sm:$0xff]
        %v2152 = vld [vmem:[%s2148 + $0x18] sm:$0xff]
        %v2153 = vsel %vm1451, %v2144, -inf
        %2154 = vmax.xlane.f32.xlu0 %v2153
        %v2155 = vpop.xlane.xlu0 %2154
        %v2156 = vsel %vm1451, %v2145, -inf
        %2157 = vmax.xlane.f32.xlu0 %v2156
        %v2158 = vpop.xlane.xlu0 %2157
        %v2159 = vsel %vm1451, %v2146, -inf
        %2160 = vmax.xlane.f32.xlu0 %v2159
        %v2161 = vpop.xlane.xlu0 %2160
        %v2162 = vsel %vm1451, %v2147, -inf
        %2163 = vmax.xlane.f32.xlu0 %v2162
        %v2164 = vpop.xlane.xlu0 %2163
        %v2165 = vmax.f32 %v2149, %v2155
        %v2166 = vmax.f32 %v2150, %v2158
        %v2167 = vmax.f32 %v2151, %v2161
        %v2168 = vmax.f32 %v2152, %v2164
        %v2169 = vsub.f32 %v2149, %v2165
        %v2170 = vsub.f32 %v2150, %v2166
        %v2171 = vsub.f32 %v2151, %v2167
        %v2172 = vsub.f32 %v2152, %v2168
        %v2173 = vmul.f32 %v2169, 1.442695
        %v2174 = vpow.pop %v2173
        %v2175 = vmul.f32 %v2170, 1.442695
        %v2176 = vpow.pop %v2175
        %v2177 = vmul.f32 %v2171, 1.442695
        %v2178 = vpow.pop %v2177
        %v2179 = vmul.f32 %v2172, 1.442695
        %v2180 = vpow.pop %v2179
        %2182 = vset.pattern.permute.xlu0 0
        %2183 = vperm.xlu0 %2182, %v2165
        %v2184 = vpop.permute.xlu0 %2183
        %2187 = vset.pattern.permute.xlu0 0
        %2188 = vperm.xlu0 %2187, %v2166
        %v2189 = vpop.permute.xlu0 %2188
        %2192 = vset.pattern.permute.xlu0 0
        %2193 = vperm.xlu0 %2192, %v2167
        %v2194 = vpop.permute.xlu0 %2193
        %2197 = vset.pattern.permute.xlu0 0
        %2198 = vperm.xlu0 %2197, %v2168
        %v2199 = vpop.permute.xlu0 %2198
        %v2201 = vsub.f32 %v2144, %v2184
        %v2202 = vsub.f32 %v2145, %v2189
        %v2203 = vsub.f32 %v2146, %v2194
        %v2204 = vsub.f32 %v2147, %v2199
        %v2205 = vmul.f32 %v2201, 1.442695
        %v2206 = vpow.pop %v2205
        %v2207 = vmul.f32 %v2202, 1.442695
        %v2208 = vpow.pop %v2207
        %v2209 = vmul.f32 %v2203, 1.442695
        %v2210 = vpow.pop %v2209
        %v2211 = vmul.f32 %v2204, 1.442695
        %v2212 = vpow.pop %v2211
        %v2213 = vsel %vm1441, %v2206, 0.0
        %v2214 = vsel %vm1442, %v2208, 0.0
        %v2215 = vsel %vm1441, %v2210, 0.0
        %v2216 = vsel %vm1442, %v2212, 0.0
        %s2217 = scalar_lea.vmem [#allocation4], 64
        %v2218 = vld [vmem:[%s2217] sm:$0xff]
        %v2219 = vld [vmem:[%s2217 + $0x8] sm:$0xff]
        %v2220 = vld [vmem:[%s2217 + $0x10] sm:$0xff]
        %v2221 = vld [vmem:[%s2217 + $0x18] sm:$0xff]
        %v2222 = vmul.f32 %v2174, %v2218
        %v2223 = vmul.f32 %v2176, %v2219
        %v2224 = vmul.f32 %v2178, %v2220
        %v2225 = vmul.f32 %v2180, %v2221
        %v2226 = vsel %vm1451, %v2213, 0.0
        %2227 = vadd.xlane.f32.xlu0 %v2226
        %v2228 = vpop.xlane.xlu0 %2227
        %v2229 = vsel %vm1451, %v2214, 0.0
        %2230 = vadd.xlane.f32.xlu0 %v2229
        %v2231 = vpop.xlane.xlu0 %2230
        %v2232 = vsel %vm1451, %v2215, 0.0
        %2233 = vadd.xlane.f32.xlu0 %v2232
        %v2234 = vpop.xlane.xlu0 %2233
        %v2235 = vsel %vm1451, %v2216, 0.0
        %2236 = vadd.xlane.f32.xlu0 %v2235
        %v2237 = vpop.xlane.xlu0 %2236
        %v2238 = vadd.f32 %v2222, %v2228
        %v2239 = vadd.f32 %v2223, %v2231
        %v2240 = vadd.f32 %v2224, %v2234
        %v2241 = vadd.f32 %v2225, %v2237
        %2242 = vst.msk [vmem:[%s2217] sm:$0xff] %vm1540, %v2238
        %2243 = vst.msk [vmem:[%s2217 + $0x8] sm:$0xff] %vm1540, %v2239
        %2244 = vst.msk [vmem:[%s2217 + $0x10] sm:$0xff] %vm1540, %v2240
        %2245 = vst.msk [vmem:[%s2217 + $0x18] sm:$0xff] %vm1540, %v2241
        %s2246 = scalar_lea.vmem [#allocation5], 64
        %v2247 = vld [vmem:[%s2246] sm:$0xff]
        %v2248 = vld [vmem:[%s2246 + $0x8] sm:$0xff]
        %v2249 = vld [vmem:[%s2246 + $0x10] sm:$0xff]
        %v2250 = vld [vmem:[%s2246 + $0x18] sm:$0xff]
        %2252 = vset.pattern.permute.xlu0 0
        %2253 = vperm.xlu0 %2252, %v2174
        %v2254 = vpop.permute.xlu0 %2253
        %2257 = vset.pattern.permute.xlu0 0
        %2258 = vperm.xlu0 %2257, %v2176
        %v2259 = vpop.permute.xlu0 %2258
        %2262 = vset.pattern.permute.xlu0 0
        %2263 = vperm.xlu0 %2262, %v2178
        %v2264 = vpop.permute.xlu0 %2263
        %2267 = vset.pattern.permute.xlu0 0
        %2268 = vperm.xlu0 %2267, %v2180
        %v2269 = vpop.permute.xlu0 %2268
        %v2271 = vmul.f32 %v2254, %v2247
        %v2272 = vmul.f32 %v2259, %v2248
        %v2273 = vmul.f32 %v2264, %v2249
        %v2274 = vmul.f32 %v2269, %v2250
        %v2275 = vpack.c.bf16 %v2214, %v2213
        %v2276 = vpack.c.bf16 %v2216, %v2215
        %2277 = vrot.lane.b32.xlu0 %v1328, 64
        %v2278 = vpop.permute.xlu0 %2277
        %v2281 = vsel %vm1451, %v2275, 0
        %2283 = vmatprep.subr.bf16.mxu0 0
        %2284 = vmatpush1.bf16.msra.mxu0 0
        %2285 = vmatprep.subr.bf16.mxu0 0
        %2286 = vmatpush1.bf16.msra.mxu0 0
        %2287 = vmatprep.subr.bf16.mxu0 0
        %2288 = vmatpush1.bf16.msra.mxu0 0
        %2289 = vmatprep.subr.bf16.mxu0 0
        %2290 = vmatpush1.bf16.msra.mxu0 0
        %2291 = vmatprep.subr.bf16.mxu0 0
        %2292 = vmatpush1.bf16.msra.mxu0 0
        %2293 = vmatprep.subr.bf16.mxu0 0
        %2294 = vmatpush1.bf16.msra.mxu0 0
        %2295 = vmatprep.subr.bf16.mxu0 0
        %2296 = vmatpush1.bf16.msra.mxu0 0
        %2297 = vmatprep.subr.bf16.mxu0 0
        %2298 = vmatpush1.bf16.msra.mxu0 %v2278
        %2299 = vmatprep.subr.bf16.mxu0 0
        %2300 = vmatpush2.bf16.msra.mxu0 0
        %2301 = vmatprep.subr.bf16.mxu0 0
        %2302 = vmatpush2.bf16.msra.mxu0 0
        %2303 = vmatprep.subr.bf16.mxu0 0
        %2304 = vmatpush2.bf16.msra.mxu0 0
        %2305 = vmatprep.subr.bf16.mxu0 0
        %2306 = vmatpush2.bf16.msra.mxu0 0
        %2307 = vmatprep.subr.bf16.mxu0 0
        %2308 = vmatpush2.bf16.msra.mxu0 0
        %2309 = vmatprep.subr.bf16.mxu0 0
        %2310 = vmatpush2.bf16.msra.mxu0 0
        %2311 = vmatprep.subr.bf16.mxu0 0
        %2312 = vmatpush2.bf16.msra.mxu0 0
        %2313 = vmatprep.subr.bf16.mxu0 0
        %2314 = vmatpush2.bf16.msra.mxu0 0
        %2315 = vmatprep.mubr.bf16.mxu0 0
        %2316 = vmatmul.mubr.bf16.gmra.mxu0 %v2281
        %v2317 = vpop.f32.mrf.mxu0
        %v2318 = vadd.f32 0.0, %v2317
        %v2319 = vpop.f32.mrf.mxu0
        %v2320 = vpop.f32.mrf.mxu0
        %v2321 = vadd.f32 0.0, %v2320
        %v2322 = vpop.f32.mrf.mxu0
        %2323 = vdwg.mxu0
        %2324 = vrot.lane.b32.xlu0 %v1329, 64
        %v2325 = vpop.permute.xlu0 %2324
        %v2328 = vsel %vm1451, %v2276, 0
        %2330 = vmatprep.subr.bf16.mxu0 0
        %2331 = vmatpush1.bf16.msra.mxu0 0
        %2332 = vmatprep.subr.bf16.mxu0 0
        %2333 = vmatpush1.bf16.msra.mxu0 0
        %2334 = vmatprep.subr.bf16.mxu0 0
        %2335 = vmatpush1.bf16.msra.mxu0 0
        %2336 = vmatprep.subr.bf16.mxu0 0
        %2337 = vmatpush1.bf16.msra.mxu0 0
        %2338 = vmatprep.subr.bf16.mxu0 0
        %2339 = vmatpush1.bf16.msra.mxu0 0
        %2340 = vmatprep.subr.bf16.mxu0 0
        %2341 = vmatpush1.bf16.msra.mxu0 0
        %2342 = vmatprep.subr.bf16.mxu0 0
        %2343 = vmatpush1.bf16.msra.mxu0 0
        %2344 = vmatprep.subr.bf16.mxu0 0
        %2345 = vmatpush1.bf16.msra.mxu0 %v2325
        %2346 = vmatprep.subr.bf16.mxu0 0
        %2347 = vmatpush2.bf16.msra.mxu0 0
        %2348 = vmatprep.subr.bf16.mxu0 0
        %2349 = vmatpush2.bf16.msra.mxu0 0
        %2350 = vmatprep.subr.bf16.mxu0 0
        %2351 = vmatpush2.bf16.msra.mxu0 0
        %2352 = vmatprep.subr.bf16.mxu0 0
        %2353 = vmatpush2.bf16.msra.mxu0 0
        %2354 = vmatprep.subr.bf16.mxu0 0
        %2355 = vmatpush2.bf16.msra.mxu0 0
        %2356 = vmatprep.subr.bf16.mxu0 0
        %2357 = vmatpush2.bf16.msra.mxu0 0
        %2358 = vmatprep.subr.bf16.mxu0 0
        %2359 = vmatpush2.bf16.msra.mxu0 0
        %2360 = vmatprep.subr.bf16.mxu0 0
        %2361 = vmatpush2.bf16.msra.mxu0 0
        %2362 = vmatprep.mubr.bf16.mxu0 0
        %2363 = vmatmul.mubr.bf16.gmra.mxu0 %v2328
        %v2364 = vpop.f32.mrf.mxu0
        %v2365 = vadd.f32 0.0, %v2364
        %v2366 = vpop.f32.mrf.mxu0
        %v2367 = vpop.f32.mrf.mxu0
        %v2368 = vadd.f32 0.0, %v2367
        %v2369 = vpop.f32.mrf.mxu0
        %2370 = vdwg.mxu0
        %v2371 = vadd.f32 %v2271, %v2318
        %v2372 = vadd.f32 %v2272, %v2321
        %v2373 = vadd.f32 %v2273, %v2365
        %v2374 = vadd.f32 %v2274, %v2368
        %2375 = vst.msk [vmem:[%s2246] sm:$0xff] %vm1339, %v2371
        %2376 = vst.msk [vmem:[%s2246 + $0x8] sm:$0xff] %vm1339, %v2372
        %2377 = vst.msk [vmem:[%s2246 + $0x10] sm:$0xff] %vm1339, %v2373
        %2378 = vst.msk [vmem:[%s2246 + $0x18] sm:$0xff] %vm1339, %v2374
        %2379 = vst.msk [vmem:[%s2148] sm:$0xff] %vm1540, %v2165
        %2380 = vst.msk [vmem:[%s2148 + $0x8] sm:$0xff] %vm1540, %v2166
        %2381 = vst.msk [vmem:[%s2148 + $0x10] sm:$0xff] %vm1540, %v2167
        %2382 = vst.msk [vmem:[%s2148 + $0x18] sm:$0xff] %vm1540, %v2168
        %s2383 = scalar_lea.vmem [#allocation2], 48
        %v2384 = vld [vmem:[%s2383] sm:$0xf]
        %v2385 = vld [vmem:[%s2383 + $0x4] sm:$0xf]
        %v2386 = vld [vmem:[%s2383 + $0x8] sm:$0xf]
        %v2387 = vld [vmem:[%s2383 + $0xc] sm:$0xf]
        %v2390 = vunpack.c.l.b16 %v2384
        %v2391 = vunpack.c.l.b16 %v2385
        %v2392 = vpack.c.b16 %v2391, %v2390
        %2393 = vrot.lane.b32.xlu0 %v1326, 32
        %v2394 = vpop.permute.xlu0 %2393
        %v2396 = vsel %vm1339, %v2392, 0
        %v2399 = vsel %vm1339, %v2394, 0
        %2401 = vmatprep.subr.bf16.mxu0 0
        %2402 = vmatpush1.bf16.xpose.msra.mxu0 0
        %2403 = vmatprep.subr.bf16.mxu0 0
        %2404 = vmatpush1.bf16.xpose.msra.mxu0 0
        %2405 = vmatprep.subr.bf16.mxu0 0
        %2406 = vmatpush1.bf16.xpose.msra.mxu0 0
        %2407 = vmatprep.subr.bf16.mxu0 0
        %2408 = vmatpush1.bf16.xpose.msra.mxu0 0
        %2409 = vmatprep.subr.bf16.mxu0 0
        %2410 = vmatpush1.bf16.xpose.msra.mxu0 0
        %2411 = vmatprep.subr.bf16.mxu0 0
        %2412 = vmatpush1.bf16.xpose.msra.mxu0 0
        %2413 = vmatprep.subr.bf16.mxu0 0
        %2414 = vmatpush1.bf16.xpose.msra.mxu0 0
        %2415 = vmatprep.subr.bf16.mxu0 0
        %2416 = vmatpush1.bf16.xpose.msra.mxu0 %v2399
        %2417 = vmatprep.subr.bf16.mxu0 0
        %2418 = vmatpush2.bf16.xpose.msra.mxu0 0
        %2419 = vmatprep.subr.bf16.mxu0 0
        %2420 = vmatpush2.bf16.xpose.msra.mxu0 0
        %2421 = vmatprep.subr.bf16.mxu0 0
        %2422 = vmatpush2.bf16.xpose.msra.mxu0 0
        %2423 = vmatprep.subr.bf16.mxu0 0
        %2424 = vmatpush2.bf16.xpose.msra.mxu0 0
        %2425 = vmatprep.subr.bf16.mxu0 0
        %2426 = vmatpush2.bf16.xpose.msra.mxu0 0
        %2427 = vmatprep.subr.bf16.mxu0 0
        %2428 = vmatpush2.bf16.xpose.msra.mxu0 0
        %2429 = vmatprep.subr.bf16.mxu0 0
        %2430 = vmatpush2.bf16.xpose.msra.mxu0 0
        %2431 = vmatprep.subr.bf16.mxu0 0
        %2432 = vmatpush2.bf16.xpose.msra.mxu0 0
        %2433 = vmatprep.mubr.bf16.mxu0 0
        %2434 = vmatmul.mubr.bf16.gmra.mxu0 %v2396
        %v2435 = vpop.f32.mrf.mxu0
        %v2436 = vadd.f32 0.0, %v2435
        %v2437 = vpop.f32.mrf.mxu0
        %v2438 = vpop.f32.mrf.mxu0
        %v2439 = vadd.f32 0.0, %v2438
        %v2440 = vpop.f32.mrf.mxu0
        %2441 = vdwg.mxu0
        %v2444 = vunpack.c.l.b16 %v2386
        %v2445 = vunpack.c.l.b16 %v2387
        %v2446 = vpack.c.b16 %v2445, %v2444
        %2447 = vrot.lane.b32.xlu0 %v1327, 32
        %v2448 = vpop.permute.xlu0 %2447
        %v2450 = vsel %vm1339, %v2446, 0
        %v2453 = vsel %vm1339, %v2448, 0
        %2455 = vmatprep.subr.bf16.mxu0 0
        %2456 = vmatpush1.bf16.xpose.msra.mxu0 0
        %2457 = vmatprep.subr.bf16.mxu0 0
        %2458 = vmatpush1.bf16.xpose.msra.mxu0 0
        %2459 = vmatprep.subr.bf16.mxu0 0
        %2460 = vmatpush1.bf16.xpose.msra.mxu0 0
        %2461 = vmatprep.subr.bf16.mxu0 0
        %2462 = vmatpush1.bf16.xpose.msra.mxu0 0
        %2463 = vmatprep.subr.bf16.mxu0 0
        %2464 = vmatpush1.bf16.xpose.msra.mxu0 0
        %2465 = vmatprep.subr.bf16.mxu0 0
        %2466 = vmatpush1.bf16.xpose.msra.mxu0 0
        %2467 = vmatprep.subr.bf16.mxu0 0
        %2468 = vmatpush1.bf16.xpose.msra.mxu0 0
        %2469 = vmatprep.subr.bf16.mxu0 0
        %2470 = vmatpush1.bf16.xpose.msra.mxu0 %v2453
        %2471 = vmatprep.subr.bf16.mxu0 0
        %2472 = vmatpush2.bf16.xpose.msra.mxu0 0
        %2473 = vmatprep.subr.bf16.mxu0 0
        %2474 = vmatpush2.bf16.xpose.msra.mxu0 0
        %2475 = vmatprep.subr.bf16.mxu0 0
        %2476 = vmatpush2.bf16.xpose.msra.mxu0 0
        %2477 = vmatprep.subr.bf16.mxu0 0
        %2478 = vmatpush2.bf16.xpose.msra.mxu0 0
        %2479 = vmatprep.subr.bf16.mxu0 0
        %2480 = vmatpush2.bf16.xpose.msra.mxu0 0
        %2481 = vmatprep.subr.bf16.mxu0 0
        %2482 = vmatpush2.bf16.xpose.msra.mxu0 0
        %2483 = vmatprep.subr.bf16.mxu0 0
        %2484 = vmatpush2.bf16.xpose.msra.mxu0 0
        %2485 = vmatprep.subr.bf16.mxu0 0
        %2486 = vmatpush2.bf16.xpose.msra.mxu0 0
        %2487 = vmatprep.mubr.bf16.mxu0 0
        %2488 = vmatmul.mubr.bf16.gmra.mxu0 %v2450
        %v2489 = vpop.f32.mrf.mxu0
        %v2490 = vadd.f32 0.0, %v2489
        %v2491 = vpop.f32.mrf.mxu0
        %v2492 = vpop.f32.mrf.mxu0
        %v2493 = vadd.f32 0.0, %v2492
        %v2494 = vpop.f32.mrf.mxu0
        %2495 = vdwg.mxu0
        %v2496 = vsel %vm1441, %v2436, -1e+10
        %v2497 = vsel %vm1442, %v2439, -1e+10
        %v2498 = vsel %vm1441, %v2490, -1e+10
        %v2499 = vsel %vm1442, %v2493, -1e+10
        %s2500 = scalar_lea.vmem [#allocation3], 96
        %v2501 = vld [vmem:[%s2500] sm:$0xff]
        %v2502 = vld [vmem:[%s2500 + $0x8] sm:$0xff]
        %v2503 = vld [vmem:[%s2500 + $0x10] sm:$0xff]
        %v2504 = vld [vmem:[%s2500 + $0x18] sm:$0xff]
        %v2505 = vsel %vm1451, %v2496, -inf
        %2506 = vmax.xlane.f32.xlu0 %v2505
        %v2507 = vpop.xlane.xlu0 %2506
        %v2508 = vsel %vm1451, %v2497, -inf
        %2509 = vmax.xlane.f32.xlu0 %v2508
        %v2510 = vpop.xlane.xlu0 %2509
        %v2511 = vsel %vm1451, %v2498, -inf
        %2512 = vmax.xlane.f32.xlu0 %v2511
        %v2513 = vpop.xlane.xlu0 %2512
        %v2514 = vsel %vm1451, %v2499, -inf
        %2515 = vmax.xlane.f32.xlu0 %v2514
        %v2516 = vpop.xlane.xlu0 %2515
        %v2517 = vmax.f32 %v2501, %v2507
        %v2518 = vmax.f32 %v2502, %v2510
        %v2519 = vmax.f32 %v2503, %v2513
        %v2520 = vmax.f32 %v2504, %v2516
        %v2521 = vsub.f32 %v2501, %v2517
        %v2522 = vsub.f32 %v2502, %v2518
        %v2523 = vsub.f32 %v2503, %v2519
        %v2524 = vsub.f32 %v2504, %v2520
        %v2525 = vmul.f32 %v2521, 1.442695
        %v2526 = vpow.pop %v2525
        %v2527 = vmul.f32 %v2522, 1.442695
        %v2528 = vpow.pop %v2527
        %v2529 = vmul.f32 %v2523, 1.442695
        %v2530 = vpow.pop %v2529
        %v2531 = vmul.f32 %v2524, 1.442695
        %v2532 = vpow.pop %v2531
        %2534 = vset.pattern.permute.xlu0 0
        %2535 = vperm.xlu0 %2534, %v2517
        %v2536 = vpop.permute.xlu0 %2535
        %2539 = vset.pattern.permute.xlu0 0
        %2540 = vperm.xlu0 %2539, %v2518
        %v2541 = vpop.permute.xlu0 %2540
        %2544 = vset.pattern.permute.xlu0 0
        %2545 = vperm.xlu0 %2544, %v2519
        %v2546 = vpop.permute.xlu0 %2545
        %2549 = vset.pattern.permute.xlu0 0
        %2550 = vperm.xlu0 %2549, %v2520
        %v2551 = vpop.permute.xlu0 %2550
        %v2553 = vsub.f32 %v2496, %v2536
        %v2554 = vsub.f32 %v2497, %v2541
        %v2555 = vsub.f32 %v2498, %v2546
        %v2556 = vsub.f32 %v2499, %v2551
        %v2557 = vmul.f32 %v2553, 1.442695
        %v2558 = vpow.pop %v2557
        %v2559 = vmul.f32 %v2554, 1.442695
        %v2560 = vpow.pop %v2559
        %v2561 = vmul.f32 %v2555, 1.442695
        %v2562 = vpow.pop %v2561
        %v2563 = vmul.f32 %v2556, 1.442695
        %v2564 = vpow.pop %v2563
        %v2565 = vsel %vm1441, %v2558, 0.0
        %v2566 = vsel %vm1442, %v2560, 0.0
        %v2567 = vsel %vm1441, %v2562, 0.0
        %v2568 = vsel %vm1442, %v2564, 0.0
        %s2569 = scalar_lea.vmem [#allocation4], 96
        %v2570 = vld [vmem:[%s2569] sm:$0xff]
        %v2571 = vld [vmem:[%s2569 + $0x8] sm:$0xff]
        %v2572 = vld [vmem:[%s2569 + $0x10] sm:$0xff]
        %v2573 = vld [vmem:[%s2569 + $0x18] sm:$0xff]
        %v2574 = vmul.f32 %v2526, %v2570
        %v2575 = vmul.f32 %v2528, %v2571
        %v2576 = vmul.f32 %v2530, %v2572
        %v2577 = vmul.f32 %v2532, %v2573
        %v2578 = vsel %vm1451, %v2565, 0.0
        %2579 = vadd.xlane.f32.xlu0 %v2578
        %v2580 = vpop.xlane.xlu0 %2579
        %v2581 = vsel %vm1451, %v2566, 0.0
        %2582 = vadd.xlane.f32.xlu0 %v2581
        %v2583 = vpop.xlane.xlu0 %2582
        %v2584 = vsel %vm1451, %v2567, 0.0
        %2585 = vadd.xlane.f32.xlu0 %v2584
        %v2586 = vpop.xlane.xlu0 %2585
        %v2587 = vsel %vm1451, %v2568, 0.0
        %2588 = vadd.xlane.f32.xlu0 %v2587
        %v2589 = vpop.xlane.xlu0 %2588
        %v2590 = vadd.f32 %v2574, %v2580
        %v2591 = vadd.f32 %v2575, %v2583
        %v2592 = vadd.f32 %v2576, %v2586
        %v2593 = vadd.f32 %v2577, %v2589
        %2594 = vst.msk [vmem:[%s2569] sm:$0xff] %vm1540, %v2590
        %2595 = vst.msk [vmem:[%s2569 + $0x8] sm:$0xff] %vm1540, %v2591
        %2596 = vst.msk [vmem:[%s2569 + $0x10] sm:$0xff] %vm1540, %v2592
        %2597 = vst.msk [vmem:[%s2569 + $0x18] sm:$0xff] %vm1540, %v2593
        %s2598 = scalar_lea.vmem [#allocation5], 96
        %v2599 = vld [vmem:[%s2598] sm:$0xff]
        %v2600 = vld [vmem:[%s2598 + $0x8] sm:$0xff]
        %v2601 = vld [vmem:[%s2598 + $0x10] sm:$0xff]
        %v2602 = vld [vmem:[%s2598 + $0x18] sm:$0xff]
        %2604 = vset.pattern.permute.xlu0 0
        %2605 = vperm.xlu0 %2604, %v2526
        %v2606 = vpop.permute.xlu0 %2605
        %2609 = vset.pattern.permute.xlu0 0
        %2610 = vperm.xlu0 %2609, %v2528
        %v2611 = vpop.permute.xlu0 %2610
        %2614 = vset.pattern.permute.xlu0 0
        %2615 = vperm.xlu0 %2614, %v2530
        %v2616 = vpop.permute.xlu0 %2615
        %2619 = vset.pattern.permute.xlu0 0
        %2620 = vperm.xlu0 %2619, %v2532
        %v2621 = vpop.permute.xlu0 %2620
        %v2623 = vmul.f32 %v2606, %v2599
        %v2624 = vmul.f32 %v2611, %v2600
        %v2625 = vmul.f32 %v2616, %v2601
        %v2626 = vmul.f32 %v2621, %v2602
        %v2627 = vpack.c.bf16 %v2566, %v2565
        %v2628 = vpack.c.bf16 %v2568, %v2567
        %2629 = vrot.lane.b32.xlu0 %v1328, 32
        %v2630 = vpop.permute.xlu0 %2629
        %v2633 = vsel %vm1451, %v2627, 0
        %2635 = vmatprep.subr.bf16.mxu0 0
        %2636 = vmatpush1.bf16.msra.mxu0 0
        %2637 = vmatprep.subr.bf16.mxu0 0
        %2638 = vmatpush1.bf16.msra.mxu0 0
        %2639 = vmatprep.subr.bf16.mxu0 0
        %2640 = vmatpush1.bf16.msra.mxu0 0
        %2641 = vmatprep.subr.bf16.mxu0 0
        %2642 = vmatpush1.bf16.msra.mxu0 0
        %2643 = vmatprep.subr.bf16.mxu0 0
        %2644 = vmatpush1.bf16.msra.mxu0 0
        %2645 = vmatprep.subr.bf16.mxu0 0
        %2646 = vmatpush1.bf16.msra.mxu0 0
        %2647 = vmatprep.subr.bf16.mxu0 0
        %2648 = vmatpush1.bf16.msra.mxu0 0
        %2649 = vmatprep.subr.bf16.mxu0 0
        %2650 = vmatpush1.bf16.msra.mxu0 %v2630
        %2651 = vmatprep.subr.bf16.mxu0 0
        %2652 = vmatpush2.bf16.msra.mxu0 0
        %2653 = vmatprep.subr.bf16.mxu0 0
        %2654 = vmatpush2.bf16.msra.mxu0 0
        %2655 = vmatprep.subr.bf16.mxu0 0
        %2656 = vmatpush2.bf16.msra.mxu0 0
        %2657 = vmatprep.subr.bf16.mxu0 0
        %2658 = vmatpush2.bf16.msra.mxu0 0
        %2659 = vmatprep.subr.bf16.mxu0 0
        %2660 = vmatpush2.bf16.msra.mxu0 0
        %2661 = vmatprep.subr.bf16.mxu0 0
        %2662 = vmatpush2.bf16.msra.mxu0 0
        %2663 = vmatprep.subr.bf16.mxu0 0
        %2664 = vmatpush2.bf16.msra.mxu0 0
        %2665 = vmatprep.subr.bf16.mxu0 0
        %2666 = vmatpush2.bf16.msra.mxu0 0
        %2667 = vmatprep.mubr.bf16.mxu0 0
        %2668 = vmatmul.mubr.bf16.gmra.mxu0 %v2633
        %v2669 = vpop.f32.mrf.mxu0
        %v2670 = vadd.f32 0.0, %v2669
        %v2671 = vpop.f32.mrf.mxu0
        %v2672 = vpop.f32.mrf.mxu0
        %v2673 = vadd.f32 0.0, %v2672
        %v2674 = vpop.f32.mrf.mxu0
        %2675 = vdwg.mxu0
        %2676 = vrot.lane.b32.xlu0 %v1329, 32
        %v2677 = vpop.permute.xlu0 %2676
        %v2680 = vsel %vm1451, %v2628, 0
        %2682 = vmatprep.subr.bf16.mxu0 0
        %2683 = vmatpush1.bf16.msra.mxu0 0
        %2684 = vmatprep.subr.bf16.mxu0 0
        %2685 = vmatpush1.bf16.msra.mxu0 0
        %2686 = vmatprep.subr.bf16.mxu0 0
        %2687 = vmatpush1.bf16.msra.mxu0 0
        %2688 = vmatprep.subr.bf16.mxu0 0
        %2689 = vmatpush1.bf16.msra.mxu0 0
        %2690 = vmatprep.subr.bf16.mxu0 0
        %2691 = vmatpush1.bf16.msra.mxu0 0
        %2692 = vmatprep.subr.bf16.mxu0 0
        %2693 = vmatpush1.bf16.msra.mxu0 0
        %2694 = vmatprep.subr.bf16.mxu0 0
        %2695 = vmatpush1.bf16.msra.mxu0 0
        %2696 = vmatprep.subr.bf16.mxu0 0
        %2697 = vmatpush1.bf16.msra.mxu0 %v2677
        %2698 = vmatprep.subr.bf16.mxu0 0
        %2699 = vmatpush2.bf16.msra.mxu0 0
        %2700 = vmatprep.subr.bf16.mxu0 0
        %2701 = vmatpush2.bf16.msra.mxu0 0
        %2702 = vmatprep.subr.bf16.mxu0 0
        %2703 = vmatpush2.bf16.msra.mxu0 0
        %2704 = vmatprep.subr.bf16.mxu0 0
        %2705 = vmatpush2.bf16.msra.mxu0 0
        %2706 = vmatprep.subr.bf16.mxu0 0
        %2707 = vmatpush2.bf16.msra.mxu0 0
        %2708 = vmatprep.subr.bf16.mxu0 0
        %2709 = vmatpush2.bf16.msra.mxu0 0
        %2710 = vmatprep.subr.bf16.mxu0 0
        %2711 = vmatpush2.bf16.msra.mxu0 0
        %2712 = vmatprep.subr.bf16.mxu0 0
        %2713 = vmatpush2.bf16.msra.mxu0 0
        %2714 = vmatprep.mubr.bf16.mxu0 0
        %2715 = vmatmul.mubr.bf16.gmra.mxu0 %v2680
        %v2716 = vpop.f32.mrf.mxu0
        %v2717 = vadd.f32 0.0, %v2716
        %v2718 = vpop.f32.mrf.mxu0
        %v2719 = vpop.f32.mrf.mxu0
        %v2720 = vadd.f32 0.0, %v2719
        %v2721 = vpop.f32.mrf.mxu0
        %2722 = vdwg.mxu0
        %v2723 = vadd.f32 %v2623, %v2670
        %v2724 = vadd.f32 %v2624, %v2673
        %v2725 = vadd.f32 %v2625, %v2717
        %v2726 = vadd.f32 %v2626, %v2720
        %2727 = vst.msk [vmem:[%s2598] sm:$0xff] %vm1339, %v2723
        %2728 = vst.msk [vmem:[%s2598 + $0x8] sm:$0xff] %vm1339, %v2724
        %2729 = vst.msk [vmem:[%s2598 + $0x10] sm:$0xff] %vm1339, %v2725
        %2730 = vst.msk [vmem:[%s2598 + $0x18] sm:$0xff] %vm1339, %v2726
        %2731 = vst.msk [vmem:[%s2500] sm:$0xff] %vm1540, %v2517
        %2732 = vst.msk [vmem:[%s2500 + $0x8] sm:$0xff] %vm1540, %v2518
        %2733 = vst.msk [vmem:[%s2500 + $0x10] sm:$0xff] %vm1540, %v2519
        %2734 = vst.msk [vmem:[%s2500 + $0x18] sm:$0xff] %vm1540, %v2520
        %p2735 = scmp.eq.s32.totalorder %s42, 1
        // Predicated region
        $region129: #{tpu_custom_call.1} parent=91 // pred_check
          %p2736 = pneg %p2735
        $region130: #{tpu_custom_call.1} parent=91 // pred_check_branch
          %2738 = sbr.rel (%p2736) target = $region132
        $region131: #{tpu_custom_call.1} parent=91 // pred_region
          %v2739 = vld [vmem:[#allocation6] sm:$0xff]
          %v2740 = vld [vmem:[#allocation6 + $0x8] sm:$0xff]
          %v2741 = vld [vmem:[#allocation6 + $0x10] sm:$0xff]
          %v2742 = vld [vmem:[#allocation6 + $0x18] sm:$0xff]
          %v2743 = vld [vmem:[#allocation5] sm:$0xff]
          %v2744 = vld [vmem:[#allocation5 + $0x8] sm:$0xff]
          %v2745 = vld [vmem:[#allocation5 + $0x10] sm:$0xff]
          %v2746 = vld [vmem:[#allocation5 + $0x18] sm:$0xff]
          %v2747 = vld [vmem:[#allocation4] sm:$0xff]
          %v2748 = vld [vmem:[#allocation4 + $0x8] sm:$0xff]
          %v2749 = vld [vmem:[#allocation4 + $0x10] sm:$0xff]
          %v2750 = vld [vmem:[#allocation4 + $0x18] sm:$0xff]
          %v2751 = vrcp.pop %v2747
          %v2752 = vrcp.pop %v2748
          %v2753 = vrcp.pop %v2749
          %v2754 = vrcp.pop %v2750
          %2756 = vset.pattern.permute.xlu0 0
          %2757 = vperm.xlu0 %2756, %v2751
          %v2758 = vpop.permute.xlu0 %2757
          %2761 = vset.pattern.permute.xlu0 0
          %2762 = vperm.xlu0 %2761, %v2752
          %v2763 = vpop.permute.xlu0 %2762
          %2766 = vset.pattern.permute.xlu0 0
          %2767 = vperm.xlu0 %2766, %v2753
          %v2768 = vpop.permute.xlu0 %2767
          %2771 = vset.pattern.permute.xlu0 0
          %2772 = vperm.xlu0 %2771, %v2754
          %v2773 = vpop.permute.xlu0 %2772
          %v2775 = vmul.f32 %v2743, %v2758
          %v2776 = vmul.f32 %v2744, %v2763
          %v2777 = vmul.f32 %v2745, %v2768
          %v2778 = vmul.f32 %v2746, %v2773
          %v2779 = vpack.c.bf16 %v2776, %v2775
          %v2780 = vpack.c.bf16 %v2778, %v2777
          %v2781 = vld [vmem:[#allocation15] sm:$0xf]
          %v2782 = vld [vmem:[#allocation15 + $0x4] sm:$0xf]
          %v2783 = vld [vmem:[#allocation15 + $0x8] sm:$0xf]
          %v2784 = vld [vmem:[#allocation15 + $0xc] sm:$0xf]
          %v2785 = vld [vmem:[%s1892] sm:$0xff]
          %v2786 = vld [vmem:[%s1892 + $0x8] sm:$0xff]
          %v2787 = vld [vmem:[%s1892 + $0x10] sm:$0xff]
          %v2788 = vld [vmem:[%s1892 + $0x18] sm:$0xff]
          %v2789 = vld [vmem:[%s1863] sm:$0xff]
          %v2790 = vld [vmem:[%s1863 + $0x8] sm:$0xff]
          %v2791 = vld [vmem:[%s1863 + $0x10] sm:$0xff]
          %v2792 = vld [vmem:[%s1863 + $0x18] sm:$0xff]
          %v2793 = vrcp.pop %v2789
          %v2794 = vrcp.pop %v2790
          %v2795 = vrcp.pop %v2791
          %v2796 = vrcp.pop %v2792
          %2798 = vset.pattern.permute.xlu0 0
          %2799 = vperm.xlu0 %2798, %v2793
          %v2800 = vpop.permute.xlu0 %2799
          %2803 = vset.pattern.permute.xlu0 0
          %2804 = vperm.xlu0 %2803, %v2794
          %v2805 = vpop.permute.xlu0 %2804
          %2808 = vset.pattern.permute.xlu0 0
          %2809 = vperm.xlu0 %2808, %v2795
          %v2810 = vpop.permute.xlu0 %2809
          %2813 = vset.pattern.permute.xlu0 0
          %2814 = vperm.xlu0 %2813, %v2796
          %v2815 = vpop.permute.xlu0 %2814
          %v2817 = vmul.f32 %v2785, %v2800
          %v2818 = vmul.f32 %v2786, %v2805
          %v2819 = vmul.f32 %v2787, %v2810
          %v2820 = vmul.f32 %v2788, %v2815
          %v2821 = vpack.c.bf16 %v2818, %v2817
          %v2822 = vpack.c.bf16 %v2820, %v2819
          %v2823 = vld [vmem:[#allocation15 + $0x10] sm:$0xf]
          %v2824 = vld [vmem:[#allocation15 + $0x14] sm:$0xf]
          %v2825 = vld [vmem:[#allocation15 + $0x18] sm:$0xf]
          %v2826 = vld [vmem:[#allocation15 + $0x1c] sm:$0xf]
          %v2831 = vunpack.c.l.b16 %v2823
          %v2832 = vunpack.c.l.b16 %v2824
          %v2833 = vunpack.c.l.b16 %v2825
          %v2834 = vunpack.c.l.b16 %v2826
          %v2835 = vpack.c.b16 %v2832, %v2831
          %v2836 = vpack.c.b16 %v2834, %v2833
          %v2840 = vsel %vm1339, %v2821, 0
          %v2843 = vsel %vm1339, %v2822, 0
          %2845 = vmatprep.subr.bf16.mxu0 0
          %2846 = vmatpush1.bf16.msra.mxu0 0
          %2847 = vmatprep.subr.bf16.mxu0 0
          %2848 = vmatpush1.bf16.msra.mxu0 0
          %2849 = vmatprep.subr.bf16.mxu0 0
          %2850 = vmatpush1.bf16.msra.mxu0 0
          %2851 = vmatprep.subr.bf16.mxu0 0
          %2852 = vmatpush1.bf16.msra.mxu0 0
          %2853 = vmatprep.subr.bf16.mxu0 0
          %2854 = vmatpush1.bf16.msra.mxu0 0
          %2855 = vmatprep.subr.bf16.mxu0 0
          %2856 = vmatpush1.bf16.msra.mxu0 0
          %2857 = vmatprep.subr.bf16.mxu0 0
          %2858 = vmatpush1.bf16.msra.mxu0 %v2836
          %2859 = vmatprep.subr.bf16.mxu0 0
          %2860 = vmatpush1.bf16.msra.mxu0 %v2835
          %2861 = vmatprep.subr.bf16.mxu0 0
          %2862 = vmatpush2.bf16.msra.mxu0 0
          %2863 = vmatprep.subr.bf16.mxu0 0
          %2864 = vmatpush2.bf16.msra.mxu0 0
          %2865 = vmatprep.subr.bf16.mxu0 0
          %2866 = vmatpush2.bf16.msra.mxu0 0
          %2867 = vmatprep.subr.bf16.mxu0 0
          %2868 = vmatpush2.bf16.msra.mxu0 0
          %2869 = vmatprep.subr.bf16.mxu0 0
          %2870 = vmatpush2.bf16.msra.mxu0 0
          %2871 = vmatprep.subr.bf16.mxu0 0
          %2872 = vmatpush2.bf16.msra.mxu0 0
          %2873 = vmatprep.subr.bf16.mxu0 0
          %2874 = vmatpush2.bf16.msra.mxu0 0
          %2875 = vmatprep.subr.bf16.mxu0 0
          %2876 = vmatpush2.bf16.msra.mxu0 0
          %2877 = vmatprep.mubr.bf16.mxu0 0
          %2878 = vmatmul.mubr.bf16.gmra.mxu0 %v2840
          %v2879 = vpop.f32.mrf.mxu0
          %v2880 = vadd.f32 0.0, %v2879
          %v2881 = vpop.f32.mrf.mxu0
          %v2882 = vpop.f32.mrf.mxu0
          %v2883 = vadd.f32 0.0, %v2882
          %v2884 = vpop.f32.mrf.mxu0
          %2885 = vmatprep.mubr.bf16.mxu0 0
          %2886 = vmatmul.mubr.bf16.gmra.mxu0 %v2843
          %v2887 = vpop.f32.mrf.mxu0
          %v2888 = vadd.f32 0.0, %v2887
          %v2889 = vpop.f32.mrf.mxu0
          %v2890 = vpop.f32.mrf.mxu0
          %v2891 = vadd.f32 0.0, %v2890
          %v2892 = vpop.f32.mrf.mxu0
          %2893 = vdwg.mxu0
          %v2898 = vunpack.c.l.b16 %v2781
          %v2899 = vunpack.c.l.b16 %v2782
          %v2900 = vunpack.c.l.b16 %v2783
          %v2901 = vunpack.c.l.b16 %v2784
          %v2902 = vpack.c.b16 %v2899, %v2898
          %v2903 = vpack.c.b16 %v2901, %v2900
          %v2907 = vsel %vm1339, %v2779, 0
          %v2910 = vsel %vm1339, %v2780, 0
          %2912 = vmatprep.subr.bf16.mxu0 0
          %2913 = vmatpush1.bf16.msra.mxu0 0
          %2914 = vmatprep.subr.bf16.mxu0 0
          %2915 = vmatpush1.bf16.msra.mxu0 0
          %2916 = vmatprep.subr.bf16.mxu0 0
          %2917 = vmatpush1.bf16.msra.mxu0 0
          %2918 = vmatprep.subr.bf16.mxu0 0
          %2919 = vmatpush1.bf16.msra.mxu0 0
          %2920 = vmatprep.subr.bf16.mxu0 0
          %2921 = vmatpush1.bf16.msra.mxu0 0
          %2922 = vmatprep.subr.bf16.mxu0 0
          %2923 = vmatpush1.bf16.msra.mxu0 0
          %2924 = vmatprep.subr.bf16.mxu0 0
          %2925 = vmatpush1.bf16.msra.mxu0 %v2903
          %2926 = vmatprep.subr.bf16.mxu0 0
          %2927 = vmatpush1.bf16.msra.mxu0 %v2902
          %2928 = vmatprep.subr.bf16.mxu0 0
          %2929 = vmatpush2.bf16.msra.mxu0 0
          %2930 = vmatprep.subr.bf16.mxu0 0
          %2931 = vmatpush2.bf16.msra.mxu0 0
          %2932 = vmatprep.subr.bf16.mxu0 0
          %2933 = vmatpush2.bf16.msra.mxu0 0
          %2934 = vmatprep.subr.bf16.mxu0 0
          %2935 = vmatpush2.bf16.msra.mxu0 0
          %2936 = vmatprep.subr.bf16.mxu0 0
          %2937 = vmatpush2.bf16.msra.mxu0 0
          %2938 = vmatprep.subr.bf16.mxu0 0
          %2939 = vmatpush2.bf16.msra.mxu0 0
          %2940 = vmatprep.subr.bf16.mxu0 0
          %2941 = vmatpush2.bf16.msra.mxu0 0
          %2942 = vmatprep.subr.bf16.mxu0 0
          %2943 = vmatpush2.bf16.msra.mxu0 0
          %2944 = vmatprep.mubr.bf16.mxu0 0
          %2945 = vmatmul.mubr.bf16.gmra.mxu0 %v2907
          %v2946 = vpop.f32.mrf.mxu0
          %v2947 = vadd.f32 %v2880, %v2946
          %v2948 = vpop.f32.mrf.mxu0
          %v2949 = vpop.f32.mrf.mxu0
          %v2950 = vadd.f32 %v2883, %v2949
          %v2951 = vpop.f32.mrf.mxu0
          %2952 = vmatprep.mubr.bf16.mxu0 0
          %2953 = vmatmul.mubr.bf16.gmra.mxu0 %v2910
          %v2954 = vpop.f32.mrf.mxu0
          %v2955 = vadd.f32 %v2888, %v2954
          %v2956 = vpop.f32.mrf.mxu0
          %v2957 = vpop.f32.mrf.mxu0
          %v2958 = vadd.f32 %v2891, %v2957
          %v2959 = vpop.f32.mrf.mxu0
          %2960 = vdwg.mxu0
          %v2961 = vld [vmem:[%s2246] sm:$0xff]
          %v2962 = vld [vmem:[%s2246 + $0x8] sm:$0xff]
          %v2963 = vld [vmem:[%s2246 + $0x10] sm:$0xff]
          %v2964 = vld [vmem:[%s2246 + $0x18] sm:$0xff]
          %v2965 = vld [vmem:[%s2217] sm:$0xff]
          %v2966 = vld [vmem:[%s2217 + $0x8] sm:$0xff]
          %v2967 = vld [vmem:[%s2217 + $0x10] sm:$0xff]
          %v2968 = vld [vmem:[%s2217 + $0x18] sm:$0xff]
          %v2969 = vrcp.pop %v2965
          %v2970 = vrcp.pop %v2966
          %v2971 = vrcp.pop %v2967
          %v2972 = vrcp.pop %v2968
          %2974 = vset.pattern.permute.xlu0 0
          %2975 = vperm.xlu0 %2974, %v2969
          %v2976 = vpop.permute.xlu0 %2975
          %2979 = vset.pattern.permute.xlu0 0
          %2980 = vperm.xlu0 %2979, %v2970
          %v2981 = vpop.permute.xlu0 %2980
          %2984 = vset.pattern.permute.xlu0 0
          %2985 = vperm.xlu0 %2984, %v2971
          %v2986 = vpop.permute.xlu0 %2985
          %2989 = vset.pattern.permute.xlu0 0
          %2990 = vperm.xlu0 %2989, %v2972
          %v2991 = vpop.permute.xlu0 %2990
          %v2993 = vmul.f32 %v2961, %v2976
          %v2994 = vmul.f32 %v2962, %v2981
          %v2995 = vmul.f32 %v2963, %v2986
          %v2996 = vmul.f32 %v2964, %v2991
          %v2997 = vpack.c.bf16 %v2994, %v2993
          %v2998 = vpack.c.bf16 %v2996, %v2995
          %v2999 = vld [vmem:[#allocation15 + $0x20] sm:$0xf]
          %v3000 = vld [vmem:[#allocation15 + $0x24] sm:$0xf]
          %v3001 = vld [vmem:[#allocation15 + $0x28] sm:$0xf]
          %v3002 = vld [vmem:[#allocation15 + $0x2c] sm:$0xf]
          %v3007 = vunpack.c.l.b16 %v2999
          %v3008 = vunpack.c.l.b16 %v3000
          %v3009 = vunpack.c.l.b16 %v3001
          %v3010 = vunpack.c.l.b16 %v3002
          %v3011 = vpack.c.b16 %v3008, %v3007
          %v3012 = vpack.c.b16 %v3010, %v3009
          %v3016 = vsel %vm1339, %v2997, 0
          %v3019 = vsel %vm1339, %v2998, 0
          %3021 = vmatprep.subr.bf16.mxu0 0
          %3022 = vmatpush1.bf16.msra.mxu0 0
          %3023 = vmatprep.subr.bf16.mxu0 0
          %3024 = vmatpush1.bf16.msra.mxu0 0
          %3025 = vmatprep.subr.bf16.mxu0 0
          %3026 = vmatpush1.bf16.msra.mxu0 0
          %3027 = vmatprep.subr.bf16.mxu0 0
          %3028 = vmatpush1.bf16.msra.mxu0 0
          %3029 = vmatprep.subr.bf16.mxu0 0
          %3030 = vmatpush1.bf16.msra.mxu0 0
          %3031 = vmatprep.subr.bf16.mxu0 0
          %3032 = vmatpush1.bf16.msra.mxu0 0
          %3033 = vmatprep.subr.bf16.mxu0 0
          %3034 = vmatpush1.bf16.msra.mxu0 %v3012
          %3035 = vmatprep.subr.bf16.mxu0 0
          %3036 = vmatpush1.bf16.msra.mxu0 %v3011
          %3037 = vmatprep.subr.bf16.mxu0 0
          %3038 = vmatpush2.bf16.msra.mxu0 0
          %3039 = vmatprep.subr.bf16.mxu0 0
          %3040 = vmatpush2.bf16.msra.mxu0 0
          %3041 = vmatprep.subr.bf16.mxu0 0
          %3042 = vmatpush2.bf16.msra.mxu0 0
          %3043 = vmatprep.subr.bf16.mxu0 0
          %3044 = vmatpush2.bf16.msra.mxu0 0
          %3045 = vmatprep.subr.bf16.mxu0 0
          %3046 = vmatpush2.bf16.msra.mxu0 0
          %3047 = vmatprep.subr.bf16.mxu0 0
          %3048 = vmatpush2.bf16.msra.mxu0 0
          %3049 = vmatprep.subr.bf16.mxu0 0
          %3050 = vmatpush2.bf16.msra.mxu0 0
          %3051 = vmatprep.subr.bf16.mxu0 0
          %3052 = vmatpush2.bf16.msra.mxu0 0
          %3053 = vmatprep.mubr.bf16.mxu0 0
          %3054 = vmatmul.mubr.bf16.gmra.mxu0 %v3016
          %v3055 = vpop.f32.mrf.mxu0
          %v3056 = vadd.f32 0.0, %v3055
          %v3057 = vpop.f32.mrf.mxu0
          %v3058 = vpop.f32.mrf.mxu0
          %v3059 = vadd.f32 0.0, %v3058
          %v3060 = vpop.f32.mrf.mxu0
          %3061 = vmatprep.mubr.bf16.mxu0 0
          %3062 = vmatmul.mubr.bf16.gmra.mxu0 %v3019
          %v3063 = vpop.f32.mrf.mxu0
          %v3064 = vadd.f32 0.0, %v3063
          %v3065 = vpop.f32.mrf.mxu0
          %v3066 = vpop.f32.mrf.mxu0
          %v3067 = vadd.f32 0.0, %v3066
          %v3068 = vpop.f32.mrf.mxu0
          %3069 = vdwg.mxu0
          %v3070 = vadd.f32 %v2947, %v3056
          %v3071 = vadd.f32 %v2950, %v3059
          %v3072 = vadd.f32 %v2955, %v3064
          %v3073 = vadd.f32 %v2958, %v3067
          %v3074 = vld [vmem:[%s2598] sm:$0xff]
          %v3075 = vld [vmem:[%s2598 + $0x8] sm:$0xff]
          %v3076 = vld [vmem:[%s2598 + $0x10] sm:$0xff]
          %v3077 = vld [vmem:[%s2598 + $0x18] sm:$0xff]
          %v3078 = vld [vmem:[%s2569] sm:$0xff]
          %v3079 = vld [vmem:[%s2569 + $0x8] sm:$0xff]
          %v3080 = vld [vmem:[%s2569 + $0x10] sm:$0xff]
          %v3081 = vld [vmem:[%s2569 + $0x18] sm:$0xff]
          %v3082 = vrcp.pop %v3078
          %v3083 = vrcp.pop %v3079
          %v3084 = vrcp.pop %v3080
          %v3085 = vrcp.pop %v3081
          %3087 = vset.pattern.permute.xlu0 0
          %3088 = vperm.xlu0 %3087, %v3082
          %v3089 = vpop.permute.xlu0 %3088
          %3092 = vset.pattern.permute.xlu0 0
          %3093 = vperm.xlu0 %3092, %v3083
          %v3094 = vpop.permute.xlu0 %3093
          %3097 = vset.pattern.permute.xlu0 0
          %3098 = vperm.xlu0 %3097, %v3084
          %v3099 = vpop.permute.xlu0 %3098
          %3102 = vset.pattern.permute.xlu0 0
          %3103 = vperm.xlu0 %3102, %v3085
          %v3104 = vpop.permute.xlu0 %3103
          %v3106 = vmul.f32 %v3074, %v3089
          %v3107 = vmul.f32 %v3075, %v3094
          %v3108 = vmul.f32 %v3076, %v3099
          %v3109 = vmul.f32 %v3077, %v3104
          %v3110 = vpack.c.bf16 %v3107, %v3106
          %v3111 = vpack.c.bf16 %v3109, %v3108
          %v3112 = vld [vmem:[#allocation15 + $0x30] sm:$0xf]
          %v3113 = vld [vmem:[#allocation15 + $0x34] sm:$0xf]
          %v3114 = vld [vmem:[#allocation15 + $0x38] sm:$0xf]
          %v3115 = vld [vmem:[#allocation15 + $0x3c] sm:$0xf]
          %v3120 = vunpack.c.l.b16 %v3112
          %v3121 = vunpack.c.l.b16 %v3113
          %v3122 = vunpack.c.l.b16 %v3114
          %v3123 = vunpack.c.l.b16 %v3115
          %v3124 = vpack.c.b16 %v3121, %v3120
          %v3125 = vpack.c.b16 %v3123, %v3122
          %v3129 = vsel %vm1339, %v3110, 0
          %v3132 = vsel %vm1339, %v3111, 0
          %3134 = vmatprep.subr.bf16.mxu0 0
          %3135 = vmatpush1.bf16.msra.mxu0 0
          %3136 = vmatprep.subr.bf16.mxu0 0
          %3137 = vmatpush1.bf16.msra.mxu0 0
          %3138 = vmatprep.subr.bf16.mxu0 0
          %3139 = vmatpush1.bf16.msra.mxu0 0
          %3140 = vmatprep.subr.bf16.mxu0 0
          %3141 = vmatpush1.bf16.msra.mxu0 0
          %3142 = vmatprep.subr.bf16.mxu0 0
          %3143 = vmatpush1.bf16.msra.mxu0 0
          %3144 = vmatprep.subr.bf16.mxu0 0
          %3145 = vmatpush1.bf16.msra.mxu0 0
          %3146 = vmatprep.subr.bf16.mxu0 0
          %3147 = vmatpush1.bf16.msra.mxu0 %v3125
          %3148 = vmatprep.subr.bf16.mxu0 0
          %3149 = vmatpush1.bf16.msra.mxu0 %v3124
          %3150 = vmatprep.subr.bf16.mxu0 0
          %3151 = vmatpush2.bf16.msra.mxu0 0
          %3152 = vmatprep.subr.bf16.mxu0 0
          %3153 = vmatpush2.bf16.msra.mxu0 0
          %3154 = vmatprep.subr.bf16.mxu0 0
          %3155 = vmatpush2.bf16.msra.mxu0 0
          %3156 = vmatprep.subr.bf16.mxu0 0
          %3157 = vmatpush2.bf16.msra.mxu0 0
          %3158 = vmatprep.subr.bf16.mxu0 0
          %3159 = vmatpush2.bf16.msra.mxu0 0
          %3160 = vmatprep.subr.bf16.mxu0 0
          %3161 = vmatpush2.bf16.msra.mxu0 0
          %3162 = vmatprep.subr.bf16.mxu0 0
          %3163 = vmatpush2.bf16.msra.mxu0 0
          %3164 = vmatprep.subr.bf16.mxu0 0
          %3165 = vmatpush2.bf16.msra.mxu0 0
          %3166 = vmatprep.mubr.bf16.mxu0 0
          %3167 = vmatmul.mubr.bf16.gmra.mxu0 %v3129
          %v3168 = vpop.f32.mrf.mxu0
          %v3169 = vadd.f32 0.0, %v3168
          %v3170 = vpop.f32.mrf.mxu0
          %v3171 = vpop.f32.mrf.mxu0
          %v3172 = vadd.f32 0.0, %v3171
          %v3173 = vpop.f32.mrf.mxu0
          %3174 = vmatprep.mubr.bf16.mxu0 0
          %3175 = vmatmul.mubr.bf16.gmra.mxu0 %v3132
          %v3176 = vpop.f32.mrf.mxu0
          %v3177 = vadd.f32 0.0, %v3176
          %v3178 = vpop.f32.mrf.mxu0
          %v3179 = vpop.f32.mrf.mxu0
          %v3180 = vadd.f32 0.0, %v3179
          %v3181 = vpop.f32.mrf.mxu0
          %3182 = vdwg.mxu0
          %v3183 = vadd.f32 %v3070, %v3169
          %v3184 = vadd.f32 %v3071, %v3172
          %v3185 = vadd.f32 %v3072, %v3177
          %v3186 = vadd.f32 %v3073, %v3180
          %v3187 = vadd.f32 %v2739, %v3183
          %v3188 = vadd.f32 %v2740, %v3184
          %v3189 = vadd.f32 %v2741, %v3185
          %v3190 = vadd.f32 %v2742, %v3186
          %v3191 = vld [vmem:[%s9] sm:$0x1]
          %v3193 = vlaneseq
          %v3194 = vshrl.u32 %v3193, 7
          %v3195 = vsub.s32 0, %v3194
          %v3196 = vrot.slane %v3191, %v3195
          %v3198 = vadd.f32 %v3187, %v3196
          %v3199 = vadd.f32 %v3188, %v3196
          %v3200 = vadd.f32 %v3189, %v3196
          %v3201 = vadd.f32 %v3190, %v3196
          %v3202 = vld [vmem:[%s12] sm:$0x1]
          %v3203 = vld [vmem:[%s13] sm:$0x1]
          %3204 = vadd.xlane.f32.xlu0 %v3198
          %v3205 = vpop.xlane.xlu0 %3204
          %3206 = vadd.xlane.f32.xlu0 %v3199
          %v3207 = vpop.xlane.xlu0 %3206
          %3208 = vadd.xlane.f32.xlu0 %v3200
          %v3209 = vpop.xlane.xlu0 %3208
          %3210 = vadd.xlane.f32.xlu0 %v3201
          %v3211 = vpop.xlane.xlu0 %3210
          %v3212 = vrcp.pop 128.0
          %v3213 = vmul.f32 %v3205, %v3212
          %v3214 = vmul.f32 %v3207, %v3212
          %v3215 = vmul.f32 %v3209, %v3212
          %v3216 = vmul.f32 %v3211, %v3212
          %v3217 = vsub.f32 %v3198, %v3213
          %v3218 = vsub.f32 %v3199, %v3214
          %v3219 = vsub.f32 %v3200, %v3215
          %v3220 = vsub.f32 %v3201, %v3216
          %v3221 = vmul.f32 %v3217, %v3217
          %v3222 = vmul.f32 %v3218, %v3218
          %v3223 = vmul.f32 %v3219, %v3219
          %v3224 = vmul.f32 %v3220, %v3220
          %3225 = vadd.xlane.f32.xlu0 %v3221
          %v3226 = vpop.xlane.xlu0 %3225
          %3227 = vadd.xlane.f32.xlu0 %v3222
          %v3228 = vpop.xlane.xlu0 %3227
          %3229 = vadd.xlane.f32.xlu0 %v3223
          %v3230 = vpop.xlane.xlu0 %3229
          %3231 = vadd.xlane.f32.xlu0 %v3224
          %v3232 = vpop.xlane.xlu0 %3231
          %v3233 = vmul.f32 %v3226, %v3212
          %v3234 = vmul.f32 %v3228, %v3212
          %v3235 = vmul.f32 %v3230, %v3212
          %v3236 = vmul.f32 %v3232, %v3212
          %v3237 = vadd.f32 %v3233, 1e-05
          %v3238 = vadd.f32 %v3234, 1e-05
          %v3239 = vadd.f32 %v3235, 1e-05
          %v3240 = vadd.f32 %v3236, 1e-05
          %v3241 = vrsqrt.pop %v3237
          %v3242 = vrsqrt.pop %v3238
          %v3243 = vrsqrt.pop %v3239
          %v3244 = vrsqrt.pop %v3240
          %v3245 = vmul.f32 %v3217, %v3241
          %v3246 = vmul.f32 %v3218, %v3242
          %v3247 = vmul.f32 %v3219, %v3243
          %v3248 = vmul.f32 %v3220, %v3244
          %v3250 = vlaneseq
          %v3251 = vshrl.u32 %v3250, 7
          %v3252 = vsub.s32 0, %v3251
          %v3253 = vrot.slane %v3202, %v3252
          %v3255 = vmul.f32 %v3245, %v3253
          %v3256 = vmul.f32 %v3246, %v3253
          %v3257 = vmul.f32 %v3247, %v3253
          %v3258 = vmul.f32 %v3248, %v3253
          %v3260 = vlaneseq
          %v3261 = vshrl.u32 %v3260, 7
          %v3262 = vsub.s32 0, %v3261
          %v3263 = vrot.slane %v3203, %v3262
          %v3265 = vadd.f32 %v3255, %v3263
          %v3266 = vadd.f32 %v3256, %v3263
          %v3267 = vadd.f32 %v3257, %v3263
          %v3268 = vadd.f32 %v3258, %v3263
          %v3269 = vpack.c.bf16 %v3266, %v3265
          %v3270 = vpack.c.bf16 %v3268, %v3267
          %v3271 = vld [vmem:[#allocation17] sm:$0xff]
          %v3272 = vld [vmem:[#allocation17 + $0x8] sm:$0xff]
          %v3273 = vld [vmem:[#allocation17 + $0x10] sm:$0xff]
          %v3274 = vld [vmem:[#allocation17 + $0x18] sm:$0xff]
          %v3275 = vld [vmem:[#allocation17 + $0x20] sm:$0xff]
          %v3276 = vld [vmem:[#allocation17 + $0x28] sm:$0xff]
          %v3277 = vld [vmem:[#allocation17 + $0x30] sm:$0xff]
          %v3278 = vld [vmem:[#allocation17 + $0x38] sm:$0xff]
          %v3279 = vld [vmem:[#allocation17 + $0x40] sm:$0xff]
          %v3280 = vld [vmem:[#allocation17 + $0x48] sm:$0xff]
          %v3281 = vld [vmem:[#allocation17 + $0x50] sm:$0xff]
          %v3282 = vld [vmem:[#allocation17 + $0x58] sm:$0xff]
          %v3283 = vld [vmem:[#allocation17 + $0x60] sm:$0xff]
          %v3284 = vld [vmem:[#allocation17 + $0x68] sm:$0xff]
          %v3285 = vld [vmem:[#allocation17 + $0x70] sm:$0xff]
          %v3286 = vld [vmem:[#allocation17 + $0x78] sm:$0xff]
          %v3287 = vld [vmem:[#allocation17 + $0x80] sm:$0xff]
          %v3288 = vld [vmem:[#allocation17 + $0x88] sm:$0xff]
          %v3289 = vld [vmem:[#allocation17 + $0x90] sm:$0xff]
          %v3290 = vld [vmem:[#allocation17 + $0x98] sm:$0xff]
          %v3291 = vld [vmem:[#allocation17 + $0xa0] sm:$0xff]
          %v3292 = vld [vmem:[#allocation17 + $0xa8] sm:$0xff]
          %v3293 = vld [vmem:[#allocation17 + $0xb0] sm:$0xff]
          %v3294 = vld [vmem:[#allocation17 + $0xb8] sm:$0xff]
          %v3295 = vld [vmem:[#allocation17 + $0xc0] sm:$0xff]
          %v3296 = vld [vmem:[#allocation17 + $0xc8] sm:$0xff]
          %v3297 = vld [vmem:[#allocation17 + $0xd0] sm:$0xff]
          %v3298 = vld [vmem:[#allocation17 + $0xd8] sm:$0xff]
          %v3299 = vld [vmem:[#allocation17 + $0xe0] sm:$0xff]
          %v3300 = vld [vmem:[#allocation17 + $0xe8] sm:$0xff]
          %v3301 = vld [vmem:[#allocation17 + $0xf0] sm:$0xff]
          %v3302 = vld [vmem:[#allocation17 + $0xf8] sm:$0xff]
          %v3303 = vld [vmem:[%s15] sm:$0xf]
          %v3305 = vlaneseq
          %v3306 = vshrl.u32 %v3305, 7
          %v3307 = vsub.s32 0, %v3306
          %v3308 = vrot.slane %v3303, %v3307
          %v3309 = vlaneseq
          %v3310 = vshrl.u32 %v3309, 7
          %v3311 = vsub.s32 1, %v3310
          %v3312 = vrot.slane %v3303, %v3311
          %v3313 = vlaneseq
          %v3314 = vshrl.u32 %v3313, 7
          %v3315 = vsub.s32 2, %v3314
          %v3316 = vrot.slane %v3303, %v3315
          %v3317 = vlaneseq
          %v3318 = vshrl.u32 %v3317, 7
          %v3319 = vsub.s32 3, %v3318
          %v3320 = vrot.slane %v3303, %v3319
          %v3357 = vunpack.c.l.b16 %v3271
          %v3358 = vunpack.c.h.b16 %v3271
          %v3359 = vunpack.c.l.b16 %v3272
          %v3360 = vunpack.c.h.b16 %v3272
          %v3361 = vunpack.c.l.b16 %v3273
          %v3362 = vunpack.c.h.b16 %v3273
          %v3363 = vunpack.c.l.b16 %v3274
          %v3364 = vunpack.c.h.b16 %v3274
          %v3365 = vunpack.c.l.b16 %v3275
          %v3366 = vunpack.c.h.b16 %v3275
          %v3367 = vunpack.c.l.b16 %v3276
          %v3368 = vunpack.c.h.b16 %v3276
          %v3369 = vunpack.c.l.b16 %v3277
          %v3370 = vunpack.c.h.b16 %v3277
          %v3371 = vunpack.c.l.b16 %v3278
          %v3372 = vunpack.c.h.b16 %v3278
          %v3373 = vunpack.c.l.b16 %v3279
          %v3374 = vunpack.c.h.b16 %v3279
          %v3375 = vunpack.c.l.b16 %v3280
          %v3376 = vunpack.c.h.b16 %v3280
          %v3377 = vunpack.c.l.b16 %v3281
          %v3378 = vunpack.c.h.b16 %v3281
          %v3379 = vunpack.c.l.b16 %v3282
          %v3380 = vunpack.c.h.b16 %v3282
          %v3381 = vunpack.c.l.b16 %v3283
          %v3382 = vunpack.c.h.b16 %v3283
          %v3383 = vunpack.c.l.b16 %v3284
          %v3384 = vunpack.c.h.b16 %v3284
          %v3385 = vunpack.c.l.b16 %v3285
          %v3386 = vunpack.c.h.b16 %v3285
          %v3387 = vunpack.c.l.b16 %v3286
          %v3388 = vunpack.c.h.b16 %v3286
          %v3389 = vunpack.c.l.b16 %v3287
          %v3390 = vunpack.c.h.b16 %v3287
          %v3391 = vunpack.c.l.b16 %v3288
          %v3392 = vunpack.c.h.b16 %v3288
          %v3393 = vunpack.c.l.b16 %v3289
          %v3394 = vunpack.c.h.b16 %v3289
          %v3395 = vunpack.c.l.b16 %v3290
          %v3396 = vunpack.c.h.b16 %v3290
          %v3397 = vunpack.c.l.b16 %v3291
          %v3398 = vunpack.c.h.b16 %v3291
          %v3399 = vunpack.c.l.b16 %v3292
          %v3400 = vunpack.c.h.b16 %v3292
          %v3401 = vunpack.c.l.b16 %v3293
          %v3402 = vunpack.c.h.b16 %v3293
          %v3403 = vunpack.c.l.b16 %v3294
          %v3404 = vunpack.c.h.b16 %v3294
          %v3405 = vunpack.c.l.b16 %v3295
          %v3406 = vunpack.c.h.b16 %v3295
          %v3407 = vunpack.c.l.b16 %v3296
          %v3408 = vunpack.c.h.b16 %v3296
          %v3409 = vunpack.c.l.b16 %v3297
          %v3410 = vunpack.c.h.b16 %v3297
          %v3411 = vunpack.c.l.b16 %v3298
          %v3412 = vunpack.c.h.b16 %v3298
          %v3413 = vunpack.c.l.b16 %v3299
          %v3414 = vunpack.c.h.b16 %v3299
          %v3415 = vunpack.c.l.b16 %v3300
          %v3416 = vunpack.c.h.b16 %v3300
          %v3417 = vunpack.c.l.b16 %v3301
          %v3418 = vunpack.c.h.b16 %v3301
          %v3419 = vunpack.c.l.b16 %v3302
          %v3420 = vunpack.c.h.b16 %v3302
          %v3421 = vpack.c.b16 %v3361, %v3357
          %v3422 = vpack.c.b16 %v3362, %v3358
          %v3423 = vpack.c.b16 %v3363, %v3359
          %v3424 = vpack.c.b16 %v3364, %v3360
          %v3425 = vpack.c.b16 %v3369, %v3365
          %v3426 = vpack.c.b16 %v3370, %v3366
          %v3427 = vpack.c.b16 %v3371, %v3367
          %v3428 = vpack.c.b16 %v3372, %v3368
          %v3429 = vpack.c.b16 %v3377, %v3373
          %v3430 = vpack.c.b16 %v3378, %v3374
          %v3431 = vpack.c.b16 %v3379, %v3375
          %v3432 = vpack.c.b16 %v3380, %v3376
          %v3433 = vpack.c.b16 %v3385, %v3381
          %v3434 = vpack.c.b16 %v3386, %v3382
          %v3435 = vpack.c.b16 %v3387, %v3383
          %v3436 = vpack.c.b16 %v3388, %v3384
          %v3437 = vpack.c.b16 %v3393, %v3389
          %v3438 = vpack.c.b16 %v3394, %v3390
          %v3439 = vpack.c.b16 %v3395, %v3391
          %v3440 = vpack.c.b16 %v3396, %v3392
          %v3441 = vpack.c.b16 %v3401, %v3397
          %v3442 = vpack.c.b16 %v3402, %v3398
          %v3443 = vpack.c.b16 %v3403, %v3399
          %v3444 = vpack.c.b16 %v3404, %v3400
          %v3445 = vpack.c.b16 %v3409, %v3405
          %v3446 = vpack.c.b16 %v3410, %v3406
          %v3447 = vpack.c.b16 %v3411, %v3407
          %v3448 = vpack.c.b16 %v3412, %v3408
          %v3449 = vpack.c.b16 %v3417, %v3413
          %v3450 = vpack.c.b16 %v3418, %v3414
          %v3451 = vpack.c.b16 %v3419, %v3415
          %v3452 = vpack.c.b16 %v3420, %v3416
          %3485 = vmatprep.subr.bf16.mxu0 %v3450
          %3486 = vmatpush1.bf16.msra.mxu0 %v3449
          %3487 = vmatprep.subr.bf16.mxu0 %v3446
          %3488 = vmatpush1.bf16.msra.mxu0 %v3445
          %3489 = vmatprep.subr.bf16.mxu0 %v3442
          %3490 = vmatpush1.bf16.msra.mxu0 %v3441
          %3491 = vmatprep.subr.bf16.mxu0 %v3438
          %3492 = vmatpush1.bf16.msra.mxu0 %v3437
          %3493 = vmatprep.subr.bf16.mxu0 %v3434
          %3494 = vmatpush1.bf16.msra.mxu0 %v3433
          %3495 = vmatprep.subr.bf16.mxu0 %v3430
          %3496 = vmatpush1.bf16.msra.mxu0 %v3429
          %3497 = vmatprep.subr.bf16.mxu0 %v3426
          %3498 = vmatpush1.bf16.msra.mxu0 %v3425
          %3499 = vmatprep.subr.bf16.mxu0 %v3422
          %3500 = vmatpush1.bf16.msra.mxu0 %v3421
          %3501 = vmatprep.subr.bf16.mxu0 0
          %3502 = vmatpush2.bf16.msra.mxu0 0
          %3503 = vmatprep.subr.bf16.mxu0 0
          %3504 = vmatpush2.bf16.msra.mxu0 0
          %3505 = vmatprep.subr.bf16.mxu0 0
          %3506 = vmatpush2.bf16.msra.mxu0 0
          %3507 = vmatprep.subr.bf16.mxu0 0
          %3508 = vmatpush2.bf16.msra.mxu0 0
          %3509 = vmatprep.subr.bf16.mxu0 0
          %3510 = vmatpush2.bf16.msra.mxu0 0
          %3511 = vmatprep.subr.bf16.mxu0 0
          %3512 = vmatpush2.bf16.msra.mxu0 0
          %3513 = vmatprep.subr.bf16.mxu0 0
          %3514 = vmatpush2.bf16.msra.mxu0 0
          %3515 = vmatprep.subr.bf16.mxu0 0
          %3516 = vmatpush2.bf16.msra.mxu0 0
          %3517 = vmatprep.mubr.bf16.mxu0 0
          %3518 = vmatmul.mubr.bf16.gmra.mxu0 %v3269
          %v3519 = vpop.f32.mrf.mxu0
          %v3520 = vadd.f32 %v3308, %v3519
          %v3521 = vpop.f32.mrf.mxu0
          %v3522 = vadd.f32 %v3312, %v3521
          %v3523 = vpop.f32.mrf.mxu0
          %v3524 = vadd.f32 %v3308, %v3523
          %v3525 = vpop.f32.mrf.mxu0
          %v3526 = vadd.f32 %v3312, %v3525
          %3527 = vmatprep.mubr.bf16.mxu0 0
          %3528 = vmatmul.mubr.bf16.gmra.mxu0 %v3270
          %v3529 = vpop.f32.mrf.mxu0
          %v3530 = vadd.f32 %v3308, %v3529
          %v3531 = vpop.f32.mrf.mxu0
          %v3532 = vadd.f32 %v3312, %v3531
          %v3533 = vpop.f32.mrf.mxu0
          %v3534 = vadd.f32 %v3308, %v3533
          %v3535 = vpop.f32.mrf.mxu0
          %v3536 = vadd.f32 %v3312, %v3535
          %3537 = vdwg.mxu0
          %3538 = vmatprep.subr.bf16.mxu0 %v3452
          %3539 = vmatpush1.bf16.msra.mxu0 %v3451
          %3540 = vmatprep.subr.bf16.mxu0 %v3448
          %3541 = vmatpush1.bf16.msra.mxu0 %v3447
          %3542 = vmatprep.subr.bf16.mxu0 %v3444
          %3543 = vmatpush1.bf16.msra.mxu0 %v3443
          %3544 = vmatprep.subr.bf16.mxu0 %v3440
          %3545 = vmatpush1.bf16.msra.mxu0 %v3439
          %3546 = vmatprep.subr.bf16.mxu0 %v3436
          %3547 = vmatpush1.bf16.msra.mxu0 %v3435
          %3548 = vmatprep.subr.bf16.mxu0 %v3432
          %3549 = vmatpush1.bf16.msra.mxu0 %v3431
          %3550 = vmatprep.subr.bf16.mxu0 %v3428
          %3551 = vmatpush1.bf16.msra.mxu0 %v3427
          %3552 = vmatprep.subr.bf16.mxu0 %v3424
          %3553 = vmatpush1.bf16.msra.mxu0 %v3423
          %3554 = vmatprep.subr.bf16.mxu0 0
          %3555 = vmatpush2.bf16.msra.mxu0 0
          %3556 = vmatprep.subr.bf16.mxu0 0
          %3557 = vmatpush2.bf16.msra.mxu0 0
          %3558 = vmatprep.subr.bf16.mxu0 0
          %3559 = vmatpush2.bf16.msra.mxu0 0
          %3560 = vmatprep.subr.bf16.mxu0 0
          %3561 = vmatpush2.bf16.msra.mxu0 0
          %3562 = vmatprep.subr.bf16.mxu0 0
          %3563 = vmatpush2.bf16.msra.mxu0 0
          %3564 = vmatprep.subr.bf16.mxu0 0
          %3565 = vmatpush2.bf16.msra.mxu0 0
          %3566 = vmatprep.subr.bf16.mxu0 0
          %3567 = vmatpush2.bf16.msra.mxu0 0
          %3568 = vmatprep.subr.bf16.mxu0 0
          %3569 = vmatpush2.bf16.msra.mxu0 0
          %3570 = vmatprep.mubr.bf16.mxu0 0
          %3571 = vmatmul.mubr.bf16.gmra.mxu0 %v3269
          %v3572 = vpop.f32.mrf.mxu0
          %v3573 = vadd.f32 %v3316, %v3572
          %v3574 = vpop.f32.mrf.mxu0
          %v3575 = vadd.f32 %v3320, %v3574
          %v3576 = vpop.f32.mrf.mxu0
          %v3577 = vadd.f32 %v3316, %v3576
          %v3578 = vpop.f32.mrf.mxu0
          %v3579 = vadd.f32 %v3320, %v3578
          %3580 = vmatprep.mubr.bf16.mxu0 0
          %3581 = vmatmul.mubr.bf16.gmra.mxu0 %v3270
          %v3582 = vpop.f32.mrf.mxu0
          %v3583 = vadd.f32 %v3316, %v3582
          %v3584 = vpop.f32.mrf.mxu0
          %v3585 = vadd.f32 %v3320, %v3584
          %v3586 = vpop.f32.mrf.mxu0
          %v3587 = vadd.f32 %v3316, %v3586
          %v3588 = vpop.f32.mrf.mxu0
          %v3589 = vadd.f32 %v3320, %v3588
          %3590 = vdwg.mxu0
          %v3591 = vmul.f32 %v3520, 0.5
          %v3592 = vmul.f32 %v3522, 0.5
          %v3593 = vmul.f32 %v3573, 0.5
          %v3594 = vmul.f32 %v3575, 0.5
          %v3595 = vmul.f32 %v3524, 0.5
          %v3596 = vmul.f32 %v3526, 0.5
          %v3597 = vmul.f32 %v3577, 0.5
          %v3598 = vmul.f32 %v3579, 0.5
          %v3599 = vmul.f32 %v3530, 0.5
          %v3600 = vmul.f32 %v3532, 0.5
          %v3601 = vmul.f32 %v3583, 0.5
          %v3602 = vmul.f32 %v3585, 0.5
          %v3603 = vmul.f32 %v3534, 0.5
          %v3604 = vmul.f32 %v3536, 0.5
          %v3605 = vmul.f32 %v3587, 0.5
          %v3606 = vmul.f32 %v3589, 0.5
          %v3607 = vmul.f32 %v3520, 0.70710677
          %v3608 = vmul.f32 %v3522, 0.70710677
          %v3609 = vmul.f32 %v3573, 0.70710677
          %v3610 = vmul.f32 %v3575, 0.70710677
          %v3611 = vmul.f32 %v3524, 0.70710677
          %v3612 = vmul.f32 %v3526, 0.70710677
          %v3613 = vmul.f32 %v3577, 0.70710677
          %v3614 = vmul.f32 %v3579, 0.70710677
          %v3615 = vmul.f32 %v3530, 0.70710677
          %v3616 = vmul.f32 %v3532, 0.70710677
          %v3617 = vmul.f32 %v3583, 0.70710677
          %v3618 = vmul.f32 %v3585, 0.70710677
          %v3619 = vmul.f32 %v3534, 0.70710677
          %v3620 = vmul.f32 %v3536, 0.70710677
          %v3621 = vmul.f32 %v3587, 0.70710677
          %v3622 = vmul.f32 %v3589, 0.70710677
          %v3623 = verf.f32.pop %v3607
          %v3624 = verf.f32.pop %v3608
          %v3625 = verf.f32.pop %v3609
          %v3626 = verf.f32.pop %v3610
          %v3627 = verf.f32.pop %v3611
          %v3628 = verf.f32.pop %v3612
          %v3629 = verf.f32.pop %v3613
          %v3630 = verf.f32.pop %v3614
          %v3631 = verf.f32.pop %v3615
          %v3632 = verf.f32.pop %v3616
          %v3633 = verf.f32.pop %v3617
          %v3634 = verf.f32.pop %v3618
          %v3635 = verf.f32.pop %v3619
          %v3636 = verf.f32.pop %v3620
          %v3637 = verf.f32.pop %v3621
          %v3638 = verf.f32.pop %v3622
          %v3639 = vadd.f32 %v3623, 1.0
          %v3640 = vadd.f32 %v3624, 1.0
          %v3641 = vadd.f32 %v3625, 1.0
          %v3642 = vadd.f32 %v3626, 1.0
          %v3643 = vadd.f32 %v3627, 1.0
          %v3644 = vadd.f32 %v3628, 1.0
          %v3645 = vadd.f32 %v3629, 1.0
          %v3646 = vadd.f32 %v3630, 1.0
          %v3647 = vadd.f32 %v3631, 1.0
          %v3648 = vadd.f32 %v3632, 1.0
          %v3649 = vadd.f32 %v3633, 1.0
          %v3650 = vadd.f32 %v3634, 1.0
          %v3651 = vadd.f32 %v3635, 1.0
          %v3652 = vadd.f32 %v3636, 1.0
          %v3653 = vadd.f32 %v3637, 1.0
          %v3654 = vadd.f32 %v3638, 1.0
          %v3655 = vmul.f32 %v3591, %v3639
          %v3656 = vmul.f32 %v3592, %v3640
          %v3657 = vmul.f32 %v3593, %v3641
          %v3658 = vmul.f32 %v3594, %v3642
          %v3659 = vmul.f32 %v3595, %v3643
          %v3660 = vmul.f32 %v3596, %v3644
          %v3661 = vmul.f32 %v3597, %v3645
          %v3662 = vmul.f32 %v3598, %v3646
          %v3663 = vmul.f32 %v3599, %v3647
          %v3664 = vmul.f32 %v3600, %v3648
          %v3665 = vmul.f32 %v3601, %v3649
          %v3666 = vmul.f32 %v3602, %v3650
          %v3667 = vmul.f32 %v3603, %v3651
          %v3668 = vmul.f32 %v3604, %v3652
          %v3669 = vmul.f32 %v3605, %v3653
          %v3670 = vmul.f32 %v3606, %v3654
          %v3671 = vpack.c.bf16 %v3659, %v3655
          %v3672 = vpack.c.bf16 %v3660, %v3656
          %v3673 = vpack.c.bf16 %v3661, %v3657
          %v3674 = vpack.c.bf16 %v3662, %v3658
          %v3675 = vpack.c.bf16 %v3667, %v3663
          %v3676 = vpack.c.bf16 %v3668, %v3664
          %v3677 = vpack.c.bf16 %v3669, %v3665
          %v3678 = vpack.c.bf16 %v3670, %v3666
          %v3679 = vld [vmem:[#allocation18] sm:$0xf]
          %v3680 = vld [vmem:[#allocation18 + $0x4] sm:$0xf]
          %v3681 = vld [vmem:[#allocation18 + $0x8] sm:$0xf]
          %v3682 = vld [vmem:[#allocation18 + $0xc] sm:$0xf]
          %v3683 = vld [vmem:[#allocation18 + $0x10] sm:$0xf]
          %v3684 = vld [vmem:[#allocation18 + $0x14] sm:$0xf]
          %v3685 = vld [vmem:[#allocation18 + $0x18] sm:$0xf]
          %v3686 = vld [vmem:[#allocation18 + $0x1c] sm:$0xf]
          %v3687 = vld [vmem:[#allocation18 + $0x20] sm:$0xf]
          %v3688 = vld [vmem:[#allocation18 + $0x24] sm:$0xf]
          %v3689 = vld [vmem:[#allocation18 + $0x28] sm:$0xf]
          %v3690 = vld [vmem:[#allocation18 + $0x2c] sm:$0xf]
          %v3691 = vld [vmem:[#allocation18 + $0x30] sm:$0xf]
          %v3692 = vld [vmem:[#allocation18 + $0x34] sm:$0xf]
          %v3693 = vld [vmem:[#allocation18 + $0x38] sm:$0xf]
          %v3694 = vld [vmem:[#allocation18 + $0x3c] sm:$0xf]
          %v3695 = vld [vmem:[#allocation18 + $0x40] sm:$0xf]
          %v3696 = vld [vmem:[#allocation18 + $0x44] sm:$0xf]
          %v3697 = vld [vmem:[#allocation18 + $0x48] sm:$0xf]
          %v3698 = vld [vmem:[#allocation18 + $0x4c] sm:$0xf]
          %v3699 = vld [vmem:[#allocation18 + $0x50] sm:$0xf]
          %v3700 = vld [vmem:[#allocation18 + $0x54] sm:$0xf]
          %v3701 = vld [vmem:[#allocation18 + $0x58] sm:$0xf]
          %v3702 = vld [vmem:[#allocation18 + $0x5c] sm:$0xf]
          %v3703 = vld [vmem:[#allocation18 + $0x60] sm:$0xf]
          %v3704 = vld [vmem:[#allocation18 + $0x64] sm:$0xf]
          %v3705 = vld [vmem:[#allocation18 + $0x68] sm:$0xf]
          %v3706 = vld [vmem:[#allocation18 + $0x6c] sm:$0xf]
          %v3707 = vld [vmem:[#allocation18 + $0x70] sm:$0xf]
          %v3708 = vld [vmem:[#allocation18 + $0x74] sm:$0xf]
          %v3709 = vld [vmem:[#allocation18 + $0x78] sm:$0xf]
          %v3710 = vld [vmem:[#allocation18 + $0x7c] sm:$0xf]
          %v3711 = vld [vmem:[#allocation18 + $0x80] sm:$0xf]
          %v3712 = vld [vmem:[#allocation18 + $0x84] sm:$0xf]
          %v3713 = vld [vmem:[#allocation18 + $0x88] sm:$0xf]
          %v3714 = vld [vmem:[#allocation18 + $0x8c] sm:$0xf]
          %v3715 = vld [vmem:[#allocation18 + $0x90] sm:$0xf]
          %v3716 = vld [vmem:[#allocation18 + $0x94] sm:$0xf]
          %v3717 = vld [vmem:[#allocation18 + $0x98] sm:$0xf]
          %v3718 = vld [vmem:[#allocation18 + $0x9c] sm:$0xf]
          %v3719 = vld [vmem:[#allocation18 + $0xa0] sm:$0xf]
          %v3720 = vld [vmem:[#allocation18 + $0xa4] sm:$0xf]
          %v3721 = vld [vmem:[#allocation18 + $0xa8] sm:$0xf]
          %v3722 = vld [vmem:[#allocation18 + $0xac] sm:$0xf]
          %v3723 = vld [vmem:[#allocation18 + $0xb0] sm:$0xf]
          %v3724 = vld [vmem:[#allocation18 + $0xb4] sm:$0xf]
          %v3725 = vld [vmem:[#allocation18 + $0xb8] sm:$0xf]
          %v3726 = vld [vmem:[#allocation18 + $0xbc] sm:$0xf]
          %v3727 = vld [vmem:[#allocation18 + $0xc0] sm:$0xf]
          %v3728 = vld [vmem:[#allocation18 + $0xc4] sm:$0xf]
          %v3729 = vld [vmem:[#allocation18 + $0xc8] sm:$0xf]
          %v3730 = vld [vmem:[#allocation18 + $0xcc] sm:$0xf]
          %v3731 = vld [vmem:[#allocation18 + $0xd0] sm:$0xf]
          %v3732 = vld [vmem:[#allocation18 + $0xd4] sm:$0xf]
          %v3733 = vld [vmem:[#allocation18 + $0xd8] sm:$0xf]
          %v3734 = vld [vmem:[#allocation18 + $0xdc] sm:$0xf]
          %v3735 = vld [vmem:[#allocation18 + $0xe0] sm:$0xf]
          %v3736 = vld [vmem:[#allocation18 + $0xe4] sm:$0xf]
          %v3737 = vld [vmem:[#allocation18 + $0xe8] sm:$0xf]
          %v3738 = vld [vmem:[#allocation18 + $0xec] sm:$0xf]
          %v3739 = vld [vmem:[#allocation18 + $0xf0] sm:$0xf]
          %v3740 = vld [vmem:[#allocation18 + $0xf4] sm:$0xf]
          %v3741 = vld [vmem:[#allocation18 + $0xf8] sm:$0xf]
          %v3742 = vld [vmem:[#allocation18 + $0xfc] sm:$0xf]
          %v3743 = vld [vmem:[%s17] sm:$0x1]
          %v3745 = vlaneseq
          %v3746 = vshrl.u32 %v3745, 7
          %v3747 = vsub.s32 0, %v3746
          %v3748 = vrot.slane %v3743, %v3747
          %v3814 = vunpack.c.l.b16 %v3679
          %v3815 = vunpack.c.l.b16 %v3680
          %v3816 = vunpack.c.l.b16 %v3681
          %v3817 = vunpack.c.l.b16 %v3682
          %v3818 = vunpack.c.l.b16 %v3683
          %v3819 = vunpack.c.l.b16 %v3684
          %v3820 = vunpack.c.l.b16 %v3685
          %v3821 = vunpack.c.l.b16 %v3686
          %v3822 = vunpack.c.l.b16 %v3687
          %v3823 = vunpack.c.l.b16 %v3688
          %v3824 = vunpack.c.l.b16 %v3689
          %v3825 = vunpack.c.l.b16 %v3690
          %v3826 = vunpack.c.l.b16 %v3691
          %v3827 = vunpack.c.l.b16 %v3692
          %v3828 = vunpack.c.l.b16 %v3693
          %v3829 = vunpack.c.l.b16 %v3694
          %v3830 = vunpack.c.l.b16 %v3695
          %v3831 = vunpack.c.l.b16 %v3696
          %v3832 = vunpack.c.l.b16 %v3697
          %v3833 = vunpack.c.l.b16 %v3698
          %v3834 = vunpack.c.l.b16 %v3699
          %v3835 = vunpack.c.l.b16 %v3700
          %v3836 = vunpack.c.l.b16 %v3701
          %v3837 = vunpack.c.l.b16 %v3702
          %v3838 = vunpack.c.l.b16 %v3703
          %v3839 = vunpack.c.l.b16 %v3704
          %v3840 = vunpack.c.l.b16 %v3705
          %v3841 = vunpack.c.l.b16 %v3706
          %v3842 = vunpack.c.l.b16 %v3707
          %v3843 = vunpack.c.l.b16 %v3708
          %v3844 = vunpack.c.l.b16 %v3709
          %v3845 = vunpack.c.l.b16 %v3710
          %v3846 = vunpack.c.l.b16 %v3711
          %v3847 = vunpack.c.l.b16 %v3712
          %v3848 = vunpack.c.l.b16 %v3713
          %v3849 = vunpack.c.l.b16 %v3714
          %v3850 = vunpack.c.l.b16 %v3715
          %v3851 = vunpack.c.l.b16 %v3716
          %v3852 = vunpack.c.l.b16 %v3717
          %v3853 = vunpack.c.l.b16 %v3718
          %v3854 = vunpack.c.l.b16 %v3719
          %v3855 = vunpack.c.l.b16 %v3720
          %v3856 = vunpack.c.l.b16 %v3721
          %v3857 = vunpack.c.l.b16 %v3722
          %v3858 = vunpack.c.l.b16 %v3723
          %v3859 = vunpack.c.l.b16 %v3724
          %v3860 = vunpack.c.l.b16 %v3725
          %v3861 = vunpack.c.l.b16 %v3726
          %v3862 = vunpack.c.l.b16 %v3727
          %v3863 = vunpack.c.l.b16 %v3728
          %v3864 = vunpack.c.l.b16 %v3729
          %v3865 = vunpack.c.l.b16 %v3730
          %v3866 = vunpack.c.l.b16 %v3731
          %v3867 = vunpack.c.l.b16 %v3732
          %v3868 = vunpack.c.l.b16 %v3733
          %v3869 = vunpack.c.l.b16 %v3734
          %v3870 = vunpack.c.l.b16 %v3735
          %v3871 = vunpack.c.l.b16 %v3736
          %v3872 = vunpack.c.l.b16 %v3737
          %v3873 = vunpack.c.l.b16 %v3738
          %v3874 = vunpack.c.l.b16 %v3739
          %v3875 = vunpack.c.l.b16 %v3740
          %v3876 = vunpack.c.l.b16 %v3741
          %v3877 = vunpack.c.l.b16 %v3742
          %v3878 = vpack.c.b16 %v3815, %v3814
          %v3879 = vpack.c.b16 %v3817, %v3816
          %v3880 = vpack.c.b16 %v3819, %v3818
          %v3881 = vpack.c.b16 %v3821, %v3820
          %v3882 = vpack.c.b16 %v3823, %v3822
          %v3883 = vpack.c.b16 %v3825, %v3824
          %v3884 = vpack.c.b16 %v3827, %v3826
          %v3885 = vpack.c.b16 %v3829, %v3828
          %v3886 = vpack.c.b16 %v3831, %v3830
          %v3887 = vpack.c.b16 %v3833, %v3832
          %v3888 = vpack.c.b16 %v3835, %v3834
          %v3889 = vpack.c.b16 %v3837, %v3836
          %v3890 = vpack.c.b16 %v3839, %v3838
          %v3891 = vpack.c.b16 %v3841, %v3840
          %v3892 = vpack.c.b16 %v3843, %v3842
          %v3893 = vpack.c.b16 %v3845, %v3844
          %v3894 = vpack.c.b16 %v3847, %v3846
          %v3895 = vpack.c.b16 %v3849, %v3848
          %v3896 = vpack.c.b16 %v3851, %v3850
          %v3897 = vpack.c.b16 %v3853, %v3852
          %v3898 = vpack.c.b16 %v3855, %v3854
          %v3899 = vpack.c.b16 %v3857, %v3856
          %v3900 = vpack.c.b16 %v3859, %v3858
          %v3901 = vpack.c.b16 %v3861, %v3860
          %v3902 = vpack.c.b16 %v3863, %v3862
          %v3903 = vpack.c.b16 %v3865, %v3864
          %v3904 = vpack.c.b16 %v3867, %v3866
          %v3905 = vpack.c.b16 %v3869, %v3868
          %v3906 = vpack.c.b16 %v3871, %v3870
          %v3907 = vpack.c.b16 %v3873, %v3872
          %v3908 = vpack.c.b16 %v3875, %v3874
          %v3909 = vpack.c.b16 %v3877, %v3876
          %3942 = vmatprep.subr.bf16.mxu0 0
          %3943 = vmatpush1.bf16.msra.mxu0 %v3885
          %3944 = vmatprep.subr.bf16.mxu0 0
          %3945 = vmatpush1.bf16.msra.mxu0 %v3884
          %3946 = vmatprep.subr.bf16.mxu0 0
          %3947 = vmatpush1.bf16.msra.mxu0 %v3883
          %3948 = vmatprep.subr.bf16.mxu0 0
          %3949 = vmatpush1.bf16.msra.mxu0 %v3882
          %3950 = vmatprep.subr.bf16.mxu0 0
          %3951 = vmatpush1.bf16.msra.mxu0 %v3881
          %3952 = vmatprep.subr.bf16.mxu0 0
          %3953 = vmatpush1.bf16.msra.mxu0 %v3880
          %3954 = vmatprep.subr.bf16.mxu0 0
          %3955 = vmatpush1.bf16.msra.mxu0 %v3879
          %3956 = vmatprep.subr.bf16.mxu0 0
          %3957 = vmatpush1.bf16.msra.mxu0 %v3878
          %3958 = vmatprep.subr.bf16.mxu0 0
          %3959 = vmatpush2.bf16.msra.mxu0 %v3893
          %3960 = vmatprep.subr.bf16.mxu0 0
          %3961 = vmatpush2.bf16.msra.mxu0 %v3892
          %3962 = vmatprep.subr.bf16.mxu0 0
          %3963 = vmatpush2.bf16.msra.mxu0 %v3891
          %3964 = vmatprep.subr.bf16.mxu0 0
          %3965 = vmatpush2.bf16.msra.mxu0 %v3890
          %3966 = vmatprep.subr.bf16.mxu0 0
          %3967 = vmatpush2.bf16.msra.mxu0 %v3889
          %3968 = vmatprep.subr.bf16.mxu0 0
          %3969 = vmatpush2.bf16.msra.mxu0 %v3888
          %3970 = vmatprep.subr.bf16.mxu0 0
          %3971 = vmatpush2.bf16.msra.mxu0 %v3887
          %3972 = vmatprep.subr.bf16.mxu0 0
          %3973 = vmatpush2.bf16.msra.mxu0 %v3886
          %3974 = vmatprep.mubr.bf16.mxu0 %v3672
          %3975 = vmatmul.mubr.bf16.gmra.mxu0 %v3671
          %v3976 = vpop.f32.mrf.mxu0
          %v3977 = vadd.f32 %v3748, %v3976
          %v3978 = vpop.f32.mrf.mxu0
          %v3979 = vpop.f32.mrf.mxu0
          %v3980 = vadd.f32 %v3748, %v3979
          %v3981 = vpop.f32.mrf.mxu0
          %3982 = vmatprep.mubr.bf16.mxu0 %v3676
          %3983 = vmatmul.mubr.bf16.gmra.mxu0 %v3675
          %v3984 = vpop.f32.mrf.mxu0
          %v3985 = vadd.f32 %v3748, %v3984
          %v3986 = vpop.f32.mrf.mxu0
          %v3987 = vpop.f32.mrf.mxu0
          %v3988 = vadd.f32 %v3748, %v3987
          %v3989 = vpop.f32.mrf.mxu0
          %3990 = vdwg.mxu0
          %3991 = vmatprep.subr.bf16.mxu0 0
          %3992 = vmatpush1.bf16.msra.mxu0 %v3901
          %3993 = vmatprep.subr.bf16.mxu0 0
          %3994 = vmatpush1.bf16.msra.mxu0 %v3900
          %3995 = vmatprep.subr.bf16.mxu0 0
          %3996 = vmatpush1.bf16.msra.mxu0 %v3899
          %3997 = vmatprep.subr.bf16.mxu0 0
          %3998 = vmatpush1.bf16.msra.mxu0 %v3898
          %3999 = vmatprep.subr.bf16.mxu0 0
          %4000 = vmatpush1.bf16.msra.mxu0 %v3897
          %4001 = vmatprep.subr.bf16.mxu0 0
          %4002 = vmatpush1.bf16.msra.mxu0 %v3896
          %4003 = vmatprep.subr.bf16.mxu0 0
          %4004 = vmatpush1.bf16.msra.mxu0 %v3895
          %4005 = vmatprep.subr.bf16.mxu0 0
          %4006 = vmatpush1.bf16.msra.mxu0 %v3894
          %4007 = vmatprep.subr.bf16.mxu0 0
          %4008 = vmatpush2.bf16.msra.mxu0 %v3909
          %4009 = vmatprep.subr.bf16.mxu0 0
          %4010 = vmatpush2.bf16.msra.mxu0 %v3908
          %4011 = vmatprep.subr.bf16.mxu0 0
          %4012 = vmatpush2.bf16.msra.mxu0 %v3907
          %4013 = vmatprep.subr.bf16.mxu0 0
          %4014 = vmatpush2.bf16.msra.mxu0 %v3906
          %4015 = vmatprep.subr.bf16.mxu0 0
          %4016 = vmatpush2.bf16.msra.mxu0 %v3905
          %4017 = vmatprep.subr.bf16.mxu0 0
          %4018 = vmatpush2.bf16.msra.mxu0 %v3904
          %4019 = vmatprep.subr.bf16.mxu0 0
          %4020 = vmatpush2.bf16.msra.mxu0 %v3903
          %4021 = vmatprep.subr.bf16.mxu0 0
          %4022 = vmatpush2.bf16.msra.mxu0 %v3902
          %4023 = vmatprep.mubr.bf16.mxu0 %v3674
          %4024 = vmatmul.mubr.bf16.gmra.mxu0 %v3673
          %v4025 = vpop.f32.mrf.mxu0
          %v4026 = vadd.f32 %v3977, %v4025
          %v4027 = vpop.f32.mrf.mxu0
          %v4028 = vpop.f32.mrf.mxu0
          %v4029 = vadd.f32 %v3980, %v4028
          %v4030 = vpop.f32.mrf.mxu0
          %4031 = vmatprep.mubr.bf16.mxu0 %v3678
          %4032 = vmatmul.mubr.bf16.gmra.mxu0 %v3677
          %v4033 = vpop.f32.mrf.mxu0
          %v4034 = vadd.f32 %v3985, %v4033
          %v4035 = vpop.f32.mrf.mxu0
          %v4036 = vpop.f32.mrf.mxu0
          %v4037 = vadd.f32 %v3988, %v4036
          %v4038 = vpop.f32.mrf.mxu0
          %4039 = vdwg.mxu0
          %v4040 = vadd.f32 %v3198, %v4026
          %v4041 = vadd.f32 %v3199, %v4029
          %v4042 = vadd.f32 %v3200, %v4034
          %v4043 = vadd.f32 %v3201, %v4037
          %4044 = vst [vmem:[#allocation20] sm:$0xff] %v4040
          %4045 = vst [vmem:[#allocation20 + $0x8] sm:$0xff] %v4041
          %4046 = vst [vmem:[#allocation20 + $0x10] sm:$0xff] %v4042
          %4047 = vst [vmem:[#allocation20 + $0x18] sm:$0xff] %v4043
        $region132: #{tpu_custom_call.1} parent=91 // pred_fallthru
          _
        // Predicated region
        $region133: #{tpu_custom_call.1} parent=91 // pred_check
          %p4048 = pneg %p457
        $region134: #{tpu_custom_call.1} parent=91 // pred_check_branch
          %4050 = sbr.rel (%p4048) target = $region136
        $region135: #{tpu_custom_call.1} parent=91 // pred_region
          %s4051 = smul.u32 2, %s41
          %s4053 = ssub.s32 512, 512
          %4054 = vsyncadd [#allocation8], %s4053
          %s4055 = smul.addr %s4051, 2
          %s4056 = smul.addr %s4055, 128
          %s4057 = scalar_lea.hbm %s18, %s4056
          %s4058 = sshll.u32 [#allocation20], 4
          %s4059 = int_to_ptr.vmem [resolvable:$true] %s4058
          %4064 = dma.vmem_to_hbm [thread:$0]  %s4059, 512, %s4057, [#allocation8], 128, 128, 8
        $region136: #{tpu_custom_call.1} parent=91 // pred_fallthru
          _
        // Predicated region
        $region137: #{tpu_custom_call.1} parent=91 // pred_check
          %p4065 = pneg %p457
        $region138: #{tpu_custom_call.1} parent=91 // pred_check_branch
          %4067 = sbr.rel (%p4065) target = $region140
        $region139: #{tpu_custom_call.1} parent=91 // pred_region
          %4068 = dma.done [#allocation8], 512
        $region140: #{tpu_custom_call.1} parent=91 // pred_fallthru
          _
      $region92: #{tpu_custom_call.1} parent=5 // pred_fallthru
        _
      %p4069 = scmp.le.s32.totalorder 2, %s32
      // Predicated region
      $region141: #{tpu_custom_call.1} parent=5 // pred_check
        %p4070 = pneg %p4069
      $region142: #{tpu_custom_call.1} parent=5 // pred_check_branch
        %4072 = sbr.rel (%p4070) target = $region144
      $region143: #{tpu_custom_call.1} parent=5 // pred_region
        %s4073 = ssub.s32 %s32, 2
      $region144: #{tpu_custom_call.1} parent=5 // pred_fallthru
        _
    $region6: #{tpu_custom_call.1} parent=1 // loop_footer
      %s36 = sadd.s32 1, %s32
    $region7: #{tpu_custom_call.1} parent=1 // loop_footer_branch
      %31 = sbr.rel target = $region3
    $region8: #{tpu_custom_call.1} parent=1 // loop_exit
      _
    %4074 = vsyncpa [#allocation7], 1
    %s4075 = scalar_lea.sflag [#allocation7], 1
    %4076 = vsyncpa %s4075, 1
    %4077 = vsyncpa [#allocation10], 1
    %s4078 = scalar_lea.sflag [#allocation10], 1
    %4079 = vsyncpa %s4078, 1
    %4080 = vsyncpa [#allocation13], 1
    %4081 = vsyncpa [#allocation16], 1
    %4082 = vsyncpa [#allocation19], 1
    %4083 = vsyncpa [#allocation8], 1
    %s4084 = scalar_lea.sflag [#allocation8], 1
    %4085 = vsyncpa %s4084, 1

</llo_original>
